<compile_context>
chip_gen: v5e
topology: v5e:2x2
jax: 0.10.0
libtpu: 0.0.40
codegen_flags: <defaults>
</compile_context>

<pallas_src>
import jax
import jax.numpy as jnp
import numpy as np
from jax.experimental import pallas as pl
from jax.experimental.pallas import tpu as pltpu


def _round_up(x, m):
    return ((x + m - 1) // m) * m


def _cdiv(a, b):
    return (a + b - 1) // b


def partial_conv(x, mask, weight, bias=None, *, stride=1, padding=0):
    """PartialConv.forward.  x, mask: (N, Cin, H, W); weight: (Cout, Cin, KH, KW);
    bias: (Cout,) or None.  Returns (output, new_mask) in NCHW, float32."""
    if stride != 1:
        # TODO(synk): fused shifted-tap path assumes stride=1 (the module default).
        raise NotImplementedError("Pallas PartialConv kernel supports stride=1 only")

    N, Cin, H, W = x.shape
    Cout, _, KH, KW = weight.shape
    Ho = H + 2 * padding - KH + 1
    Wo = W + 2 * padding - KW + 1
    Wp = W + 2 * padding                       # padded width (== Wo + KW - 1)

    Cinp = _round_up(Cin, 8)                   # sublane-friendly contraction dim
    Coutp = _round_up(Cout, 128)               # lane-dense output

    # ---- per-generation tile sizing (v7x has 64 MiB VMEM/TC; v5e/v6e 128 MiB) --
    try:
        vmem_cap = pltpu.get_tpu_info().vmem_capacity_bytes
    except Exception:
        vmem_cap = 64 * 1024 * 1024
    vmem_limit = max(32 * 1024 * 1024, min(int(vmem_cap * 0.75), 64 * 1024 * 1024))
    budget = vmem_limit - (4 << 20)

    def footprint(th):
        r_out = th * Wp
        r_in = _round_up((th + KH - 1) * Wp + (KW - 1), 8)
        slab = r_in * _round_up(Cinp, 128) * 2          # bf16, lane-padded in VMEM
        outb = r_out * Coutp * 4                        # f32 out block
        msum = r_out * 128 * 4                          # (rows, 1) lane-padded
        wgt = KH * KW * Cinp * Coutp * 2
        return 2 * slab + 3 * outb + 2 * msum + wgt + slab + (2 << 20)

    th = max(1, min(Ho, max(1, 2048 // Wp)))            # ~2K matmul rows per tile
    while th > 1 and footprint(th) > budget:
        th = max(1, th // 2)
    if N == 1 and Ho >= 2:
        th = min(th, _cdiv(Ho, 2))                      # >=2 grid steps for megacore
    T = _cdiv(Ho, th)
    Ho_p = T * th
    G = N * T
    R_out = th * Wp
    rows_per_slab = th + KH - 1
    R_in = _round_up(rows_per_slab * Wp + (KW - 1), 8)  # +KW-1: junk-column reads

    # ---- layout glue (XLA): NHWC bf16, spatial pad, per-tile halo'd slabs -------
    xm = (x * mask).astype(jnp.bfloat16)
    xm = jnp.transpose(xm, (0, 2, 3, 1))                             # (N, H, W, Cin)
    xm = jnp.pad(xm, ((0, 0),
                      (padding, padding + (Ho_p - Ho)),
                      (padding, padding),
                      (0, Cinp - Cin)))                  # (N, Ho_p+KH-1, Wp, Cinp)
    slabs = jnp.stack([xm[:, i * th: i * th + rows_per_slab] for i in range(T)],
                      axis=1)                            # (N, T, rows, Wp, Cinp)
    slabs = slabs.reshape(N * T, rows_per_slab * Wp, Cinp)
    slabs = jnp.pad(slabs, ((0, 0), (0, R_in - rows_per_slab * Wp), (0, 0)))

    # ---- mask conv == windowed channel-sum of the mask (all-ones weights) ------
    msum = jax.lax.reduce_window(
        jnp.pad(jnp.sum(mask.astype(jnp.float32), axis=1),
                ((0, 0), (padding, padding), (padding, padding))),
        0.0, jax.lax.add,
        window_dimensions=(1, KH, KW),
        window_strides=(1, 1, 1),
        padding="VALID")                                 # (N, Ho, Wo)
    msum_p = jnp.pad(msum, ((0, 0), (0, Ho_p - Ho), (0, Wp - Wo)))   # junk cols/rows -> 0
    msum_tiles = msum_p.reshape(N, T, th, Wp).reshape(G, R_out, 1)

    # ---- weights: OIHW -> (kh*KW+kw, Cin, Cout), zero-padded, bf16 -------------
    w = jnp.transpose(weight, (2, 3, 1, 0)).reshape(KH * KW, Cin, Cout)
    w = jnp.pad(w, ((0, 0), (0, Cinp - Cin), (0, Coutp - Cout))).astype(jnp.bfloat16)
    if bias is None:
        bias = jnp.zeros((Cout,), jnp.float32)
    b = jnp.pad(bias.astype(jnp.float32).reshape(1, Cout), ((0, 0), (0, Coutp - Cout)))

    # ---- the kernel -------------------------------------------------------------
    def kernel(slab_ref, msum_ref, w_ref, b_ref, out_ref):
        # slab_ref: (1, R_in, Cinp)  bf16   padded-image rows (r = h*Wp + w)
        # msum_ref: (1, R_out, 1)    f32    mask window-sum per output row
        # w_ref   : (KH*KW, Cinp, Coutp) bf16  VMEM-resident (constant index map)
        # b_ref   : (1, Coutp)       f32    VMEM-resident
        # out_ref : (1, R_out, Coutp) f32   accumulator + final output
        first = True
        for kh in range(KH):
            for kw in range(KW):
                t = kh * KW + kw
                d = kh * Wp + kw                        # static shifted-row offset
                xs = slab_ref[0, d:d + R_out, :]        # (R_out, Cinp)
                contrib = jnp.dot(xs, w_ref[t],
                                  preferred_element_type=jnp.float32)
                if first:
                    out_ref[0] = contrib
                    first = False
                else:
                    out_ref[0] += contrib
        ms = msum_ref[0]                                # (R_out, 1)
        holes = ms == 0.0                               # no_update_holes
        mask_sum = jnp.where(holes, 1.0, ms)            # masked_fill_(holes, 1.0)
        inv = pl.reciprocal(mask_sum)                   # exact 1/x (approx=False)
        out_pre = out_ref[0] * inv + b_ref[...]         # (out - bias)/msum + bias
        out_ref[0] = jnp.where(holes, 0.0, out_pre).astype(out_ref.dtype)

    out_flat = pl.pallas_call(
        kernel,
        out_shape=jax.ShapeDtypeStruct((G, R_out, Coutp), jnp.float32),
        grid_spec=pltpu.PrefetchScalarGridSpec(
            num_scalar_prefetch=0,
            grid=(G,),
            in_specs=[
                pl.BlockSpec((1, R_in, Cinp), lambda g: (g, 0, 0)),
                pl.BlockSpec((1, R_out, 1), lambda g: (g, 0, 0)),
                pl.BlockSpec((KH * KW, Cinp, Coutp), lambda g: (0, 0, 0)),
                pl.BlockSpec((1, Coutp), lambda g: (0, 0)),
            ],
            out_specs=pl.BlockSpec((1, R_out, Coutp), lambda g: (g, 0, 0)),
        ),
        compiler_params=pltpu.CompilerParams(
            dimension_semantics=("parallel",),
            vmem_limit_bytes=vmem_limit,
        ),
    )(slabs, msum_tiles, w, b)

    # ---- strip padding / junk columns, back to NCHW -----------------------------
    out = out_flat.reshape(N, T, th, Wp, Coutp)[:, :, :, :Wo, :Cout]
    out = out.reshape(N, Ho_p, Wo, Cout)[:, :Ho]
    out = jnp.transpose(out, (0, 3, 1, 2))                           # (N, Cout, Ho, Wo)

    # new_mask is identical across channels; derive from the window-sum.
    nm = (msum != 0.0).astype(jnp.float32)[:, None, :, :]            # (N, 1, Ho, Wo)
    new_mask = jnp.broadcast_to(nm, (N, Cout, Ho, Wo))
    return out, new_mask


def _reference(x, mask, weight, bias, padding):
    # Pure-JAX f32 reference mirroring the PyTorch forward (verification only).
    dn = jax.lax.conv_dimension_numbers(x.shape, weight.shape,
                                        ("NCHW", "OIHW", "NCHW"))
    pad = [(padding, padding), (padding, padding)]
    out = jax.lax.conv_general_dilated(x * mask, weight, (1, 1), pad,
                                       dimension_numbers=dn)
    out = out + bias[None, :, None, None]
    out_bias = jnp.broadcast_to(bias[None, :, None, None], out.shape)
    omask = jax.lax.conv_general_dilated(mask, jnp.ones_like(weight), (1, 1),
                                         pad, dimension_numbers=dn)
    holes = omask == 0.0
    mask_sum = jnp.where(holes, 1.0, omask)
    out_pre = (out - out_bias) / mask_sum + out_bias
    out_f = jnp.where(holes, 0.0, out_pre)
    new_mask = jnp.where(holes, 0.0, jnp.ones_like(out_f))
    return out_f, new_mask


if __name__ == "__main__":
    key = jax.random.PRNGKey(0)
    k1, k2, k3 = jax.random.split(key, 3)

    N, Cin, H, W = 2, 4, 16, 16
    Cout, KH, KW = 8, 3, 3
    padding = 1   # stride=1 (module default)

    x = jax.random.normal(k1, (N, Cin, H, W), dtype=jnp.float32)
    # binary hole mask shared across channels; carve a solid hole region so the
    # no_update_holes path is deterministically exercised.
    mask = (jax.random.uniform(k2, (N, 1, H, W)) > 0.4).astype(jnp.float32)
    hole_block = jnp.ones((1, 1, H, W), jnp.float32).at[:, :, 4:9, 5:10].set(0.0)
    mask = mask * hole_block
    mask = jnp.broadcast_to(mask, (N, Cin, H, W))

    # weights_init('kaiming'): kaiming_normal_ (fan_in, a=0) for weight, bias=0
    fan_in = Cin * KH * KW
    weight = jnp.sqrt(2.0 / fan_in) * jax.random.normal(
        k3, (Cout, Cin, KH, KW), dtype=jnp.float32)
    bias = jnp.zeros((Cout,), dtype=jnp.float32)

    out, new_mask = partial_conv(x, mask, weight, bias, padding=padding)
    out = jax.block_until_ready(out)
    new_mask = jax.block_until_ready(new_mask)

    ref_out, ref_nm = _reference(x, mask, weight, bias, padding)
    # bf16 MXU operands -> relaxed tolerance on the output values.
    np.testing.assert_allclose(np.asarray(out), np.asarray(ref_out),
                               rtol=5e-2, atol=5e-2)
    np.testing.assert_allclose(np.asarray(new_mask), np.asarray(ref_nm),
                               rtol=1e-6, atol=1e-6)

    print("KERNEL_OK")
</pallas_src>

<mosaic_0001>
module attributes {stable_mosaic.version = 11 : i64} {
  func.func @kernel(%arg0: i32, %arg1: memref<1x328x8xbf16, #tpu.memory_space<vmem>>, %arg2: memref<1x288x1xf32, #tpu.memory_space<vmem>>, %arg3: memref<9x8x128xbf16, #tpu.memory_space<vmem>>, %arg4: memref<1x128xf32, #tpu.memory_space<vmem>>, %arg5: memref<1x288x128xf32, #tpu.memory_space<vmem>>) attributes {dimension_semantics = [#tpu.dimension_semantics<parallel>], iteration_bounds = array<i64: 2>, scalar_prefetch = 0 : i64, scratch_operands = 0 : i64, tpu.core_type = #tpu.core_type<tc>, window_params = [{transform_indices = @transform_0, window_bounds = array<i64: 1, 328, 8>}, {transform_indices = @transform_1, window_bounds = array<i64: 1, 288, 1>}, {pipeline_mode = #tpu.pipeline_mode<synchronous>, transform_indices = @transform_2, window_bounds = array<i64: 9, 8, 128>}, {pipeline_mode = #tpu.pipeline_mode<synchronous>, transform_indices = @transform_3, window_bounds = array<i64: 1, 128>}, {transform_indices = @transform_4, window_bounds = array<i64: 1, 288, 128>}]} {
    %c0 = arith.constant 0 : index
    %c0_0 = arith.constant 0 : index
    %c0_1 = arith.constant 0 : index
    %0 = vector.load %arg1[%c0, %c0_0, %c0_1] : memref<1x328x8xbf16, #tpu.memory_space<vmem>>, vector<1x288x8xbf16>
    %1 = vector.shape_cast %0 : vector<1x288x8xbf16> to vector<288x8xbf16>
    %c0_2 = arith.constant 0 : index
    %c0_3 = arith.constant 0 : index
    %c0_4 = arith.constant 0 : index
    %2 = vector.load %arg3[%c0_2, %c0_3, %c0_4] : memref<9x8x128xbf16, #tpu.memory_space<vmem>>, vector<1x8x128xbf16>
    %3 = vector.shape_cast %2 : vector<1x8x128xbf16> to vector<8x128xbf16>
    %cst = arith.constant dense<0.000000e+00> : vector<288x128xf32>
    %4 = tpu.matmul %1, %3, %cst {dimension_numbers = #tpu.dot_dimension_numbers<[1], [0], [0], [1], [0, 0, 1, 1], [], []>} : vector<288x8xbf16>, vector<8x128xbf16>, vector<288x128xf32> -> vector<288x128xf32>
    %c0_5 = arith.constant 0 : index
    %c0_6 = arith.constant 0 : index
    %c0_7 = arith.constant 0 : index
    %5 = vector.load %arg5[%c0_5, %c0_6, %c0_7] : memref<1x288x128xf32, #tpu.memory_space<vmem>>, vector<1x288x128xf32>
    %6 = vector.shape_cast %5 : vector<1x288x128xf32> to vector<288x128xf32>
    %7 = vector.shape_cast %4 : vector<288x128xf32> to vector<1x288x128xf32>
    tpu.vector_store %arg5[%c0_5, %c0_6, %c0_7], %7 {strides = array<i32>} : memref<1x288x128xf32, #tpu.memory_space<vmem>>, vector<1x288x128xf32>,
    %c0_8 = arith.constant 0 : index
    %c1 = arith.constant 1 : index
    %c0_9 = arith.constant 0 : index
    %8 = vector.load %arg1[%c0_8, %c1, %c0_9] : memref<1x328x8xbf16, #tpu.memory_space<vmem>>, vector<1x288x8xbf16>
    %9 = vector.shape_cast %8 : vector<1x288x8xbf16> to vector<288x8xbf16>
    %c1_10 = arith.constant 1 : index
    %c0_11 = arith.constant 0 : index
    %c0_12 = arith.constant 0 : index
    %10 = vector.load %arg3[%c1_10, %c0_11, %c0_12] : memref<9x8x128xbf16, #tpu.memory_space<vmem>>, vector<1x8x128xbf16>
    %11 = vector.shape_cast %10 : vector<1x8x128xbf16> to vector<8x128xbf16>
    %cst_13 = arith.constant dense<0.000000e+00> : vector<288x128xf32>
    %12 = tpu.matmul %9, %11, %cst_13 {dimension_numbers = #tpu.dot_dimension_numbers<[1], [0], [0], [1], [0, 0, 1, 1], [], []>} : vector<288x8xbf16>, vector<8x128xbf16>, vector<288x128xf32> -> vector<288x128xf32>
    %c0_14 = arith.constant 0 : index
    %c0_15 = arith.constant 0 : index
    %c0_16 = arith.constant 0 : index
    %13 = vector.load %arg5[%c0_14, %c0_15, %c0_16] : memref<1x288x128xf32, #tpu.memory_space<vmem>>, vector<1x288x128xf32>
    %14 = vector.shape_cast %13 : vector<1x288x128xf32> to vector<288x128xf32>
    %15 = arith.addf %14, %12 : vector<288x128xf32>
    %c0_17 = arith.constant 0 : index
    %c0_18 = arith.constant 0 : index
    %c0_19 = arith.constant 0 : index
    %16 = vector.load %arg5[%c0_17, %c0_18, %c0_19] : memref<1x288x128xf32, #tpu.memory_space<vmem>>, vector<1x288x128xf32>
    %17 = vector.shape_cast %16 : vector<1x288x128xf32> to vector<288x128xf32>
    %18 = vector.shape_cast %15 : vector<288x128xf32> to vector<1x288x128xf32>
    tpu.vector_store %arg5[%c0_17, %c0_18, %c0_19], %18 {strides = array<i32>} : memref<1x288x128xf32, #tpu.memory_space<vmem>>, vector<1x288x128xf32>,
    %c0_20 = arith.constant 0 : index
    %c2 = arith.constant 2 : index
    %c0_21 = arith.constant 0 : index
    %19 = vector.load %arg1[%c0_20, %c2, %c0_21] : memref<1x328x8xbf16, #tpu.memory_space<vmem>>, vector<1x288x8xbf16>
    %20 = vector.shape_cast %19 : vector<1x288x8xbf16> to vector<288x8xbf16>
    %c2_22 = arith.constant 2 : index
    %c0_23 = arith.constant 0 : index
    %c0_24 = arith.constant 0 : index
    %21 = vector.load %arg3[%c2_22, %c0_23, %c0_24] : memref<9x8x128xbf16, #tpu.memory_space<vmem>>, vector<1x8x128xbf16>
    %22 = vector.shape_cast %21 : vector<1x8x128xbf16> to vector<8x128xbf16>
    %cst_25 = arith.constant dense<0.000000e+00> : vector<288x128xf32>
    %23 = tpu.matmul %20, %22, %cst_25 {dimension_numbers = #tpu.dot_dimension_numbers<[1], [0], [0], [1], [0, 0, 1, 1], [], []>} : vector<288x8xbf16>, vector<8x128xbf16>, vector<288x128xf32> -> vector<288x128xf32>
    %c0_26 = arith.constant 0 : index
    %c0_27 = arith.constant 0 : index
    %c0_28 = arith.constant 0 : index
    %24 = vector.load %arg5[%c0_26, %c0_27, %c0_28] : memref<1x288x128xf32, #tpu.memory_space<vmem>>, vector<1x288x128xf32>
    %25 = vector.shape_cast %24 : vector<1x288x128xf32> to vector<288x128xf32>
    %26 = arith.addf %25, %23 : vector<288x128xf32>
    %c0_29 = arith.constant 0 : index
    %c0_30 = arith.constant 0 : index
    %c0_31 = arith.constant 0 : index
    %27 = vector.load %arg5[%c0_29, %c0_30, %c0_31] : memref<1x288x128xf32, #tpu.memory_space<vmem>>, vector<1x288x128xf32>
    %28 = vector.shape_cast %27 : vector<1x288x128xf32> to vector<288x128xf32>
    %29 = vector.shape_cast %26 : vector<288x128xf32> to vector<1x288x128xf32>
    tpu.vector_store %arg5[%c0_29, %c0_30, %c0_31], %29 {strides = array<i32>} : memref<1x288x128xf32, #tpu.memory_space<vmem>>, vector<1x288x128xf32>,
    %c0_32 = arith.constant 0 : index
    %c18 = arith.constant 18 : index
    %c0_33 = arith.constant 0 : index
    %30 = vector.load %arg1[%c0_32, %c18, %c0_33] : memref<1x328x8xbf16, #tpu.memory_space<vmem>>, vector<1x288x8xbf16>
    %31 = vector.shape_cast %30 : vector<1x288x8xbf16> to vector<288x8xbf16>
    %c3 = arith.constant 3 : index
    %c0_34 = arith.constant 0 : index
    %c0_35 = arith.constant 0 : index
    %32 = vector.load %arg3[%c3, %c0_34, %c0_35] : memref<9x8x128xbf16, #tpu.memory_space<vmem>>, vector<1x8x128xbf16>
    %33 = vector.shape_cast %32 : vector<1x8x128xbf16> to vector<8x128xbf16>
    %cst_36 = arith.constant dense<0.000000e+00> : vector<288x128xf32>
    %34 = tpu.matmul %31, %33, %cst_36 {dimension_numbers = #tpu.dot_dimension_numbers<[1], [0], [0], [1], [0, 0, 1, 1], [], []>} : vector<288x8xbf16>, vector<8x128xbf16>, vector<288x128xf32> -> vector<288x128xf32>
    %c0_37 = arith.constant 0 : index
    %c0_38 = arith.constant 0 : index
    %c0_39 = arith.constant 0 : index
    %35 = vector.load %arg5[%c0_37, %c0_38, %c0_39] : memref<1x288x128xf32, #tpu.memory_space<vmem>>, vector<1x288x128xf32>
    %36 = vector.shape_cast %35 : vector<1x288x128xf32> to vector<288x128xf32>
    %37 = arith.addf %36, %34 : vector<288x128xf32>
    %c0_40 = arith.constant 0 : index
    %c0_41 = arith.constant 0 : index
    %c0_42 = arith.constant 0 : index
    %38 = vector.load %arg5[%c0_40, %c0_41, %c0_42] : memref<1x288x128xf32, #tpu.memory_space<vmem>>, vector<1x288x128xf32>
    %39 = vector.shape_cast %38 : vector<1x288x128xf32> to vector<288x128xf32>
    %40 = vector.shape_cast %37 : vector<288x128xf32> to vector<1x288x128xf32>
    tpu.vector_store %arg5[%c0_40, %c0_41, %c0_42], %40 {strides = array<i32>} : memref<1x288x128xf32, #tpu.memory_space<vmem>>, vector<1x288x128xf32>,
    %c0_43 = arith.constant 0 : index
    %c19 = arith.constant 19 : index
    %c0_44 = arith.constant 0 : index
    %41 = vector.load %arg1[%c0_43, %c19, %c0_44] : memref<1x328x8xbf16, #tpu.memory_space<vmem>>, vector<1x288x8xbf16>
    %42 = vector.shape_cast %41 : vector<1x288x8xbf16> to vector<288x8xbf16>
    %c4 = arith.constant 4 : index
    %c0_45 = arith.constant 0 : index
    %c0_46 = arith.constant 0 : index
    %43 = vector.load %arg3[%c4, %c0_45, %c0_46] : memref<9x8x128xbf16, #tpu.memory_space<vmem>>, vector<1x8x128xbf16>
    %44 = vector.shape_cast %43 : vector<1x8x128xbf16> to vector<8x128xbf16>
    %cst_47 = arith.constant dense<0.000000e+00> : vector<288x128xf32>
    %45 = tpu.matmul %42, %44, %cst_47 {dimension_numbers = #tpu.dot_dimension_numbers<[1], [0], [0], [1], [0, 0, 1, 1], [], []>} : vector<288x8xbf16>, vector<8x128xbf16>, vector<288x128xf32> -> vector<288x128xf32>
    %c0_48 = arith.constant 0 : index
    %c0_49 = arith.constant 0 : index
    %c0_50 = arith.constant 0 : index
    %46 = vector.load %arg5[%c0_48, %c0_49, %c0_50] : memref<1x288x128xf32, #tpu.memory_space<vmem>>, vector<1x288x128xf32>
    %47 = vector.shape_cast %46 : vector<1x288x128xf32> to vector<288x128xf32>
    %48 = arith.addf %47, %45 : vector<288x128xf32>
    %c0_51 = arith.constant 0 : index
    %c0_52 = arith.constant 0 : index
    %c0_53 = arith.constant 0 : index
    %49 = vector.load %arg5[%c0_51, %c0_52, %c0_53] : memref<1x288x128xf32, #tpu.memory_space<vmem>>, vector<1x288x128xf32>
    %50 = vector.shape_cast %49 : vector<1x288x128xf32> to vector<288x128xf32>
    %51 = vector.shape_cast %48 : vector<288x128xf32> to vector<1x288x128xf32>
    tpu.vector_store %arg5[%c0_51, %c0_52, %c0_53], %51 {strides = array<i32>} : memref<1x288x128xf32, #tpu.memory_space<vmem>>, vector<1x288x128xf32>,
    %c0_54 = arith.constant 0 : index
    %c20 = arith.constant 20 : index
    %c0_55 = arith.constant 0 : index
    %52 = vector.load %arg1[%c0_54, %c20, %c0_55] : memref<1x328x8xbf16, #tpu.memory_space<vmem>>, vector<1x288x8xbf16>
    %53 = vector.shape_cast %52 : vector<1x288x8xbf16> to vector<288x8xbf16>
    %c5 = arith.constant 5 : index
    %c0_56 = arith.constant 0 : index
    %c0_57 = arith.constant 0 : index
    %54 = vector.load %arg3[%c5, %c0_56, %c0_57] : memref<9x8x128xbf16, #tpu.memory_space<vmem>>, vector<1x8x128xbf16>
    %55 = vector.shape_cast %54 : vector<1x8x128xbf16> to vector<8x128xbf16>
    %cst_58 = arith.constant dense<0.000000e+00> : vector<288x128xf32>
    %56 = tpu.matmul %53, %55, %cst_58 {dimension_numbers = #tpu.dot_dimension_numbers<[1], [0], [0], [1], [0, 0, 1, 1], [], []>} : vector<288x8xbf16>, vector<8x128xbf16>, vector<288x128xf32> -> vector<288x128xf32>
    %c0_59 = arith.constant 0 : index
    %c0_60 = arith.constant 0 : index
    %c0_61 = arith.constant 0 : index
    %57 = vector.load %arg5[%c0_59, %c0_60, %c0_61] : memref<1x288x128xf32, #tpu.memory_space<vmem>>, vector<1x288x128xf32>
    %58 = vector.shape_cast %57 : vector<1x288x128xf32> to vector<288x128xf32>
    %59 = arith.addf %58, %56 : vector<288x128xf32>
    %c0_62 = arith.constant 0 : index
    %c0_63 = arith.constant 0 : index
    %c0_64 = arith.constant 0 : index
    %60 = vector.load %arg5[%c0_62, %c0_63, %c0_64] : memref<1x288x128xf32, #tpu.memory_space<vmem>>, vector<1x288x128xf32>
    %61 = vector.shape_cast %60 : vector<1x288x128xf32> to vector<288x128xf32>
    %62 = vector.shape_cast %59 : vector<288x128xf32> to vector<1x288x128xf32>
    tpu.vector_store %arg5[%c0_62, %c0_63, %c0_64], %62 {strides = array<i32>} : memref<1x288x128xf32, #tpu.memory_space<vmem>>, vector<1x288x128xf32>,
    %c0_65 = arith.constant 0 : index
    %c36 = arith.constant 36 : index
    %c0_66 = arith.constant 0 : index
    %63 = vector.load %arg1[%c0_65, %c36, %c0_66] : memref<1x328x8xbf16, #tpu.memory_space<vmem>>, vector<1x288x8xbf16>
    %64 = vector.shape_cast %63 : vector<1x288x8xbf16> to vector<288x8xbf16>
    %c6 = arith.constant 6 : index
    %c0_67 = arith.constant 0 : index
    %c0_68 = arith.constant 0 : index
    %65 = vector.load %arg3[%c6, %c0_67, %c0_68] : memref<9x8x128xbf16, #tpu.memory_space<vmem>>, vector<1x8x128xbf16>
    %66 = vector.shape_cast %65 : vector<1x8x128xbf16> to vector<8x128xbf16>
    %cst_69 = arith.constant dense<0.000000e+00> : vector<288x128xf32>
    %67 = tpu.matmul %64, %66, %cst_69 {dimension_numbers = #tpu.dot_dimension_numbers<[1], [0], [0], [1], [0, 0, 1, 1], [], []>} : vector<288x8xbf16>, vector<8x128xbf16>, vector<288x128xf32> -> vector<288x128xf32>
    %c0_70 = arith.constant 0 : index
    %c0_71 = arith.constant 0 : index
    %c0_72 = arith.constant 0 : index
    %68 = vector.load %arg5[%c0_70, %c0_71, %c0_72] : memref<1x288x128xf32, #tpu.memory_space<vmem>>, vector<1x288x128xf32>
    %69 = vector.shape_cast %68 : vector<1x288x128xf32> to vector<288x128xf32>
    %70 = arith.addf %69, %67 : vector<288x128xf32>
    %c0_73 = arith.constant 0 : index
    %c0_74 = arith.constant 0 : index
    %c0_75 = arith.constant 0 : index
    %71 = vector.load %arg5[%c0_73, %c0_74, %c0_75] : memref<1x288x128xf32, #tpu.memory_space<vmem>>, vector<1x288x128xf32>
    %72 = vector.shape_cast %71 : vector<1x288x128xf32> to vector<288x128xf32>
    %73 = vector.shape_cast %70 : vector<288x128xf32> to vector<1x288x128xf32>
    tpu.vector_store %arg5[%c0_73, %c0_74, %c0_75], %73 {strides = array<i32>} : memref<1x288x128xf32, #tpu.memory_space<vmem>>, vector<1x288x128xf32>,
    %c0_76 = arith.constant 0 : index
    %c37 = arith.constant 37 : index
    %c0_77 = arith.constant 0 : index
    %74 = vector.load %arg1[%c0_76, %c37, %c0_77] : memref<1x328x8xbf16, #tpu.memory_space<vmem>>, vector<1x288x8xbf16>
    %75 = vector.shape_cast %74 : vector<1x288x8xbf16> to vector<288x8xbf16>
    %c7 = arith.constant 7 : index
    %c0_78 = arith.constant 0 : index
    %c0_79 = arith.constant 0 : index
    %76 = vector.load %arg3[%c7, %c0_78, %c0_79] : memref<9x8x128xbf16, #tpu.memory_space<vmem>>, vector<1x8x128xbf16>
    %77 = vector.shape_cast %76 : vector<1x8x128xbf16> to vector<8x128xbf16>
    %cst_80 = arith.constant dense<0.000000e+00> : vector<288x128xf32>
    %78 = tpu.matmul %75, %77, %cst_80 {dimension_numbers = #tpu.dot_dimension_numbers<[1], [0], [0], [1], [0, 0, 1, 1], [], []>} : vector<288x8xbf16>, vector<8x128xbf16>, vector<288x128xf32> -> vector<288x128xf32>
    %c0_81 = arith.constant 0 : index
    %c0_82 = arith.constant 0 : index
    %c0_83 = arith.constant 0 : index
    %79 = vector.load %arg5[%c0_81, %c0_82, %c0_83] : memref<1x288x128xf32, #tpu.memory_space<vmem>>, vector<1x288x128xf32>
    %80 = vector.shape_cast %79 : vector<1x288x128xf32> to vector<288x128xf32>
    %81 = arith.addf %80, %78 : vector<288x128xf32>
    %c0_84 = arith.constant 0 : index
    %c0_85 = arith.constant 0 : index
    %c0_86 = arith.constant 0 : index
    %82 = vector.load %arg5[%c0_84, %c0_85, %c0_86] : memref<1x288x128xf32, #tpu.memory_space<vmem>>, vector<1x288x128xf32>
    %83 = vector.shape_cast %82 : vector<1x288x128xf32> to vector<288x128xf32>
    %84 = vector.shape_cast %81 : vector<288x128xf32> to vector<1x288x128xf32>
    tpu.vector_store %arg5[%c0_84, %c0_85, %c0_86], %84 {strides = array<i32>} : memref<1x288x128xf32, #tpu.memory_space<vmem>>, vector<1x288x128xf32>,
    %c0_87 = arith.constant 0 : index
    %c38 = arith.constant 38 : index
    %c0_88 = arith.constant 0 : index
    %85 = vector.load %arg1[%c0_87, %c38, %c0_88] : memref<1x328x8xbf16, #tpu.memory_space<vmem>>, vector<1x288x8xbf16>
    %86 = vector.shape_cast %85 : vector<1x288x8xbf16> to vector<288x8xbf16>
    %c8 = arith.constant 8 : index
    %c0_89 = arith.constant 0 : index
    %c0_90 = arith.constant 0 : index
    %87 = vector.load %arg3[%c8, %c0_89, %c0_90] : memref<9x8x128xbf16, #tpu.memory_space<vmem>>, vector<1x8x128xbf16>
    %88 = vector.shape_cast %87 : vector<1x8x128xbf16> to vector<8x128xbf16>
    %cst_91 = arith.constant dense<0.000000e+00> : vector<288x128xf32>
    %89 = tpu.matmul %86, %88, %cst_91 {dimension_numbers = #tpu.dot_dimension_numbers<[1], [0], [0], [1], [0, 0, 1, 1], [], []>} : vector<288x8xbf16>, vector<8x128xbf16>, vector<288x128xf32> -> vector<288x128xf32>
    %c0_92 = arith.constant 0 : index
    %c0_93 = arith.constant 0 : index
    %c0_94 = arith.constant 0 : index
    %90 = vector.load %arg5[%c0_92, %c0_93, %c0_94] : memref<1x288x128xf32, #tpu.memory_space<vmem>>, vector<1x288x128xf32>
    %91 = vector.shape_cast %90 : vector<1x288x128xf32> to vector<288x128xf32>
    %92 = arith.addf %91, %89 : vector<288x128xf32>
    %c0_95 = arith.constant 0 : index
    %c0_96 = arith.constant 0 : index
    %c0_97 = arith.constant 0 : index
    %93 = vector.load %arg5[%c0_95, %c0_96, %c0_97] : memref<1x288x128xf32, #tpu.memory_space<vmem>>, vector<1x288x128xf32>
    %94 = vector.shape_cast %93 : vector<1x288x128xf32> to vector<288x128xf32>
    %95 = vector.shape_cast %92 : vector<288x128xf32> to vector<1x288x128xf32>
    tpu.vector_store %arg5[%c0_95, %c0_96, %c0_97], %95 {strides = array<i32>} : memref<1x288x128xf32, #tpu.memory_space<vmem>>, vector<1x288x128xf32>,
    %c0_98 = arith.constant 0 : index
    %c0_99 = arith.constant 0 : index
    %c0_100 = arith.constant 0 : index
    %96 = vector.load %arg2[%c0_98, %c0_99, %c0_100] : memref<1x288x1xf32, #tpu.memory_space<vmem>>, vector<1x288x1xf32>
    %97 = vector.shape_cast %96 : vector<1x288x1xf32> to vector<288x1xf32>
    %cst_101 = arith.constant 0.000000e+00 : f32
    %98 = vector.broadcast %cst_101 : f32 to vector<288x1xf32>
    %99 = arith.cmpf oeq, %97, %98 : vector<288x1xf32>
    %cst_102 = arith.constant 1.000000e+00 : f32
    %100 = vector.broadcast %cst_102 : f32 to vector<288x1xf32>
    %101 = arith.select %99, %100, %97 : vector<288x1xi1>, vector<288x1xf32>
    %102 = tpu.reciprocal %101 : vector<288x1xf32> -> vector<288x1xf32>
    %c0_103 = arith.constant 0 : index
    %c0_104 = arith.constant 0 : index
    %c0_105 = arith.constant 0 : index
    %103 = vector.load %arg5[%c0_103, %c0_104, %c0_105] : memref<1x288x128xf32, #tpu.memory_space<vmem>>, vector<1x288x128xf32>
    %104 = vector.shape_cast %103 : vector<1x288x128xf32> to vector<288x128xf32>
    %105 = vector.broadcast %102 : vector<288x1xf32> to vector<288x128xf32>
    %106 = arith.mulf %104, %105 : vector<288x128xf32>
    %c0_106 = arith.constant 0 : index
    %c0_107 = arith.constant 0 : index
    %107 = vector.load %arg4[%c0_106, %c0_107] : memref<1x128xf32, #tpu.memory_space<vmem>>, vector<1x128xf32>
    %108 = vector.broadcast %107 : vector<1x128xf32> to vector<288x128xf32>
    %109 = arith.addf %106, %108 : vector<288x128xf32>
    %cst_108 = arith.constant 0.000000e+00 : f32
    %110 = vector.shape_cast %99 : vector<288x1xi1> to vector<288x1xi1>
    %111 = vector.broadcast %110 : vector<288x1xi1> to vector<288x128xi1>
    %112 = vector.broadcast %cst_108 : f32 to vector<288x128xf32>
    %113 = arith.select %111, %112, %109 : vector<288x128xi1>, vector<288x128xf32>
    %c0_109 = arith.constant 0 : index
    %c0_110 = arith.constant 0 : index
    %c0_111 = arith.constant 0 : index
    %114 = vector.load %arg5[%c0_109, %c0_110, %c0_111] : memref<1x288x128xf32, #tpu.memory_space<vmem>>, vector<1x288x128xf32>
    %115 = vector.shape_cast %114 : vector<1x288x128xf32> to vector<288x128xf32>
    %116 = vector.shape_cast %113 : vector<288x128xf32> to vector<1x288x128xf32>
    tpu.vector_store %arg5[%c0_109, %c0_110, %c0_111], %116 {strides = array<i32>} : memref<1x288x128xf32, #tpu.memory_space<vmem>>, vector<1x288x128xf32>,
    return
  }
  func.func @transform_0(%arg0: i32) -> (i32, i32, i32) {
    %c0_i32 = arith.constant 0 : i32
    %c0_i32_0 = arith.constant 0 : i32
    %c0_i32_1 = arith.constant 0 : i32
    return %arg0, %c0_i32, %c0_i32_0 : i32, i32, i32
  }
  func.func @transform_1(%arg0: i32) -> (i32, i32, i32) {
    %c0_i32 = arith.constant 0 : i32
    %c0_i32_0 = arith.constant 0 : i32
    %c0_i32_1 = arith.constant 0 : i32
    return %arg0, %c0_i32, %c0_i32_0 : i32, i32, i32
  }
  func.func @transform_2(%arg0: i32) -> (i32, i32, i32) {
    %c0_i32 = arith.constant 0 : i32
    %c0_i32_0 = arith.constant 0 : i32
    %c0_i32_1 = arith.constant 0 : i32
    %c0_i32_2 = arith.constant 0 : i32
    return %c0_i32, %c0_i32_0, %c0_i32_1 : i32, i32, i32
  }
  func.func @transform_3(%arg0: i32) -> (i32, i32) {
    %c0_i32 = arith.constant 0 : i32
    %c0_i32_0 = arith.constant 0 : i32
    %c0_i32_1 = arith.constant 0 : i32
    return %c0_i32, %c0_i32_0 : i32, i32
  }
  func.func @transform_4(%arg0: i32) -> (i32, i32, i32) {
    %c0_i32 = arith.constant 0 : i32
    %c0_i32_0 = arith.constant 0 : i32
    %c0_i32_1 = arith.constant 0 : i32
    return %arg0, %c0_i32, %c0_i32_0 : i32, i32, i32
  }
}

</mosaic_0001>

<llo_original>
// kernel: tpu_custom_call.1
$region0: #{tpu_custom_call.1}
  #allocation0 [shape = 'u32[]', space=smem, size = 0x4, offset = 0x4, fixed_abs, tag = 'smem constant byte address 0x4 - core index']
  #allocation1 [shape = 'u32[72,128]{1,0:T(1,128)}', space=vmem, size = 0x9000, scoped, tag = 'internal scratch']
  %s0 = inlined_call_operand.vmem [shape: bf16[2,328,8], index: 0, kind: input, shape index: {}]
  %s1 = inlined_call_operand.vmem [shape: f32[2,288,1], index: 1, kind: input, shape index: {}]
  %s2 = inlined_call_operand.vmem [shape: bf16[9,8,128], index: 2, kind: input, shape index: {}]
  %s3 = inlined_call_operand.vmem [shape: f32[1,128], index: 3, kind: input, shape index: {}]
  %s4 = inlined_call_operand.hbm [shape: f32[2,288,128], index: 4, kind: output, shape index: {}]
  %s5 = sld [smem:[#allocation0]]
  $region49: #{tpu_custom_call.1} parent=0
    _
  %s7 = ssub.s32 1, %s5
  %s8 = scalar_select 0, %s7, %s5
  $region1: #{tpu_custom_call.1} parent=0
    #allocation2 [shape = 'u8[294912]{0}', space=vmem, size = 0x48000, scoped, tag = 'output window, operand 0']
    #allocation3 [shape = 's32[2]{0}', space=sflag, size = 0x8, scoped, tag = 'scoped memory for tpu_custom_call.1']
    %9 = vsyncpa [#allocation3], 0
    %s10 = scalar_lea.sflag [#allocation3], 1
    %11 = vsyncpa %s10, 0
    loop: start=0, step=1, limit=4
    $region2: #{tpu_custom_call.1} parent=1 // loop_pre_header
      _
    $region3: #{tpu_custom_call.1} parent=1 // loop_header
      %s13 = sphi 0, %s17
      %p14 = scmp.ge.s32.totalorder %s13, 4
      %s23 = sphi 0, %s25
      %s26 = sphi 0, %s23
      %s27 = sphi 0, %s26
      %s43 = sphi 0, %s27
      %s49 = sphi 0, %s51
      %s52 = sphi 0, %s49
      %s53 = sphi 0, %s52
      %s69 = sphi 0, %s53
      %s73 = sphi 0, %s73
      %s75 = sphi 0, %s73
      %s76 = sphi 0, %s75
      %s90 = sphi 0, %s76
      %s94 = sphi 0, %s94
      %s96 = sphi 0, %s94
      %s97 = sphi 0, %s96
      %s111 = sphi 0, %s97
      %s117 = sphi 0, %s119
      %s120 = sphi 0, %s117
      %s121 = sphi 0, %s120
      %s137 = sphi 0, %s121
    $region4: #{tpu_custom_call.1} parent=1 // loop_header_branch
      %16 = sbr.rel (%p14) target = $region8
    $region5: #{tpu_custom_call.1} parent=1 // loop_body
      %s18 = ssub.s32 %s13, 1
      %s19 = ssub.s32 %s13, 2
      %s20 = sadd.s32 %s13, 1
      %s21 = ssub.s32 %s13, %s20
      %p22 = scmp.eq.s32.totalorder %s21, 0
      %s24 = sadd.s32 %s23, 1
      %s25 = scalar_select %p22, %s23, %s24
      %p28 = pneg %p22
      %p29 = scmp.eq.s32.totalorder %s13, 1
      %p30 = por %p28, %p29
      %p31 = scmp.ne.s32.totalorder %s23, %s26
      %p32 = scmp.eq.s32.totalorder %s13, 0
      %p33 = por %p31, %p32
      %p34 = scmp.ne.s32.totalorder %s23, %s26
      %p35 = scmp.eq.s32.totalorder %s18, 1
      %p36 = por %p34, %p35
      %p37 = scmp.ne.s32.totalorder %s26, %s27
      %p38 = scmp.eq.s32.totalorder %s18, 0
      %p39 = por %p37, %p38
      %p40 = scmp.ne.s32.totalorder %s26, %s27
      %p41 = scmp.eq.s32.totalorder %s19, 1
      %p42 = por %p40, %p41
      %p44 = scmp.ne.s32.totalorder %s27, %s43
      %p45 = scmp.eq.s32.totalorder %s19, 0
      %p46 = por %p44, %p45
      %s47 = ssub.s32 %s13, %s20
      %p48 = scmp.eq.s32.totalorder %s47, 0
      %s50 = sadd.s32 %s49, 1
      %s51 = scalar_select %p48, %s49, %s50
      %p54 = pneg %p48
      %p55 = scmp.eq.s32.totalorder %s13, 1
      %p56 = por %p54, %p55
      %p57 = scmp.ne.s32.totalorder %s49, %s52
      %p58 = scmp.eq.s32.totalorder %s13, 0
      %p59 = por %p57, %p58
      %p60 = scmp.ne.s32.totalorder %s49, %s52
      %p61 = scmp.eq.s32.totalorder %s18, 1
      %p62 = por %p60, %p61
      %p63 = scmp.ne.s32.totalorder %s52, %s53
      %p64 = scmp.eq.s32.totalorder %s18, 0
      %p65 = por %p63, %p64
      %p66 = scmp.ne.s32.totalorder %s52, %s53
      %p67 = scmp.eq.s32.totalorder %s19, 1
      %p68 = por %p66, %p67
      %p70 = scmp.ne.s32.totalorder %s53, %s69
      %p71 = scmp.eq.s32.totalorder %s19, 0
      %p72 = por %p70, %p71
      %s74 = sadd.s32 %s73, 1
      %p77 = scmp.eq.s32.totalorder %s13, 1
      %p78 = scmp.ne.s32.totalorder %s73, %s75
      %p79 = scmp.eq.s32.totalorder %s13, 0
      %p80 = por %p78, %p79
      %p81 = scmp.ne.s32.totalorder %s73, %s75
      %p82 = scmp.eq.s32.totalorder %s18, 1
      %p83 = por %p81, %p82
      %p84 = scmp.ne.s32.totalorder %s75, %s76
      %p85 = scmp.eq.s32.totalorder %s18, 0
      %p86 = por %p84, %p85
      %p87 = scmp.ne.s32.totalorder %s75, %s76
      %p88 = scmp.eq.s32.totalorder %s19, 1
      %p89 = por %p87, %p88
      %p91 = scmp.ne.s32.totalorder %s76, %s90
      %p92 = scmp.eq.s32.totalorder %s19, 0
      %p93 = por %p91, %p92
      %s95 = sadd.s32 %s94, 1
      %p98 = scmp.eq.s32.totalorder %s13, 1
      %p99 = scmp.ne.s32.totalorder %s94, %s96
      %p100 = scmp.eq.s32.totalorder %s13, 0
      %p101 = por %p99, %p100
      %p102 = scmp.ne.s32.totalorder %s94, %s96
      %p103 = scmp.eq.s32.totalorder %s18, 1
      %p104 = por %p102, %p103
      %p105 = scmp.ne.s32.totalorder %s96, %s97
      %p106 = scmp.eq.s32.totalorder %s18, 0
      %p107 = por %p105, %p106
      %p108 = scmp.ne.s32.totalorder %s96, %s97
      %p109 = scmp.eq.s32.totalorder %s19, 1
      %p110 = por %p108, %p109
      %p112 = scmp.ne.s32.totalorder %s97, %s111
      %p113 = scmp.eq.s32.totalorder %s19, 0
      %p114 = por %p112, %p113
      %s115 = ssub.s32 %s13, %s20
      %p116 = scmp.eq.s32.totalorder %s115, 0
      %s118 = sadd.s32 %s117, 1
      %s119 = scalar_select %p116, %s117, %s118
      %p122 = pneg %p116
      %p123 = scmp.eq.s32.totalorder %s13, 1
      %p124 = por %p122, %p123
      %p125 = scmp.ne.s32.totalorder %s117, %s120
      %p126 = scmp.eq.s32.totalorder %s13, 0
      %p127 = por %p125, %p126
      %p128 = scmp.ne.s32.totalorder %s117, %s120
      %p129 = scmp.eq.s32.totalorder %s18, 1
      %p130 = por %p128, %p129
      %p131 = scmp.ne.s32.totalorder %s120, %s121
      %p132 = scmp.eq.s32.totalorder %s18, 0
      %p133 = por %p131, %p132
      %p134 = scmp.ne.s32.totalorder %s120, %s121
      %p135 = scmp.eq.s32.totalorder %s19, 1
      %p136 = por %p134, %p135
      %p138 = scmp.ne.s32.totalorder %s121, %s137
      %p139 = scmp.eq.s32.totalorder %s19, 0
      %p140 = por %p138, %p139
      %p141 = scmp.le.s32.totalorder 1, %s13
      %p142 = scmp.lt.s32.totalorder %s13, 3
      %p143 = pnand %p141, %p142
      %p144 = pneg %p143
      // Predicated region
      $region9: #{tpu_custom_call.1} parent=5 // pred_check
        _
      $region10: #{tpu_custom_call.1} parent=5 // pred_check_branch
        %146 = sbr.rel (%p143) target = $region12
      $region11: #{tpu_custom_call.1} parent=5 // pred_region
        %s147 = ssub.s32 %s13, 1
        // Predicated region
        $region13: #{tpu_custom_call.1} parent=11 // pred_check
          %p148 = pneg %p86
        $region14: #{tpu_custom_call.1} parent=11 // pred_check_branch
          %150 = sbr.rel (%p148) target = $region16
        $region15: #{tpu_custom_call.1} parent=11 // pred_region
          _
        $region16: #{tpu_custom_call.1} parent=11 // pred_fallthru
          _
        // Predicated region
        $region17: #{tpu_custom_call.1} parent=11 // pred_check
          %p151 = pneg %p107
        $region18: #{tpu_custom_call.1} parent=11 // pred_check_branch
          %153 = sbr.rel (%p151) target = $region20
        $region19: #{tpu_custom_call.1} parent=11 // pred_region
          _
        $region20: #{tpu_custom_call.1} parent=11 // pred_fallthru
          _
      $region12: #{tpu_custom_call.1} parent=5 // pred_fallthru
        _
      %p154 = scmp.lt.s32.totalorder %s13, 2
      // Predicated region
      $region21: #{tpu_custom_call.1} parent=5 // pred_check
        %p155 = pneg %p154
      $region22: #{tpu_custom_call.1} parent=5 // pred_check_branch
        %157 = sbr.rel (%p155) target = $region24
      $region23: #{tpu_custom_call.1} parent=5 // pred_region
        // Predicated region
        $region25: #{tpu_custom_call.1} parent=23 // pred_check
          %p158 = pneg %p33
        $region26: #{tpu_custom_call.1} parent=23 // pred_check_branch
          %160 = sbr.rel (%p158) target = $region28
        $region27: #{tpu_custom_call.1} parent=23 // pred_region
          %p161 = scmp.lt.s32.totalorder %s13, 1
          %s162 = scalar_select %p161, %s13, 1
          %s163 = smul.addr %s162, 41
          %s164 = smul.addr %s163, 4
          %s165 = scalar_lea.vmem %s0, %s164
        $region28: #{tpu_custom_call.1} parent=23 // pred_fallthru
          _
        // Predicated region
        $region29: #{tpu_custom_call.1} parent=23 // pred_check
          %p166 = pneg %p59
        $region30: #{tpu_custom_call.1} parent=23 // pred_check_branch
          %168 = sbr.rel (%p166) target = $region32
        $region31: #{tpu_custom_call.1} parent=23 // pred_region
          %p169 = scmp.lt.s32.totalorder %s13, 1
          %s170 = scalar_select %p169, %s13, 1
          %s171 = smul.addr %s170, 36
          %s172 = smul.addr %s171, 8
          %s173 = scalar_lea.vmem %s1, %s172
        $region32: #{tpu_custom_call.1} parent=23 // pred_fallthru
          _
      $region24: #{tpu_custom_call.1} parent=5 // pred_fallthru
        _
      %p174 = scmp.le.s32.totalorder 1, %s13
      %p175 = scmp.lt.s32.totalorder %s13, 3
      %p176 = pnand %p174, %p175
      %p177 = pneg %p176
      // Predicated region
      $region33: #{tpu_custom_call.1} parent=5 // pred_check
        _
      $region34: #{tpu_custom_call.1} parent=5 // pred_check_branch
        %179 = sbr.rel (%p176) target = $region36
      $region35: #{tpu_custom_call.1} parent=5 // pred_region
        %s180 = ssub.s32 %s13, 1
        %p181 = scmp.lt.s32.totalorder %s18, 1
        %s182 = scalar_select %p181, %s18, 1
        %s183 = smul.addr %s182, 41
        %s184 = smul.addr %s183, 4
        %s185 = scalar_lea.vmem %s0, %s184
        %p186 = pneg %p39
        %p187 = pneg %p36
        %p188 = scmp.lt.s32.totalorder %s18, 1
        %s189 = scalar_select %p188, %s18, 1
        %s190 = smul.addr %s189, 36
        %s191 = smul.addr %s190, 8
        %s192 = scalar_lea.vmem %s1, %s191
        %p193 = pneg %p65
        %p194 = pneg %p62
        %p195 = pneg %p86
        %p196 = pneg %p83
        %p197 = pneg %p107
        %p198 = pneg %p104
        %p199 = pneg %p133
        %p200 = pneg %p130
        %s201 = sand.u32 %s120, 1
        %s202 = scalar_lea.sflag [#allocation3], %s201
        %s203 = sand.u32 %s120, 1
        %s204 = smul.addr %s203, 288
        %s205 = scalar_lea.vmem [#allocation2], %s204
        %p206 = scmp.lt.s32.totalorder %s18, 1
        %s207 = scalar_select %p206, %s18, 1
        %s208 = smul.addr %s207, 41
        %s209 = smul.addr %s208, 4
        %s210 = scalar_lea.vmem %s0, %s209
        %p211 = scmp.lt.s32.totalorder %s18, 1
        %s212 = scalar_select %p211, %s18, 1
        %s213 = smul.addr %s212, 36
        %s214 = smul.addr %s213, 8
        %s215 = scalar_lea.vmem %s1, %s214
        %v217 = vld [vmem:[%s210] sm:$0xf]
        %v218 = vld [vmem:[%s210 + $0x4] sm:$0xf]
        %v219 = vld [vmem:[%s210 + $0x8] sm:$0xf]
        %v220 = vld [vmem:[%s210 + $0xc] sm:$0xf]
        %v221 = vld [vmem:[%s210 + $0x10] sm:$0xf]
        %v222 = vld [vmem:[%s210 + $0x14] sm:$0xf]
        %v223 = vld [vmem:[%s210 + $0x18] sm:$0xf]
        %v224 = vld [vmem:[%s210 + $0x1c] sm:$0xf]
        %v225 = vld [vmem:[%s210 + $0x20] sm:$0xf]
        %v226 = vld [vmem:[%s210 + $0x24] sm:$0xf]
        %v227 = vld [vmem:[%s210 + $0x28] sm:$0xf]
        %v228 = vld [vmem:[%s210 + $0x2c] sm:$0xf]
        %v229 = vld [vmem:[%s210 + $0x30] sm:$0xf]
        %v230 = vld [vmem:[%s210 + $0x34] sm:$0xf]
        %v231 = vld [vmem:[%s210 + $0x38] sm:$0xf]
        %v232 = vld [vmem:[%s210 + $0x3c] sm:$0xf]
        %v233 = vld [vmem:[%s210 + $0x40] sm:$0xf]
        %v234 = vld [vmem:[%s210 + $0x44] sm:$0xf]
        %v235 = vld [vmem:[%s210 + $0x48] sm:$0xf]
        %v236 = vld [vmem:[%s210 + $0x4c] sm:$0xf]
        %v237 = vld [vmem:[%s210 + $0x50] sm:$0xf]
        %v238 = vld [vmem:[%s210 + $0x54] sm:$0xf]
        %v239 = vld [vmem:[%s210 + $0x58] sm:$0xf]
        %v240 = vld [vmem:[%s210 + $0x5c] sm:$0xf]
        %v241 = vld [vmem:[%s210 + $0x60] sm:$0xf]
        %v242 = vld [vmem:[%s210 + $0x64] sm:$0xf]
        %v243 = vld [vmem:[%s210 + $0x68] sm:$0xf]
        %v244 = vld [vmem:[%s210 + $0x6c] sm:$0xf]
        %v245 = vld [vmem:[%s210 + $0x70] sm:$0xf]
        %v246 = vld [vmem:[%s210 + $0x74] sm:$0xf]
        %v247 = vld [vmem:[%s210 + $0x78] sm:$0xf]
        %v248 = vld [vmem:[%s210 + $0x7c] sm:$0xf]
        %v249 = vld [vmem:[%s210 + $0x80] sm:$0xf]
        %v250 = vld [vmem:[%s210 + $0x84] sm:$0xf]
        %v251 = vld [vmem:[%s210 + $0x88] sm:$0xf]
        %v252 = vld [vmem:[%s210 + $0x8c] sm:$0xf]
        %v253 = vld [vmem:[%s2] sm:$0xf]
        %v290 = vunpack.c.l.b16 %v217
        %v291 = vunpack.c.l.b16 %v218
        %v292 = vunpack.c.l.b16 %v219
        %v293 = vunpack.c.l.b16 %v220
        %v294 = vunpack.c.l.b16 %v221
        %v295 = vunpack.c.l.b16 %v222
        %v296 = vunpack.c.l.b16 %v223
        %v297 = vunpack.c.l.b16 %v224
        %v298 = vunpack.c.l.b16 %v225
        %v299 = vunpack.c.l.b16 %v226
        %v300 = vunpack.c.l.b16 %v227
        %v301 = vunpack.c.l.b16 %v228
        %v302 = vunpack.c.l.b16 %v229
        %v303 = vunpack.c.l.b16 %v230
        %v304 = vunpack.c.l.b16 %v231
        %v305 = vunpack.c.l.b16 %v232
        %v306 = vunpack.c.l.b16 %v233
        %v307 = vunpack.c.l.b16 %v234
        %v308 = vunpack.c.l.b16 %v235
        %v309 = vunpack.c.l.b16 %v236
        %v310 = vunpack.c.l.b16 %v237
        %v311 = vunpack.c.l.b16 %v238
        %v312 = vunpack.c.l.b16 %v239
        %v313 = vunpack.c.l.b16 %v240
        %v314 = vunpack.c.l.b16 %v241
        %v315 = vunpack.c.l.b16 %v242
        %v316 = vunpack.c.l.b16 %v243
        %v317 = vunpack.c.l.b16 %v244
        %v318 = vunpack.c.l.b16 %v245
        %v319 = vunpack.c.l.b16 %v246
        %v320 = vunpack.c.l.b16 %v247
        %v321 = vunpack.c.l.b16 %v248
        %v322 = vunpack.c.l.b16 %v249
        %v323 = vunpack.c.l.b16 %v250
        %v324 = vunpack.c.l.b16 %v251
        %v325 = vunpack.c.l.b16 %v252
        %v326 = vpack.c.b16 %v291, %v290
        %v327 = vpack.c.b16 %v293, %v292
        %v328 = vpack.c.b16 %v295, %v294
        %v329 = vpack.c.b16 %v297, %v296
        %v330 = vpack.c.b16 %v299, %v298
        %v331 = vpack.c.b16 %v301, %v300
        %v332 = vpack.c.b16 %v303, %v302
        %v333 = vpack.c.b16 %v305, %v304
        %v334 = vpack.c.b16 %v307, %v306
        %v335 = vpack.c.b16 %v309, %v308
        %v336 = vpack.c.b16 %v311, %v310
        %v337 = vpack.c.b16 %v313, %v312
        %v338 = vpack.c.b16 %v315, %v314
        %v339 = vpack.c.b16 %v317, %v316
        %v340 = vpack.c.b16 %v319, %v318
        %v341 = vpack.c.b16 %v321, %v320
        %v342 = vpack.c.b16 %v323, %v322
        %v343 = vpack.c.b16 %v325, %v324
        %vm344 = vcmask 64512
        %v346 = vsel %vm344, %v326, 0
        %v349 = vsel %vm344, %v327, 0
        %v352 = vsel %vm344, %v328, 0
        %v355 = vsel %vm344, %v329, 0
        %v358 = vsel %vm344, %v330, 0
        %v361 = vsel %vm344, %v331, 0
        %v364 = vsel %vm344, %v332, 0
        %v367 = vsel %vm344, %v333, 0
        %v370 = vsel %vm344, %v334, 0
        %v373 = vsel %vm344, %v335, 0
        %v376 = vsel %vm344, %v336, 0
        %v379 = vsel %vm344, %v337, 0
        %v382 = vsel %vm344, %v338, 0
        %v385 = vsel %vm344, %v339, 0
        %v388 = vsel %vm344, %v340, 0
        %v391 = vsel %vm344, %v341, 0
        %v394 = vsel %vm344, %v342, 0
        %v397 = vsel %vm344, %v343, 0
        %vm399 = vcmask 1043456
        %v401 = vsel %vm399, %v253, 0
        %403 = vmatpush.bf16.msra.mxu0 0
        %404 = vmatpush.bf16.msra.mxu0 0
        %405 = vmatpush.bf16.msra.mxu0 0
        %406 = vmatpush.bf16.msra.mxu0 0
        %407 = vmatpush.bf16.msra.mxu0 0
        %408 = vmatpush.bf16.msra.mxu0 0
        %409 = vmatpush.bf16.msra.mxu0 0
        %410 = vmatpush.bf16.msra.mxu0 %v401
        %411 = vmatmul.bf16.gmra.mxu0 %v346
        %v412 = vpop.f32.mrf.mxu0
        %v413 = vadd.f32 0.0, %v412
        %v414 = vpop.f32.mrf.mxu0
        %v415 = vadd.f32 0.0, %v414
        %416 = vmatmul.bf16.gmra.mxu0 %v349
        %v417 = vpop.f32.mrf.mxu0
        %v418 = vadd.f32 0.0, %v417
        %v419 = vpop.f32.mrf.mxu0
        %v420 = vadd.f32 0.0, %v419
        %421 = vmatmul.bf16.gmra.mxu0 %v352
        %v422 = vpop.f32.mrf.mxu0
        %v423 = vadd.f32 0.0, %v422
        %v424 = vpop.f32.mrf.mxu0
        %v425 = vadd.f32 0.0, %v424
        %426 = vmatmul.bf16.gmra.mxu0 %v355
        %v427 = vpop.f32.mrf.mxu0
        %v428 = vadd.f32 0.0, %v427
        %v429 = vpop.f32.mrf.mxu0
        %v430 = vadd.f32 0.0, %v429
        %431 = vmatmul.bf16.gmra.mxu0 %v358
        %v432 = vpop.f32.mrf.mxu0
        %v433 = vadd.f32 0.0, %v432
        %v434 = vpop.f32.mrf.mxu0
        %v435 = vadd.f32 0.0, %v434
        %436 = vmatmul.bf16.gmra.mxu0 %v361
        %v437 = vpop.f32.mrf.mxu0
        %v438 = vadd.f32 0.0, %v437
        %v439 = vpop.f32.mrf.mxu0
        %v440 = vadd.f32 0.0, %v439
        %441 = vmatmul.bf16.gmra.mxu0 %v364
        %v442 = vpop.f32.mrf.mxu0
        %v443 = vadd.f32 0.0, %v442
        %v444 = vpop.f32.mrf.mxu0
        %v445 = vadd.f32 0.0, %v444
        %446 = vmatmul.bf16.gmra.mxu0 %v367
        %v447 = vpop.f32.mrf.mxu0
        %v448 = vadd.f32 0.0, %v447
        %v449 = vpop.f32.mrf.mxu0
        %v450 = vadd.f32 0.0, %v449
        %451 = vmatmul.bf16.gmra.mxu0 %v370
        %v452 = vpop.f32.mrf.mxu0
        %v453 = vadd.f32 0.0, %v452
        %v454 = vpop.f32.mrf.mxu0
        %v455 = vadd.f32 0.0, %v454
        %456 = vmatmul.bf16.gmra.mxu0 %v373
        %v457 = vpop.f32.mrf.mxu0
        %v458 = vadd.f32 0.0, %v457
        %v459 = vpop.f32.mrf.mxu0
        %v460 = vadd.f32 0.0, %v459
        %461 = vmatmul.bf16.gmra.mxu0 %v376
        %v462 = vpop.f32.mrf.mxu0
        %v463 = vadd.f32 0.0, %v462
        %v464 = vpop.f32.mrf.mxu0
        %v465 = vadd.f32 0.0, %v464
        %466 = vmatmul.bf16.gmra.mxu0 %v379
        %v467 = vpop.f32.mrf.mxu0
        %v468 = vadd.f32 0.0, %v467
        %v469 = vpop.f32.mrf.mxu0
        %v470 = vadd.f32 0.0, %v469
        %471 = vmatmul.bf16.gmra.mxu0 %v382
        %v472 = vpop.f32.mrf.mxu0
        %v473 = vadd.f32 0.0, %v472
        %v474 = vpop.f32.mrf.mxu0
        %v475 = vadd.f32 0.0, %v474
        %476 = vmatmul.bf16.gmra.mxu0 %v385
        %v477 = vpop.f32.mrf.mxu0
        %v478 = vadd.f32 0.0, %v477
        %v479 = vpop.f32.mrf.mxu0
        %v480 = vadd.f32 0.0, %v479
        %481 = vmatmul.bf16.gmra.mxu0 %v388
        %v482 = vpop.f32.mrf.mxu0
        %v483 = vadd.f32 0.0, %v482
        %v484 = vpop.f32.mrf.mxu0
        %v485 = vadd.f32 0.0, %v484
        %486 = vmatmul.bf16.gmra.mxu0 %v391
        %v487 = vpop.f32.mrf.mxu0
        %v488 = vadd.f32 0.0, %v487
        %v489 = vpop.f32.mrf.mxu0
        %v490 = vadd.f32 0.0, %v489
        %491 = vmatmul.bf16.gmra.mxu0 %v394
        %v492 = vpop.f32.mrf.mxu0
        %v493 = vadd.f32 0.0, %v492
        %v494 = vpop.f32.mrf.mxu0
        %v495 = vadd.f32 0.0, %v494
        %496 = vmatmul.bf16.gmra.mxu0 %v397
        %v497 = vpop.f32.mrf.mxu0
        %v498 = vadd.f32 0.0, %v497
        %v499 = vpop.f32.mrf.mxu0
        %v500 = vadd.f32 0.0, %v499
        %501 = vdwg.mxu0
        %502 = vst [vmem:[%s205] sm:$0xff] %v413
        %503 = vst [vmem:[%s205 + $0x8] sm:$0xff] %v415
        %504 = vst [vmem:[%s205 + $0x10] sm:$0xff] %v418
        %505 = vst [vmem:[%s205 + $0x18] sm:$0xff] %v420
        %506 = vst [vmem:[%s205 + $0x20] sm:$0xff] %v423
        %507 = vst [vmem:[%s205 + $0x28] sm:$0xff] %v425
        %508 = vst [vmem:[%s205 + $0x30] sm:$0xff] %v428
        %509 = vst [vmem:[%s205 + $0x38] sm:$0xff] %v430
        %510 = vst [vmem:[%s205 + $0x40] sm:$0xff] %v433
        %511 = vst [vmem:[%s205 + $0x48] sm:$0xff] %v435
        %512 = vst [vmem:[%s205 + $0x50] sm:$0xff] %v438
        %513 = vst [vmem:[%s205 + $0x58] sm:$0xff] %v440
        %514 = vst [vmem:[%s205 + $0x60] sm:$0xff] %v443
        %515 = vst [vmem:[%s205 + $0x68] sm:$0xff] %v445
        %516 = vst [vmem:[%s205 + $0x70] sm:$0xff] %v448
        %517 = vst [vmem:[%s205 + $0x78] sm:$0xff] %v450
        %518 = vst [vmem:[%s205 + $0x80] sm:$0xff] %v453
        %519 = vst [vmem:[%s205 + $0x88] sm:$0xff] %v455
        %520 = vst [vmem:[%s205 + $0x90] sm:$0xff] %v458
        %521 = vst [vmem:[%s205 + $0x98] sm:$0xff] %v460
        %522 = vst [vmem:[%s205 + $0xa0] sm:$0xff] %v463
        %523 = vst [vmem:[%s205 + $0xa8] sm:$0xff] %v465
        %524 = vst [vmem:[%s205 + $0xb0] sm:$0xff] %v468
        %525 = vst [vmem:[%s205 + $0xb8] sm:$0xff] %v470
        %526 = vst [vmem:[%s205 + $0xc0] sm:$0xff] %v473
        %527 = vst [vmem:[%s205 + $0xc8] sm:$0xff] %v475
        %528 = vst [vmem:[%s205 + $0xd0] sm:$0xff] %v478
        %529 = vst [vmem:[%s205 + $0xd8] sm:$0xff] %v480
        %530 = vst [vmem:[%s205 + $0xe0] sm:$0xff] %v483
        %531 = vst [vmem:[%s205 + $0xe8] sm:$0xff] %v485
        %532 = vst [vmem:[%s205 + $0xf0] sm:$0xff] %v488
        %533 = vst [vmem:[%s205 + $0xf8] sm:$0xff] %v490
        %534 = vst [vmem:[%s205 + $0x100] sm:$0xff] %v493
        %535 = vst [vmem:[%s205 + $0x108] sm:$0xff] %v495
        %536 = vst [vmem:[%s205 + $0x110] sm:$0xff] %v498
        %537 = vst [vmem:[%s205 + $0x118] sm:$0xff] %v500
        %v538 = vld [vmem:[%s210] sm:$0xf]
        %v539 = vld [vmem:[%s210 + $0x4] sm:$0xf]
        %v540 = vld [vmem:[%s210 + $0x8] sm:$0xf]
        %v541 = vld [vmem:[%s210 + $0xc] sm:$0xf]
        %v542 = vld [vmem:[%s210 + $0x10] sm:$0xf]
        %v543 = vld [vmem:[%s210 + $0x14] sm:$0xf]
        %v544 = vld [vmem:[%s210 + $0x18] sm:$0xf]
        %v545 = vld [vmem:[%s210 + $0x1c] sm:$0xf]
        %v546 = vld [vmem:[%s210 + $0x20] sm:$0xf]
        %v547 = vld [vmem:[%s210 + $0x24] sm:$0xf]
        %v548 = vld [vmem:[%s210 + $0x28] sm:$0xf]
        %v549 = vld [vmem:[%s210 + $0x2c] sm:$0xf]
        %v550 = vld [vmem:[%s210 + $0x30] sm:$0xf]
        %v551 = vld [vmem:[%s210 + $0x34] sm:$0xf]
        %v552 = vld [vmem:[%s210 + $0x38] sm:$0xf]
        %v553 = vld [vmem:[%s210 + $0x3c] sm:$0xf]
        %v554 = vld [vmem:[%s210 + $0x40] sm:$0xf]
        %v555 = vld [vmem:[%s210 + $0x44] sm:$0xf]
        %v556 = vld [vmem:[%s210 + $0x48] sm:$0xf]
        %v557 = vld [vmem:[%s210 + $0x4c] sm:$0xf]
        %v558 = vld [vmem:[%s210 + $0x50] sm:$0xf]
        %v559 = vld [vmem:[%s210 + $0x54] sm:$0xf]
        %v560 = vld [vmem:[%s210 + $0x58] sm:$0xf]
        %v561 = vld [vmem:[%s210 + $0x5c] sm:$0xf]
        %v562 = vld [vmem:[%s210 + $0x60] sm:$0xf]
        %v563 = vld [vmem:[%s210 + $0x64] sm:$0xf]
        %v564 = vld [vmem:[%s210 + $0x68] sm:$0xf]
        %v565 = vld [vmem:[%s210 + $0x6c] sm:$0xf]
        %v566 = vld [vmem:[%s210 + $0x70] sm:$0xf]
        %v567 = vld [vmem:[%s210 + $0x74] sm:$0xf]
        %v568 = vld [vmem:[%s210 + $0x78] sm:$0xf]
        %v569 = vld [vmem:[%s210 + $0x7c] sm:$0xf]
        %v570 = vld [vmem:[%s210 + $0x80] sm:$0xf]
        %v571 = vld [vmem:[%s210 + $0x84] sm:$0xf]
        %v572 = vld [vmem:[%s210 + $0x88] sm:$0xf]
        %v573 = vld [vmem:[%s210 + $0x8c] sm:$0xf]
        %v574 = vld [vmem:[%s210 + $0x90] sm:$0x1]
        %s575 = scalar_lea.vmem %s2, 4
        %v576 = vld [vmem:[%s575] sm:$0xf]
        %v614 = vunpack.c.l.b16 %v538
        %v615 = vunpack.c.l.b16 %v539
        %v616 = vunpack.c.l.b16 %v540
        %v617 = vunpack.c.l.b16 %v541
        %v618 = vunpack.c.l.b16 %v542
        %v619 = vunpack.c.l.b16 %v543
        %v620 = vunpack.c.l.b16 %v544
        %v621 = vunpack.c.l.b16 %v545
        %v622 = vunpack.c.l.b16 %v546
        %v623 = vunpack.c.l.b16 %v547
        %v624 = vunpack.c.l.b16 %v548
        %v625 = vunpack.c.l.b16 %v549
        %v626 = vunpack.c.l.b16 %v550
        %v627 = vunpack.c.l.b16 %v551
        %v628 = vunpack.c.l.b16 %v552
        %v629 = vunpack.c.l.b16 %v553
        %v630 = vunpack.c.l.b16 %v554
        %v631 = vunpack.c.l.b16 %v555
        %v632 = vunpack.c.l.b16 %v556
        %v633 = vunpack.c.l.b16 %v557
        %v634 = vunpack.c.l.b16 %v558
        %v635 = vunpack.c.l.b16 %v559
        %v636 = vunpack.c.l.b16 %v560
        %v637 = vunpack.c.l.b16 %v561
        %v638 = vunpack.c.l.b16 %v562
        %v639 = vunpack.c.l.b16 %v563
        %v640 = vunpack.c.l.b16 %v564
        %v641 = vunpack.c.l.b16 %v565
        %v642 = vunpack.c.l.b16 %v566
        %v643 = vunpack.c.l.b16 %v567
        %v644 = vunpack.c.l.b16 %v568
        %v645 = vunpack.c.l.b16 %v569
        %v646 = vunpack.c.l.b16 %v570
        %v647 = vunpack.c.l.b16 %v571
        %v648 = vunpack.c.l.b16 %v572
        %v649 = vunpack.c.l.b16 %v573
        %v650 = vunpack.c.l.b16 %v574
        %v651 = vpack.c.b16 %v615, %v614
        %v652 = vpack.c.b16 %v617, %v616
        %v653 = vpack.c.b16 %v619, %v618
        %v654 = vpack.c.b16 %v621, %v620
        %v655 = vpack.c.b16 %v623, %v622
        %v656 = vpack.c.b16 %v625, %v624
        %v657 = vpack.c.b16 %v627, %v626
        %v658 = vpack.c.b16 %v629, %v628
        %v659 = vpack.c.b16 %v631, %v630
        %v660 = vpack.c.b16 %v633, %v632
        %v661 = vpack.c.b16 %v635, %v634
        %v662 = vpack.c.b16 %v637, %v636
        %v663 = vpack.c.b16 %v639, %v638
        %v664 = vpack.c.b16 %v641, %v640
        %v665 = vpack.c.b16 %v643, %v642
        %v666 = vpack.c.b16 %v645, %v644
        %v667 = vpack.c.b16 %v647, %v646
        %v668 = vpack.c.b16 %v649, %v648
        %v669 = vpack.c.b16 %v650, %v650
        %vm670 = vsmask.f32 7424
        %v672 = vshrl.u32 %v651, 16
        %v674 = vshll.u32 %v651, 16
        %v676 = vrot.slane %v674, 1
        %v677 = vor.u32 %v672, %v676
        %v679 = vshll.u32 %v652, 16
        %v681 = vrot.slane %v679, 1
        %v682 = vsel %vm670, %v677, %v681
        %v683 = vshrl.u32 %v652, 16
        %v685 = vor.u32 %v683, %v681
        %v687 = vshll.u32 %v653, 16
        %v689 = vrot.slane %v687, 1
        %v690 = vsel %vm670, %v685, %v689
        %v691 = vshrl.u32 %v653, 16
        %v693 = vor.u32 %v691, %v689
        %v695 = vshll.u32 %v654, 16
        %v697 = vrot.slane %v695, 1
        %v698 = vsel %vm670, %v693, %v697
        %v699 = vshrl.u32 %v654, 16
        %v701 = vor.u32 %v699, %v697
        %v703 = vshll.u32 %v655, 16
        %v705 = vrot.slane %v703, 1
        %v706 = vsel %vm670, %v701, %v705
        %v707 = vshrl.u32 %v655, 16
        %v709 = vor.u32 %v707, %v705
        %v711 = vshll.u32 %v656, 16
        %v713 = vrot.slane %v711, 1
        %v714 = vsel %vm670, %v709, %v713
        %v715 = vshrl.u32 %v656, 16
        %v717 = vor.u32 %v715, %v713
        %v719 = vshll.u32 %v657, 16
        %v721 = vrot.slane %v719, 1
        %v722 = vsel %vm670, %v717, %v721
        %v723 = vshrl.u32 %v657, 16
        %v725 = vor.u32 %v723, %v721
        %v727 = vshll.u32 %v658, 16
        %v729 = vrot.slane %v727, 1
        %v730 = vsel %vm670, %v725, %v729
        %v731 = vshrl.u32 %v658, 16
        %v733 = vor.u32 %v731, %v729
        %v735 = vshll.u32 %v659, 16
        %v737 = vrot.slane %v735, 1
        %v738 = vsel %vm670, %v733, %v737
        %v739 = vshrl.u32 %v659, 16
        %v741 = vor.u32 %v739, %v737
        %v743 = vshll.u32 %v660, 16
        %v745 = vrot.slane %v743, 1
        %v746 = vsel %vm670, %v741, %v745
        %v747 = vshrl.u32 %v660, 16
        %v749 = vor.u32 %v747, %v745
        %v751 = vshll.u32 %v661, 16
        %v753 = vrot.slane %v751, 1
        %v754 = vsel %vm670, %v749, %v753
        %v755 = vshrl.u32 %v661, 16
        %v757 = vor.u32 %v755, %v753
        %v759 = vshll.u32 %v662, 16
        %v761 = vrot.slane %v759, 1
        %v762 = vsel %vm670, %v757, %v761
        %v763 = vshrl.u32 %v662, 16
        %v765 = vor.u32 %v763, %v761
        %v767 = vshll.u32 %v663, 16
        %v769 = vrot.slane %v767, 1
        %v770 = vsel %vm670, %v765, %v769
        %v771 = vshrl.u32 %v663, 16
        %v773 = vor.u32 %v771, %v769
        %v775 = vshll.u32 %v664, 16
        %v777 = vrot.slane %v775, 1
        %v778 = vsel %vm670, %v773, %v777
        %v779 = vshrl.u32 %v664, 16
        %v781 = vor.u32 %v779, %v777
        %v783 = vshll.u32 %v665, 16
        %v785 = vrot.slane %v783, 1
        %v786 = vsel %vm670, %v781, %v785
        %v787 = vshrl.u32 %v665, 16
        %v789 = vor.u32 %v787, %v785
        %v791 = vshll.u32 %v666, 16
        %v793 = vrot.slane %v791, 1
        %v794 = vsel %vm670, %v789, %v793
        %v795 = vshrl.u32 %v666, 16
        %v797 = vor.u32 %v795, %v793
        %v799 = vshll.u32 %v667, 16
        %v801 = vrot.slane %v799, 1
        %v802 = vsel %vm670, %v797, %v801
        %v803 = vshrl.u32 %v667, 16
        %v805 = vor.u32 %v803, %v801
        %v807 = vshll.u32 %v668, 16
        %v809 = vrot.slane %v807, 1
        %v810 = vsel %vm670, %v805, %v809
        %v811 = vshrl.u32 %v668, 16
        %v813 = vor.u32 %v811, %v809
        %v815 = vshll.u32 %v669, 16
        %v817 = vrot.slane %v815, 1
        %v818 = vsel %vm670, %v813, %v817
        %v820 = vsel %vm344, %v682, 0
        %v823 = vsel %vm344, %v690, 0
        %v826 = vsel %vm344, %v698, 0
        %v829 = vsel %vm344, %v706, 0
        %v832 = vsel %vm344, %v714, 0
        %v835 = vsel %vm344, %v722, 0
        %v838 = vsel %vm344, %v730, 0
        %v841 = vsel %vm344, %v738, 0
        %v844 = vsel %vm344, %v746, 0
        %v847 = vsel %vm344, %v754, 0
        %v850 = vsel %vm344, %v762, 0
        %v853 = vsel %vm344, %v770, 0
        %v856 = vsel %vm344, %v778, 0
        %v859 = vsel %vm344, %v786, 0
        %v862 = vsel %vm344, %v794, 0
        %v865 = vsel %vm344, %v802, 0
        %v868 = vsel %vm344, %v810, 0
        %v871 = vsel %vm344, %v818, 0
        %v874 = vsel %vm399, %v576, 0
        %876 = vmatpush.bf16.msra.mxu0 0
        %877 = vmatpush.bf16.msra.mxu0 0
        %878 = vmatpush.bf16.msra.mxu0 0
        %879 = vmatpush.bf16.msra.mxu0 0
        %880 = vmatpush.bf16.msra.mxu0 0
        %881 = vmatpush.bf16.msra.mxu0 0
        %882 = vmatpush.bf16.msra.mxu0 0
        %883 = vmatpush.bf16.msra.mxu0 %v874
        %884 = vmatmul.bf16.gmra.mxu0 %v820
        %v885 = vpop.f32.mrf.mxu0
        %v886 = vadd.f32 0.0, %v885
        %v887 = vpop.f32.mrf.mxu0
        %v888 = vadd.f32 0.0, %v887
        %889 = vmatmul.bf16.gmra.mxu0 %v823
        %v890 = vpop.f32.mrf.mxu0
        %v891 = vadd.f32 0.0, %v890
        %v892 = vpop.f32.mrf.mxu0
        %v893 = vadd.f32 0.0, %v892
        %894 = vmatmul.bf16.gmra.mxu0 %v826
        %v895 = vpop.f32.mrf.mxu0
        %v896 = vadd.f32 0.0, %v895
        %v897 = vpop.f32.mrf.mxu0
        %v898 = vadd.f32 0.0, %v897
        %899 = vmatmul.bf16.gmra.mxu0 %v829
        %v900 = vpop.f32.mrf.mxu0
        %v901 = vadd.f32 0.0, %v900
        %v902 = vpop.f32.mrf.mxu0
        %v903 = vadd.f32 0.0, %v902
        %904 = vmatmul.bf16.gmra.mxu0 %v832
        %v905 = vpop.f32.mrf.mxu0
        %v906 = vadd.f32 0.0, %v905
        %v907 = vpop.f32.mrf.mxu0
        %v908 = vadd.f32 0.0, %v907
        %909 = vmatmul.bf16.gmra.mxu0 %v835
        %v910 = vpop.f32.mrf.mxu0
        %v911 = vadd.f32 0.0, %v910
        %v912 = vpop.f32.mrf.mxu0
        %v913 = vadd.f32 0.0, %v912
        %914 = vmatmul.bf16.gmra.mxu0 %v838
        %v915 = vpop.f32.mrf.mxu0
        %v916 = vadd.f32 0.0, %v915
        %v917 = vpop.f32.mrf.mxu0
        %v918 = vadd.f32 0.0, %v917
        %919 = vmatmul.bf16.gmra.mxu0 %v841
        %v920 = vpop.f32.mrf.mxu0
        %v921 = vadd.f32 0.0, %v920
        %v922 = vpop.f32.mrf.mxu0
        %v923 = vadd.f32 0.0, %v922
        %924 = vmatmul.bf16.gmra.mxu0 %v844
        %v925 = vpop.f32.mrf.mxu0
        %v926 = vadd.f32 0.0, %v925
        %v927 = vpop.f32.mrf.mxu0
        %v928 = vadd.f32 0.0, %v927
        %929 = vmatmul.bf16.gmra.mxu0 %v847
        %v930 = vpop.f32.mrf.mxu0
        %v931 = vadd.f32 0.0, %v930
        %v932 = vpop.f32.mrf.mxu0
        %v933 = vadd.f32 0.0, %v932
        %934 = vmatmul.bf16.gmra.mxu0 %v850
        %v935 = vpop.f32.mrf.mxu0
        %v936 = vadd.f32 0.0, %v935
        %v937 = vpop.f32.mrf.mxu0
        %v938 = vadd.f32 0.0, %v937
        %939 = vmatmul.bf16.gmra.mxu0 %v853
        %v940 = vpop.f32.mrf.mxu0
        %v941 = vadd.f32 0.0, %v940
        %v942 = vpop.f32.mrf.mxu0
        %v943 = vadd.f32 0.0, %v942
        %944 = vmatmul.bf16.gmra.mxu0 %v856
        %v945 = vpop.f32.mrf.mxu0
        %v946 = vadd.f32 0.0, %v945
        %v947 = vpop.f32.mrf.mxu0
        %v948 = vadd.f32 0.0, %v947
        %949 = vmatmul.bf16.gmra.mxu0 %v859
        %v950 = vpop.f32.mrf.mxu0
        %v951 = vadd.f32 0.0, %v950
        %v952 = vpop.f32.mrf.mxu0
        %v953 = vadd.f32 0.0, %v952
        %954 = vmatmul.bf16.gmra.mxu0 %v862
        %v955 = vpop.f32.mrf.mxu0
        %v956 = vadd.f32 0.0, %v955
        %v957 = vpop.f32.mrf.mxu0
        %v958 = vadd.f32 0.0, %v957
        %959 = vmatmul.bf16.gmra.mxu0 %v865
        %v960 = vpop.f32.mrf.mxu0
        %v961 = vadd.f32 0.0, %v960
        %v962 = vpop.f32.mrf.mxu0
        %v963 = vadd.f32 0.0, %v962
        %964 = vmatmul.bf16.gmra.mxu0 %v868
        %v965 = vpop.f32.mrf.mxu0
        %v966 = vadd.f32 0.0, %v965
        %v967 = vpop.f32.mrf.mxu0
        %v968 = vadd.f32 0.0, %v967
        %969 = vmatmul.bf16.gmra.mxu0 %v871
        %v970 = vpop.f32.mrf.mxu0
        %v971 = vadd.f32 0.0, %v970
        %v972 = vpop.f32.mrf.mxu0
        %v973 = vadd.f32 0.0, %v972
        %974 = vdwg.mxu0
        %v975 = vld [vmem:[%s205] sm:$0xff]
        %v976 = vld [vmem:[%s205 + $0x8] sm:$0xff]
        %v977 = vld [vmem:[%s205 + $0x10] sm:$0xff]
        %v978 = vld [vmem:[%s205 + $0x18] sm:$0xff]
        %v979 = vld [vmem:[%s205 + $0x20] sm:$0xff]
        %v980 = vld [vmem:[%s205 + $0x28] sm:$0xff]
        %v981 = vld [vmem:[%s205 + $0x30] sm:$0xff]
        %v982 = vld [vmem:[%s205 + $0x38] sm:$0xff]
        %v983 = vld [vmem:[%s205 + $0x40] sm:$0xff]
        %v984 = vld [vmem:[%s205 + $0x48] sm:$0xff]
        %v985 = vld [vmem:[%s205 + $0x50] sm:$0xff]
        %v986 = vld [vmem:[%s205 + $0x58] sm:$0xff]
        %v987 = vld [vmem:[%s205 + $0x60] sm:$0xff]
        %v988 = vld [vmem:[%s205 + $0x68] sm:$0xff]
        %v989 = vld [vmem:[%s205 + $0x70] sm:$0xff]
        %v990 = vld [vmem:[%s205 + $0x78] sm:$0xff]
        %v991 = vld [vmem:[%s205 + $0x80] sm:$0xff]
        %v992 = vld [vmem:[%s205 + $0x88] sm:$0xff]
        %v993 = vld [vmem:[%s205 + $0x90] sm:$0xff]
        %v994 = vld [vmem:[%s205 + $0x98] sm:$0xff]
        %v995 = vld [vmem:[%s205 + $0xa0] sm:$0xff]
        %v996 = vld [vmem:[%s205 + $0xa8] sm:$0xff]
        %v997 = vld [vmem:[%s205 + $0xb0] sm:$0xff]
        %v998 = vld [vmem:[%s205 + $0xb8] sm:$0xff]
        %v999 = vld [vmem:[%s205 + $0xc0] sm:$0xff]
        %v1000 = vld [vmem:[%s205 + $0xc8] sm:$0xff]
        %v1001 = vld [vmem:[%s205 + $0xd0] sm:$0xff]
        %v1002 = vld [vmem:[%s205 + $0xd8] sm:$0xff]
        %v1003 = vld [vmem:[%s205 + $0xe0] sm:$0xff]
        %v1004 = vld [vmem:[%s205 + $0xe8] sm:$0xff]
        %v1005 = vld [vmem:[%s205 + $0xf0] sm:$0xff]
        %v1006 = vld [vmem:[%s205 + $0xf8] sm:$0xff]
        %v1007 = vld [vmem:[%s205 + $0x100] sm:$0xff]
        %v1008 = vld [vmem:[%s205 + $0x108] sm:$0xff]
        %v1009 = vld [vmem:[%s205 + $0x110] sm:$0xff]
        %v1010 = vld [vmem:[%s205 + $0x118] sm:$0xff]
        %v1011 = vadd.f32 %v975, %v886
        %v1012 = vadd.f32 %v976, %v888
        %v1013 = vadd.f32 %v977, %v891
        %v1014 = vadd.f32 %v978, %v893
        %v1015 = vadd.f32 %v979, %v896
        %v1016 = vadd.f32 %v980, %v898
        %v1017 = vadd.f32 %v981, %v901
        %v1018 = vadd.f32 %v982, %v903
        %v1019 = vadd.f32 %v983, %v906
        %v1020 = vadd.f32 %v984, %v908
        %v1021 = vadd.f32 %v985, %v911
        %v1022 = vadd.f32 %v986, %v913
        %v1023 = vadd.f32 %v987, %v916
        %v1024 = vadd.f32 %v988, %v918
        %v1025 = vadd.f32 %v989, %v921
        %v1026 = vadd.f32 %v990, %v923
        %v1027 = vadd.f32 %v991, %v926
        %v1028 = vadd.f32 %v992, %v928
        %v1029 = vadd.f32 %v993, %v931
        %v1030 = vadd.f32 %v994, %v933
        %v1031 = vadd.f32 %v995, %v936
        %v1032 = vadd.f32 %v996, %v938
        %v1033 = vadd.f32 %v997, %v941
        %v1034 = vadd.f32 %v998, %v943
        %v1035 = vadd.f32 %v999, %v946
        %v1036 = vadd.f32 %v1000, %v948
        %v1037 = vadd.f32 %v1001, %v951
        %v1038 = vadd.f32 %v1002, %v953
        %v1039 = vadd.f32 %v1003, %v956
        %v1040 = vadd.f32 %v1004, %v958
        %v1041 = vadd.f32 %v1005, %v961
        %v1042 = vadd.f32 %v1006, %v963
        %v1043 = vadd.f32 %v1007, %v966
        %v1044 = vadd.f32 %v1008, %v968
        %v1045 = vadd.f32 %v1009, %v971
        %v1046 = vadd.f32 %v1010, %v973
        %1047 = vst [vmem:[%s205] sm:$0xff] %v1011
        %1048 = vst [vmem:[%s205 + $0x8] sm:$0xff] %v1012
        %1049 = vst [vmem:[%s205 + $0x10] sm:$0xff] %v1013
        %1050 = vst [vmem:[%s205 + $0x18] sm:$0xff] %v1014
        %1051 = vst [vmem:[%s205 + $0x20] sm:$0xff] %v1015
        %1052 = vst [vmem:[%s205 + $0x28] sm:$0xff] %v1016
        %1053 = vst [vmem:[%s205 + $0x30] sm:$0xff] %v1017
        %1054 = vst [vmem:[%s205 + $0x38] sm:$0xff] %v1018
        %1055 = vst [vmem:[%s205 + $0x40] sm:$0xff] %v1019
        %1056 = vst [vmem:[%s205 + $0x48] sm:$0xff] %v1020
        %1057 = vst [vmem:[%s205 + $0x50] sm:$0xff] %v1021
        %1058 = vst [vmem:[%s205 + $0x58] sm:$0xff] %v1022
        %1059 = vst [vmem:[%s205 + $0x60] sm:$0xff] %v1023
        %1060 = vst [vmem:[%s205 + $0x68] sm:$0xff] %v1024
        %1061 = vst [vmem:[%s205 + $0x70] sm:$0xff] %v1025
        %1062 = vst [vmem:[%s205 + $0x78] sm:$0xff] %v1026
        %1063 = vst [vmem:[%s205 + $0x80] sm:$0xff] %v1027
        %1064 = vst [vmem:[%s205 + $0x88] sm:$0xff] %v1028
        %1065 = vst [vmem:[%s205 + $0x90] sm:$0xff] %v1029
        %1066 = vst [vmem:[%s205 + $0x98] sm:$0xff] %v1030
        %1067 = vst [vmem:[%s205 + $0xa0] sm:$0xff] %v1031
        %1068 = vst [vmem:[%s205 + $0xa8] sm:$0xff] %v1032
        %1069 = vst [vmem:[%s205 + $0xb0] sm:$0xff] %v1033
        %1070 = vst [vmem:[%s205 + $0xb8] sm:$0xff] %v1034
        %1071 = vst [vmem:[%s205 + $0xc0] sm:$0xff] %v1035
        %1072 = vst [vmem:[%s205 + $0xc8] sm:$0xff] %v1036
        %1073 = vst [vmem:[%s205 + $0xd0] sm:$0xff] %v1037
        %1074 = vst [vmem:[%s205 + $0xd8] sm:$0xff] %v1038
        %1075 = vst [vmem:[%s205 + $0xe0] sm:$0xff] %v1039
        %1076 = vst [vmem:[%s205 + $0xe8] sm:$0xff] %v1040
        %1077 = vst [vmem:[%s205 + $0xf0] sm:$0xff] %v1041
        %1078 = vst [vmem:[%s205 + $0xf8] sm:$0xff] %v1042
        %1079 = vst [vmem:[%s205 + $0x100] sm:$0xff] %v1043
        %1080 = vst [vmem:[%s205 + $0x108] sm:$0xff] %v1044
        %1081 = vst [vmem:[%s205 + $0x110] sm:$0xff] %v1045
        %1082 = vst [vmem:[%s205 + $0x118] sm:$0xff] %v1046
        %v1083 = vld [vmem:[%s210] sm:$0xe]
        %v1084 = vld [vmem:[%s210 + $0x4] sm:$0xf]
        %v1085 = vld [vmem:[%s210 + $0x8] sm:$0xf]
        %v1086 = vld [vmem:[%s210 + $0xc] sm:$0xf]
        %v1087 = vld [vmem:[%s210 + $0x10] sm:$0xf]
        %v1088 = vld [vmem:[%s210 + $0x14] sm:$0xf]
        %v1089 = vld [vmem:[%s210 + $0x18] sm:$0xf]
        %v1090 = vld [vmem:[%s210 + $0x1c] sm:$0xf]
        %v1091 = vld [vmem:[%s210 + $0x20] sm:$0xf]
        %v1092 = vld [vmem:[%s210 + $0x24] sm:$0xf]
        %v1093 = vld [vmem:[%s210 + $0x28] sm:$0xf]
        %v1094 = vld [vmem:[%s210 + $0x2c] sm:$0xf]
        %v1095 = vld [vmem:[%s210 + $0x30] sm:$0xf]
        %v1096 = vld [vmem:[%s210 + $0x34] sm:$0xf]
        %v1097 = vld [vmem:[%s210 + $0x38] sm:$0xf]
        %v1098 = vld [vmem:[%s210 + $0x3c] sm:$0xf]
        %v1099 = vld [vmem:[%s210 + $0x40] sm:$0xf]
        %v1100 = vld [vmem:[%s210 + $0x44] sm:$0xf]
        %v1101 = vld [vmem:[%s210 + $0x48] sm:$0xf]
        %v1102 = vld [vmem:[%s210 + $0x4c] sm:$0xf]
        %v1103 = vld [vmem:[%s210 + $0x50] sm:$0xf]
        %v1104 = vld [vmem:[%s210 + $0x54] sm:$0xf]
        %v1105 = vld [vmem:[%s210 + $0x58] sm:$0xf]
        %v1106 = vld [vmem:[%s210 + $0x5c] sm:$0xf]
        %v1107 = vld [vmem:[%s210 + $0x60] sm:$0xf]
        %v1108 = vld [vmem:[%s210 + $0x64] sm:$0xf]
        %v1109 = vld [vmem:[%s210 + $0x68] sm:$0xf]
        %v1110 = vld [vmem:[%s210 + $0x6c] sm:$0xf]
        %v1111 = vld [vmem:[%s210 + $0x70] sm:$0xf]
        %v1112 = vld [vmem:[%s210 + $0x74] sm:$0xf]
        %v1113 = vld [vmem:[%s210 + $0x78] sm:$0xf]
        %v1114 = vld [vmem:[%s210 + $0x7c] sm:$0xf]
        %v1115 = vld [vmem:[%s210 + $0x80] sm:$0xf]
        %v1116 = vld [vmem:[%s210 + $0x84] sm:$0xf]
        %v1117 = vld [vmem:[%s210 + $0x88] sm:$0xf]
        %v1118 = vld [vmem:[%s210 + $0x8c] sm:$0xf]
        %v1119 = vld [vmem:[%s210 + $0x90] sm:$0x1]
        %s1120 = scalar_lea.vmem %s2, 8
        %v1121 = vld [vmem:[%s1120] sm:$0xf]
        %v1159 = vunpack.c.l.b16 %v1083
        %v1160 = vunpack.c.l.b16 %v1084
        %v1161 = vunpack.c.l.b16 %v1085
        %v1162 = vunpack.c.l.b16 %v1086
        %v1163 = vunpack.c.l.b16 %v1087
        %v1164 = vunpack.c.l.b16 %v1088
        %v1165 = vunpack.c.l.b16 %v1089
        %v1166 = vunpack.c.l.b16 %v1090
        %v1167 = vunpack.c.l.b16 %v1091
        %v1168 = vunpack.c.l.b16 %v1092
        %v1169 = vunpack.c.l.b16 %v1093
        %v1170 = vunpack.c.l.b16 %v1094
        %v1171 = vunpack.c.l.b16 %v1095
        %v1172 = vunpack.c.l.b16 %v1096
        %v1173 = vunpack.c.l.b16 %v1097
        %v1174 = vunpack.c.l.b16 %v1098
        %v1175 = vunpack.c.l.b16 %v1099
        %v1176 = vunpack.c.l.b16 %v1100
        %v1177 = vunpack.c.l.b16 %v1101
        %v1178 = vunpack.c.l.b16 %v1102
        %v1179 = vunpack.c.l.b16 %v1103
        %v1180 = vunpack.c.l.b16 %v1104
        %v1181 = vunpack.c.l.b16 %v1105
        %v1182 = vunpack.c.l.b16 %v1106
        %v1183 = vunpack.c.l.b16 %v1107
        %v1184 = vunpack.c.l.b16 %v1108
        %v1185 = vunpack.c.l.b16 %v1109
        %v1186 = vunpack.c.l.b16 %v1110
        %v1187 = vunpack.c.l.b16 %v1111
        %v1188 = vunpack.c.l.b16 %v1112
        %v1189 = vunpack.c.l.b16 %v1113
        %v1190 = vunpack.c.l.b16 %v1114
        %v1191 = vunpack.c.l.b16 %v1115
        %v1192 = vunpack.c.l.b16 %v1116
        %v1193 = vunpack.c.l.b16 %v1117
        %v1194 = vunpack.c.l.b16 %v1118
        %v1195 = vunpack.c.l.b16 %v1119
        %v1196 = vpack.c.b16 %v1160, %v1159
        %v1197 = vpack.c.b16 %v1162, %v1161
        %v1198 = vpack.c.b16 %v1164, %v1163
        %v1199 = vpack.c.b16 %v1166, %v1165
        %v1200 = vpack.c.b16 %v1168, %v1167
        %v1201 = vpack.c.b16 %v1170, %v1169
        %v1202 = vpack.c.b16 %v1172, %v1171
        %v1203 = vpack.c.b16 %v1174, %v1173
        %v1204 = vpack.c.b16 %v1176, %v1175
        %v1205 = vpack.c.b16 %v1178, %v1177
        %v1206 = vpack.c.b16 %v1180, %v1179
        %v1207 = vpack.c.b16 %v1182, %v1181
        %v1208 = vpack.c.b16 %v1184, %v1183
        %v1209 = vpack.c.b16 %v1186, %v1185
        %v1210 = vpack.c.b16 %v1188, %v1187
        %v1211 = vpack.c.b16 %v1190, %v1189
        %v1212 = vpack.c.b16 %v1192, %v1191
        %v1213 = vpack.c.b16 %v1194, %v1193
        %v1214 = vpack.c.b16 %v1195, %v1195
        %vm1215 = vcmask 1046528
        %v1216 = vrot.slane %v1196, 1
        %v1217 = vrot.slane %v1197, 1
        %v1218 = vsel %vm1215, %v1216, %v1217
        %v1219 = vrot.slane %v1198, 1
        %v1220 = vsel %vm1215, %v1217, %v1219
        %v1221 = vrot.slane %v1199, 1
        %v1222 = vsel %vm1215, %v1219, %v1221
        %v1223 = vrot.slane %v1200, 1
        %v1224 = vsel %vm1215, %v1221, %v1223
        %v1225 = vrot.slane %v1201, 1
        %v1226 = vsel %vm1215, %v1223, %v1225
        %v1227 = vrot.slane %v1202, 1
        %v1228 = vsel %vm1215, %v1225, %v1227
        %v1229 = vrot.slane %v1203, 1
        %v1230 = vsel %vm1215, %v1227, %v1229
        %v1231 = vrot.slane %v1204, 1
        %v1232 = vsel %vm1215, %v1229, %v1231
        %v1233 = vrot.slane %v1205, 1
        %v1234 = vsel %vm1215, %v1231, %v1233
        %v1235 = vrot.slane %v1206, 1
        %v1236 = vsel %vm1215, %v1233, %v1235
        %v1237 = vrot.slane %v1207, 1
        %v1238 = vsel %vm1215, %v1235, %v1237
        %v1239 = vrot.slane %v1208, 1
        %v1240 = vsel %vm1215, %v1237, %v1239
        %v1241 = vrot.slane %v1209, 1
        %v1242 = vsel %vm1215, %v1239, %v1241
        %v1243 = vrot.slane %v1210, 1
        %v1244 = vsel %vm1215, %v1241, %v1243
        %v1245 = vrot.slane %v1211, 1
        %v1246 = vsel %vm1215, %v1243, %v1245
        %v1247 = vrot.slane %v1212, 1
        %v1248 = vsel %vm1215, %v1245, %v1247
        %v1249 = vrot.slane %v1213, 1
        %v1250 = vsel %vm1215, %v1247, %v1249
        %v1251 = vrot.slane %v1214, 1
        %v1252 = vsel %vm1215, %v1249, %v1251
        %v1254 = vsel %vm344, %v1218, 0
        %v1257 = vsel %vm344, %v1220, 0
        %v1260 = vsel %vm344, %v1222, 0
        %v1263 = vsel %vm344, %v1224, 0
        %v1266 = vsel %vm344, %v1226, 0
        %v1269 = vsel %vm344, %v1228, 0
        %v1272 = vsel %vm344, %v1230, 0
        %v1275 = vsel %vm344, %v1232, 0
        %v1278 = vsel %vm344, %v1234, 0
        %v1281 = vsel %vm344, %v1236, 0
        %v1284 = vsel %vm344, %v1238, 0
        %v1287 = vsel %vm344, %v1240, 0
        %v1290 = vsel %vm344, %v1242, 0
        %v1293 = vsel %vm344, %v1244, 0
        %v1296 = vsel %vm344, %v1246, 0
        %v1299 = vsel %vm344, %v1248, 0
        %v1302 = vsel %vm344, %v1250, 0
        %v1305 = vsel %vm344, %v1252, 0
        %v1308 = vsel %vm399, %v1121, 0
        %1310 = vmatpush.bf16.msra.mxu0 0
        %1311 = vmatpush.bf16.msra.mxu0 0
        %1312 = vmatpush.bf16.msra.mxu0 0
        %1313 = vmatpush.bf16.msra.mxu0 0
        %1314 = vmatpush.bf16.msra.mxu0 0
        %1315 = vmatpush.bf16.msra.mxu0 0
        %1316 = vmatpush.bf16.msra.mxu0 0
        %1317 = vmatpush.bf16.msra.mxu0 %v1308
        %1318 = vmatmul.bf16.gmra.mxu0 %v1254
        %v1319 = vpop.f32.mrf.mxu0
        %v1320 = vadd.f32 0.0, %v1319
        %v1321 = vpop.f32.mrf.mxu0
        %v1322 = vadd.f32 0.0, %v1321
        %1323 = vmatmul.bf16.gmra.mxu0 %v1257
        %v1324 = vpop.f32.mrf.mxu0
        %v1325 = vadd.f32 0.0, %v1324
        %v1326 = vpop.f32.mrf.mxu0
        %v1327 = vadd.f32 0.0, %v1326
        %1328 = vmatmul.bf16.gmra.mxu0 %v1260
        %v1329 = vpop.f32.mrf.mxu0
        %v1330 = vadd.f32 0.0, %v1329
        %v1331 = vpop.f32.mrf.mxu0
        %v1332 = vadd.f32 0.0, %v1331
        %1333 = vmatmul.bf16.gmra.mxu0 %v1263
        %v1334 = vpop.f32.mrf.mxu0
        %v1335 = vadd.f32 0.0, %v1334
        %v1336 = vpop.f32.mrf.mxu0
        %v1337 = vadd.f32 0.0, %v1336
        %1338 = vmatmul.bf16.gmra.mxu0 %v1266
        %v1339 = vpop.f32.mrf.mxu0
        %v1340 = vadd.f32 0.0, %v1339
        %v1341 = vpop.f32.mrf.mxu0
        %v1342 = vadd.f32 0.0, %v1341
        %1343 = vmatmul.bf16.gmra.mxu0 %v1269
        %v1344 = vpop.f32.mrf.mxu0
        %v1345 = vadd.f32 0.0, %v1344
        %v1346 = vpop.f32.mrf.mxu0
        %v1347 = vadd.f32 0.0, %v1346
        %1348 = vmatmul.bf16.gmra.mxu0 %v1272
        %v1349 = vpop.f32.mrf.mxu0
        %v1350 = vadd.f32 0.0, %v1349
        %v1351 = vpop.f32.mrf.mxu0
        %v1352 = vadd.f32 0.0, %v1351
        %1353 = vmatmul.bf16.gmra.mxu0 %v1275
        %v1354 = vpop.f32.mrf.mxu0
        %v1355 = vadd.f32 0.0, %v1354
        %v1356 = vpop.f32.mrf.mxu0
        %v1357 = vadd.f32 0.0, %v1356
        %1358 = vmatmul.bf16.gmra.mxu0 %v1278
        %v1359 = vpop.f32.mrf.mxu0
        %v1360 = vadd.f32 0.0, %v1359
        %v1361 = vpop.f32.mrf.mxu0
        %v1362 = vadd.f32 0.0, %v1361
        %1363 = vmatmul.bf16.gmra.mxu0 %v1281
        %v1364 = vpop.f32.mrf.mxu0
        %v1365 = vadd.f32 0.0, %v1364
        %v1366 = vpop.f32.mrf.mxu0
        %v1367 = vadd.f32 0.0, %v1366
        %1368 = vmatmul.bf16.gmra.mxu0 %v1284
        %v1369 = vpop.f32.mrf.mxu0
        %v1370 = vadd.f32 0.0, %v1369
        %v1371 = vpop.f32.mrf.mxu0
        %v1372 = vadd.f32 0.0, %v1371
        %1373 = vmatmul.bf16.gmra.mxu0 %v1287
        %v1374 = vpop.f32.mrf.mxu0
        %v1375 = vadd.f32 0.0, %v1374
        %v1376 = vpop.f32.mrf.mxu0
        %v1377 = vadd.f32 0.0, %v1376
        %1378 = vmatmul.bf16.gmra.mxu0 %v1290
        %v1379 = vpop.f32.mrf.mxu0
        %v1380 = vadd.f32 0.0, %v1379
        %v1381 = vpop.f32.mrf.mxu0
        %v1382 = vadd.f32 0.0, %v1381
        %1383 = vmatmul.bf16.gmra.mxu0 %v1293
        %v1384 = vpop.f32.mrf.mxu0
        %v1385 = vadd.f32 0.0, %v1384
        %v1386 = vpop.f32.mrf.mxu0
        %v1387 = vadd.f32 0.0, %v1386
        %1388 = vmatmul.bf16.gmra.mxu0 %v1296
        %v1389 = vpop.f32.mrf.mxu0
        %v1390 = vadd.f32 0.0, %v1389
        %v1391 = vpop.f32.mrf.mxu0
        %v1392 = vadd.f32 0.0, %v1391
        %1393 = vmatmul.bf16.gmra.mxu0 %v1299
        %v1394 = vpop.f32.mrf.mxu0
        %v1395 = vadd.f32 0.0, %v1394
        %v1396 = vpop.f32.mrf.mxu0
        %v1397 = vadd.f32 0.0, %v1396
        %1398 = vmatmul.bf16.gmra.mxu0 %v1302
        %v1399 = vpop.f32.mrf.mxu0
        %v1400 = vadd.f32 0.0, %v1399
        %v1401 = vpop.f32.mrf.mxu0
        %v1402 = vadd.f32 0.0, %v1401
        %1403 = vmatmul.bf16.gmra.mxu0 %v1305
        %v1404 = vpop.f32.mrf.mxu0
        %v1405 = vadd.f32 0.0, %v1404
        %v1406 = vpop.f32.mrf.mxu0
        %v1407 = vadd.f32 0.0, %v1406
        %1408 = vdwg.mxu0
        %v1409 = vld [vmem:[%s205] sm:$0xff]
        %v1410 = vld [vmem:[%s205 + $0x8] sm:$0xff]
        %v1411 = vld [vmem:[%s205 + $0x10] sm:$0xff]
        %v1412 = vld [vmem:[%s205 + $0x18] sm:$0xff]
        %v1413 = vld [vmem:[%s205 + $0x20] sm:$0xff]
        %v1414 = vld [vmem:[%s205 + $0x28] sm:$0xff]
        %v1415 = vld [vmem:[%s205 + $0x30] sm:$0xff]
        %v1416 = vld [vmem:[%s205 + $0x38] sm:$0xff]
        %v1417 = vld [vmem:[%s205 + $0x40] sm:$0xff]
        %v1418 = vld [vmem:[%s205 + $0x48] sm:$0xff]
        %v1419 = vld [vmem:[%s205 + $0x50] sm:$0xff]
        %v1420 = vld [vmem:[%s205 + $0x58] sm:$0xff]
        %v1421 = vld [vmem:[%s205 + $0x60] sm:$0xff]
        %v1422 = vld [vmem:[%s205 + $0x68] sm:$0xff]
        %v1423 = vld [vmem:[%s205 + $0x70] sm:$0xff]
        %v1424 = vld [vmem:[%s205 + $0x78] sm:$0xff]
        %v1425 = vld [vmem:[%s205 + $0x80] sm:$0xff]
        %v1426 = vld [vmem:[%s205 + $0x88] sm:$0xff]
        %v1427 = vld [vmem:[%s205 + $0x90] sm:$0xff]
        %v1428 = vld [vmem:[%s205 + $0x98] sm:$0xff]
        %v1429 = vld [vmem:[%s205 + $0xa0] sm:$0xff]
        %v1430 = vld [vmem:[%s205 + $0xa8] sm:$0xff]
        %v1431 = vld [vmem:[%s205 + $0xb0] sm:$0xff]
        %v1432 = vld [vmem:[%s205 + $0xb8] sm:$0xff]
        %v1433 = vld [vmem:[%s205 + $0xc0] sm:$0xff]
        %v1434 = vld [vmem:[%s205 + $0xc8] sm:$0xff]
        %v1435 = vld [vmem:[%s205 + $0xd0] sm:$0xff]
        %v1436 = vld [vmem:[%s205 + $0xd8] sm:$0xff]
        %v1437 = vld [vmem:[%s205 + $0xe0] sm:$0xff]
        %v1438 = vld [vmem:[%s205 + $0xe8] sm:$0xff]
        %v1439 = vld [vmem:[%s205 + $0xf0] sm:$0xff]
        %v1440 = vld [vmem:[%s205 + $0xf8] sm:$0xff]
        %v1441 = vld [vmem:[%s205 + $0x100] sm:$0xff]
        %v1442 = vld [vmem:[%s205 + $0x108] sm:$0xff]
        %v1443 = vld [vmem:[%s205 + $0x110] sm:$0xff]
        %v1444 = vld [vmem:[%s205 + $0x118] sm:$0xff]
        %v1445 = vadd.f32 %v1409, %v1320
        %v1446 = vadd.f32 %v1410, %v1322
        %v1447 = vadd.f32 %v1411, %v1325
        %v1448 = vadd.f32 %v1412, %v1327
        %v1449 = vadd.f32 %v1413, %v1330
        %v1450 = vadd.f32 %v1414, %v1332
        %v1451 = vadd.f32 %v1415, %v1335
        %v1452 = vadd.f32 %v1416, %v1337
        %v1453 = vadd.f32 %v1417, %v1340
        %v1454 = vadd.f32 %v1418, %v1342
        %v1455 = vadd.f32 %v1419, %v1345
        %v1456 = vadd.f32 %v1420, %v1347
        %v1457 = vadd.f32 %v1421, %v1350
        %v1458 = vadd.f32 %v1422, %v1352
        %v1459 = vadd.f32 %v1423, %v1355
        %v1460 = vadd.f32 %v1424, %v1357
        %v1461 = vadd.f32 %v1425, %v1360
        %v1462 = vadd.f32 %v1426, %v1362
        %v1463 = vadd.f32 %v1427, %v1365
        %v1464 = vadd.f32 %v1428, %v1367
        %v1465 = vadd.f32 %v1429, %v1370
        %v1466 = vadd.f32 %v1430, %v1372
        %v1467 = vadd.f32 %v1431, %v1375
        %v1468 = vadd.f32 %v1432, %v1377
        %v1469 = vadd.f32 %v1433, %v1380
        %v1470 = vadd.f32 %v1434, %v1382
        %v1471 = vadd.f32 %v1435, %v1385
        %v1472 = vadd.f32 %v1436, %v1387
        %v1473 = vadd.f32 %v1437, %v1390
        %v1474 = vadd.f32 %v1438, %v1392
        %v1475 = vadd.f32 %v1439, %v1395
        %v1476 = vadd.f32 %v1440, %v1397
        %v1477 = vadd.f32 %v1441, %v1400
        %v1478 = vadd.f32 %v1442, %v1402
        %v1479 = vadd.f32 %v1443, %v1405
        %v1480 = vadd.f32 %v1444, %v1407
        %1481 = vst [vmem:[%s205] sm:$0xff] %v1445
        %1482 = vst [vmem:[%s205 + $0x8] sm:$0xff] %v1446
        %1483 = vst [vmem:[%s205 + $0x10] sm:$0xff] %v1447
        %1484 = vst [vmem:[%s205 + $0x18] sm:$0xff] %v1448
        %1485 = vst [vmem:[%s205 + $0x20] sm:$0xff] %v1449
        %1486 = vst [vmem:[%s205 + $0x28] sm:$0xff] %v1450
        %1487 = vst [vmem:[%s205 + $0x30] sm:$0xff] %v1451
        %1488 = vst [vmem:[%s205 + $0x38] sm:$0xff] %v1452
        %1489 = vst [vmem:[%s205 + $0x40] sm:$0xff] %v1453
        %1490 = vst [vmem:[%s205 + $0x48] sm:$0xff] %v1454
        %1491 = vst [vmem:[%s205 + $0x50] sm:$0xff] %v1455
        %1492 = vst [vmem:[%s205 + $0x58] sm:$0xff] %v1456
        %1493 = vst [vmem:[%s205 + $0x60] sm:$0xff] %v1457
        %1494 = vst [vmem:[%s205 + $0x68] sm:$0xff] %v1458
        %1495 = vst [vmem:[%s205 + $0x70] sm:$0xff] %v1459
        %1496 = vst [vmem:[%s205 + $0x78] sm:$0xff] %v1460
        %1497 = vst [vmem:[%s205 + $0x80] sm:$0xff] %v1461
        %1498 = vst [vmem:[%s205 + $0x88] sm:$0xff] %v1462
        %1499 = vst [vmem:[%s205 + $0x90] sm:$0xff] %v1463
        %1500 = vst [vmem:[%s205 + $0x98] sm:$0xff] %v1464
        %1501 = vst [vmem:[%s205 + $0xa0] sm:$0xff] %v1465
        %1502 = vst [vmem:[%s205 + $0xa8] sm:$0xff] %v1466
        %1503 = vst [vmem:[%s205 + $0xb0] sm:$0xff] %v1467
        %1504 = vst [vmem:[%s205 + $0xb8] sm:$0xff] %v1468
        %1505 = vst [vmem:[%s205 + $0xc0] sm:$0xff] %v1469
        %1506 = vst [vmem:[%s205 + $0xc8] sm:$0xff] %v1470
        %1507 = vst [vmem:[%s205 + $0xd0] sm:$0xff] %v1471
        %1508 = vst [vmem:[%s205 + $0xd8] sm:$0xff] %v1472
        %1509 = vst [vmem:[%s205 + $0xe0] sm:$0xff] %v1473
        %1510 = vst [vmem:[%s205 + $0xe8] sm:$0xff] %v1474
        %1511 = vst [vmem:[%s205 + $0xf0] sm:$0xff] %v1475
        %1512 = vst [vmem:[%s205 + $0xf8] sm:$0xff] %v1476
        %1513 = vst [vmem:[%s205 + $0x100] sm:$0xff] %v1477
        %1514 = vst [vmem:[%s205 + $0x108] sm:$0xff] %v1478
        %1515 = vst [vmem:[%s205 + $0x110] sm:$0xff] %v1479
        %1516 = vst [vmem:[%s205 + $0x118] sm:$0xff] %v1480
        %v1517 = vld [vmem:[%s210 + $0x8] sm:$0xe]
        %v1518 = vld [vmem:[%s210 + $0xc] sm:$0xf]
        %v1519 = vld [vmem:[%s210 + $0x10] sm:$0xf]
        %v1520 = vld [vmem:[%s210 + $0x14] sm:$0xf]
        %v1521 = vld [vmem:[%s210 + $0x18] sm:$0xf]
        %v1522 = vld [vmem:[%s210 + $0x1c] sm:$0xf]
        %v1523 = vld [vmem:[%s210 + $0x20] sm:$0xf]
        %v1524 = vld [vmem:[%s210 + $0x24] sm:$0xf]
        %v1525 = vld [vmem:[%s210 + $0x28] sm:$0xf]
        %v1526 = vld [vmem:[%s210 + $0x2c] sm:$0xf]
        %v1527 = vld [vmem:[%s210 + $0x30] sm:$0xf]
        %v1528 = vld [vmem:[%s210 + $0x34] sm:$0xf]
        %v1529 = vld [vmem:[%s210 + $0x38] sm:$0xf]
        %v1530 = vld [vmem:[%s210 + $0x3c] sm:$0xf]
        %v1531 = vld [vmem:[%s210 + $0x40] sm:$0xf]
        %v1532 = vld [vmem:[%s210 + $0x44] sm:$0xf]
        %v1533 = vld [vmem:[%s210 + $0x48] sm:$0xf]
        %v1534 = vld [vmem:[%s210 + $0x4c] sm:$0xf]
        %v1535 = vld [vmem:[%s210 + $0x50] sm:$0xf]
        %v1536 = vld [vmem:[%s210 + $0x54] sm:$0xf]
        %v1537 = vld [vmem:[%s210 + $0x58] sm:$0xf]
        %v1538 = vld [vmem:[%s210 + $0x5c] sm:$0xf]
        %v1539 = vld [vmem:[%s210 + $0x60] sm:$0xf]
        %v1540 = vld [vmem:[%s210 + $0x64] sm:$0xf]
        %v1541 = vld [vmem:[%s210 + $0x68] sm:$0xf]
        %v1542 = vld [vmem:[%s210 + $0x6c] sm:$0xf]
        %v1543 = vld [vmem:[%s210 + $0x70] sm:$0xf]
        %v1544 = vld [vmem:[%s210 + $0x74] sm:$0xf]
        %v1545 = vld [vmem:[%s210 + $0x78] sm:$0xf]
        %v1546 = vld [vmem:[%s210 + $0x7c] sm:$0xf]
        %v1547 = vld [vmem:[%s210 + $0x80] sm:$0xf]
        %v1548 = vld [vmem:[%s210 + $0x84] sm:$0xf]
        %v1549 = vld [vmem:[%s210 + $0x88] sm:$0xf]
        %v1550 = vld [vmem:[%s210 + $0x8c] sm:$0xf]
        %v1551 = vld [vmem:[%s210 + $0x90] sm:$0xf]
        %v1552 = vld [vmem:[%s210 + $0x94] sm:$0xf]
        %v1553 = vld [vmem:[%s210 + $0x98] sm:$0x1]
        %s1554 = scalar_lea.vmem %s2, 12
        %v1555 = vld [vmem:[%s1554] sm:$0xf]
        %v1593 = vunpack.c.l.b16 %v1517
        %v1594 = vunpack.c.l.b16 %v1518
        %v1595 = vunpack.c.l.b16 %v1519
        %v1596 = vunpack.c.l.b16 %v1520
        %v1597 = vunpack.c.l.b16 %v1521
        %v1598 = vunpack.c.l.b16 %v1522
        %v1599 = vunpack.c.l.b16 %v1523
        %v1600 = vunpack.c.l.b16 %v1524
        %v1601 = vunpack.c.l.b16 %v1525
        %v1602 = vunpack.c.l.b16 %v1526
        %v1603 = vunpack.c.l.b16 %v1527
        %v1604 = vunpack.c.l.b16 %v1528
        %v1605 = vunpack.c.l.b16 %v1529
        %v1606 = vunpack.c.l.b16 %v1530
        %v1607 = vunpack.c.l.b16 %v1531
        %v1608 = vunpack.c.l.b16 %v1532
        %v1609 = vunpack.c.l.b16 %v1533
        %v1610 = vunpack.c.l.b16 %v1534
        %v1611 = vunpack.c.l.b16 %v1535
        %v1612 = vunpack.c.l.b16 %v1536
        %v1613 = vunpack.c.l.b16 %v1537
        %v1614 = vunpack.c.l.b16 %v1538
        %v1615 = vunpack.c.l.b16 %v1539
        %v1616 = vunpack.c.l.b16 %v1540
        %v1617 = vunpack.c.l.b16 %v1541
        %v1618 = vunpack.c.l.b16 %v1542
        %v1619 = vunpack.c.l.b16 %v1543
        %v1620 = vunpack.c.l.b16 %v1544
        %v1621 = vunpack.c.l.b16 %v1545
        %v1622 = vunpack.c.l.b16 %v1546
        %v1623 = vunpack.c.l.b16 %v1547
        %v1624 = vunpack.c.l.b16 %v1548
        %v1625 = vunpack.c.l.b16 %v1549
        %v1626 = vunpack.c.l.b16 %v1550
        %v1627 = vunpack.c.l.b16 %v1551
        %v1628 = vunpack.c.l.b16 %v1552
        %v1629 = vunpack.c.l.b16 %v1553
        %v1630 = vpack.c.b16 %v1594, %v1593
        %v1631 = vpack.c.b16 %v1596, %v1595
        %v1632 = vpack.c.b16 %v1598, %v1597
        %v1633 = vpack.c.b16 %v1600, %v1599
        %v1634 = vpack.c.b16 %v1602, %v1601
        %v1635 = vpack.c.b16 %v1604, %v1603
        %v1636 = vpack.c.b16 %v1606, %v1605
        %v1637 = vpack.c.b16 %v1608, %v1607
        %v1638 = vpack.c.b16 %v1610, %v1609
        %v1639 = vpack.c.b16 %v1612, %v1611
        %v1640 = vpack.c.b16 %v1614, %v1613
        %v1641 = vpack.c.b16 %v1616, %v1615
        %v1642 = vpack.c.b16 %v1618, %v1617
        %v1643 = vpack.c.b16 %v1620, %v1619
        %v1644 = vpack.c.b16 %v1622, %v1621
        %v1645 = vpack.c.b16 %v1624, %v1623
        %v1646 = vpack.c.b16 %v1626, %v1625
        %v1647 = vpack.c.b16 %v1628, %v1627
        %v1648 = vpack.c.b16 %v1629, %v1629
        %v1649 = vrot.slane %v1630, 1
        %v1650 = vrot.slane %v1631, 1
        %v1651 = vsel %vm1215, %v1649, %v1650
        %v1652 = vrot.slane %v1632, 1
        %v1653 = vsel %vm1215, %v1650, %v1652
        %v1654 = vrot.slane %v1633, 1
        %v1655 = vsel %vm1215, %v1652, %v1654
        %v1656 = vrot.slane %v1634, 1
        %v1657 = vsel %vm1215, %v1654, %v1656
        %v1658 = vrot.slane %v1635, 1
        %v1659 = vsel %vm1215, %v1656, %v1658
        %v1660 = vrot.slane %v1636, 1
        %v1661 = vsel %vm1215, %v1658, %v1660
        %v1662 = vrot.slane %v1637, 1
        %v1663 = vsel %vm1215, %v1660, %v1662
        %v1664 = vrot.slane %v1638, 1
        %v1665 = vsel %vm1215, %v1662, %v1664
        %v1666 = vrot.slane %v1639, 1
        %v1667 = vsel %vm1215, %v1664, %v1666
        %v1668 = vrot.slane %v1640, 1
        %v1669 = vsel %vm1215, %v1666, %v1668
        %v1670 = vrot.slane %v1641, 1
        %v1671 = vsel %vm1215, %v1668, %v1670
        %v1672 = vrot.slane %v1642, 1
        %v1673 = vsel %vm1215, %v1670, %v1672
        %v1674 = vrot.slane %v1643, 1
        %v1675 = vsel %vm1215, %v1672, %v1674
        %v1676 = vrot.slane %v1644, 1
        %v1677 = vsel %vm1215, %v1674, %v1676
        %v1678 = vrot.slane %v1645, 1
        %v1679 = vsel %vm1215, %v1676, %v1678
        %v1680 = vrot.slane %v1646, 1
        %v1681 = vsel %vm1215, %v1678, %v1680
        %v1682 = vrot.slane %v1647, 1
        %v1683 = vsel %vm1215, %v1680, %v1682
        %v1684 = vrot.slane %v1648, 1
        %v1685 = vsel %vm1215, %v1682, %v1684
        %v1687 = vsel %vm344, %v1651, 0
        %v1690 = vsel %vm344, %v1653, 0
        %v1693 = vsel %vm344, %v1655, 0
        %v1696 = vsel %vm344, %v1657, 0
        %v1699 = vsel %vm344, %v1659, 0
        %v1702 = vsel %vm344, %v1661, 0
        %v1705 = vsel %vm344, %v1663, 0
        %v1708 = vsel %vm344, %v1665, 0
        %v1711 = vsel %vm344, %v1667, 0
        %v1714 = vsel %vm344, %v1669, 0
        %v1717 = vsel %vm344, %v1671, 0
        %v1720 = vsel %vm344, %v1673, 0
        %v1723 = vsel %vm344, %v1675, 0
        %v1726 = vsel %vm344, %v1677, 0
        %v1729 = vsel %vm344, %v1679, 0
        %v1732 = vsel %vm344, %v1681, 0
        %v1735 = vsel %vm344, %v1683, 0
        %v1738 = vsel %vm344, %v1685, 0
        %v1741 = vsel %vm399, %v1555, 0
        %1743 = vmatpush.bf16.msra.mxu0 0
        %1744 = vmatpush.bf16.msra.mxu0 0
        %1745 = vmatpush.bf16.msra.mxu0 0
        %1746 = vmatpush.bf16.msra.mxu0 0
        %1747 = vmatpush.bf16.msra.mxu0 0
        %1748 = vmatpush.bf16.msra.mxu0 0
        %1749 = vmatpush.bf16.msra.mxu0 0
        %1750 = vmatpush.bf16.msra.mxu0 %v1741
        %1751 = vmatmul.bf16.gmra.mxu0 %v1687
        %v1752 = vpop.f32.mrf.mxu0
        %v1753 = vadd.f32 0.0, %v1752
        %v1754 = vpop.f32.mrf.mxu0
        %v1755 = vadd.f32 0.0, %v1754
        %1756 = vmatmul.bf16.gmra.mxu0 %v1690
        %v1757 = vpop.f32.mrf.mxu0
        %v1758 = vadd.f32 0.0, %v1757
        %v1759 = vpop.f32.mrf.mxu0
        %v1760 = vadd.f32 0.0, %v1759
        %1761 = vmatmul.bf16.gmra.mxu0 %v1693
        %v1762 = vpop.f32.mrf.mxu0
        %v1763 = vadd.f32 0.0, %v1762
        %v1764 = vpop.f32.mrf.mxu0
        %v1765 = vadd.f32 0.0, %v1764
        %1766 = vmatmul.bf16.gmra.mxu0 %v1696
        %v1767 = vpop.f32.mrf.mxu0
        %v1768 = vadd.f32 0.0, %v1767
        %v1769 = vpop.f32.mrf.mxu0
        %v1770 = vadd.f32 0.0, %v1769
        %1771 = vmatmul.bf16.gmra.mxu0 %v1699
        %v1772 = vpop.f32.mrf.mxu0
        %v1773 = vadd.f32 0.0, %v1772
        %v1774 = vpop.f32.mrf.mxu0
        %v1775 = vadd.f32 0.0, %v1774
        %1776 = vmatmul.bf16.gmra.mxu0 %v1702
        %v1777 = vpop.f32.mrf.mxu0
        %v1778 = vadd.f32 0.0, %v1777
        %v1779 = vpop.f32.mrf.mxu0
        %v1780 = vadd.f32 0.0, %v1779
        %1781 = vmatmul.bf16.gmra.mxu0 %v1705
        %v1782 = vpop.f32.mrf.mxu0
        %v1783 = vadd.f32 0.0, %v1782
        %v1784 = vpop.f32.mrf.mxu0
        %v1785 = vadd.f32 0.0, %v1784
        %1786 = vmatmul.bf16.gmra.mxu0 %v1708
        %v1787 = vpop.f32.mrf.mxu0
        %v1788 = vadd.f32 0.0, %v1787
        %v1789 = vpop.f32.mrf.mxu0
        %v1790 = vadd.f32 0.0, %v1789
        %1791 = vmatmul.bf16.gmra.mxu0 %v1711
        %v1792 = vpop.f32.mrf.mxu0
        %v1793 = vadd.f32 0.0, %v1792
        %v1794 = vpop.f32.mrf.mxu0
        %v1795 = vadd.f32 0.0, %v1794
        %1796 = vmatmul.bf16.gmra.mxu0 %v1714
        %v1797 = vpop.f32.mrf.mxu0
        %v1798 = vadd.f32 0.0, %v1797
        %v1799 = vpop.f32.mrf.mxu0
        %v1800 = vadd.f32 0.0, %v1799
        %1801 = vmatmul.bf16.gmra.mxu0 %v1717
        %v1802 = vpop.f32.mrf.mxu0
        %v1803 = vadd.f32 0.0, %v1802
        %v1804 = vpop.f32.mrf.mxu0
        %v1805 = vadd.f32 0.0, %v1804
        %1806 = vmatmul.bf16.gmra.mxu0 %v1720
        %v1807 = vpop.f32.mrf.mxu0
        %v1808 = vadd.f32 0.0, %v1807
        %v1809 = vpop.f32.mrf.mxu0
        %v1810 = vadd.f32 0.0, %v1809
        %1811 = vmatmul.bf16.gmra.mxu0 %v1723
        %v1812 = vpop.f32.mrf.mxu0
        %v1813 = vadd.f32 0.0, %v1812
        %v1814 = vpop.f32.mrf.mxu0
        %v1815 = vadd.f32 0.0, %v1814
        %1816 = vmatmul.bf16.gmra.mxu0 %v1726
        %v1817 = vpop.f32.mrf.mxu0
        %v1818 = vadd.f32 0.0, %v1817
        %v1819 = vpop.f32.mrf.mxu0
        %v1820 = vadd.f32 0.0, %v1819
        %1821 = vmatmul.bf16.gmra.mxu0 %v1729
        %v1822 = vpop.f32.mrf.mxu0
        %v1823 = vadd.f32 0.0, %v1822
        %v1824 = vpop.f32.mrf.mxu0
        %v1825 = vadd.f32 0.0, %v1824
        %1826 = vmatmul.bf16.gmra.mxu0 %v1732
        %v1827 = vpop.f32.mrf.mxu0
        %v1828 = vadd.f32 0.0, %v1827
        %v1829 = vpop.f32.mrf.mxu0
        %v1830 = vadd.f32 0.0, %v1829
        %1831 = vmatmul.bf16.gmra.mxu0 %v1735
        %v1832 = vpop.f32.mrf.mxu0
        %v1833 = vadd.f32 0.0, %v1832
        %v1834 = vpop.f32.mrf.mxu0
        %v1835 = vadd.f32 0.0, %v1834
        %1836 = vmatmul.bf16.gmra.mxu0 %v1738
        %v1837 = vpop.f32.mrf.mxu0
        %v1838 = vadd.f32 0.0, %v1837
        %v1839 = vpop.f32.mrf.mxu0
        %v1840 = vadd.f32 0.0, %v1839
        %1841 = vdwg.mxu0
        %v1842 = vld [vmem:[%s205] sm:$0xff]
        %v1843 = vld [vmem:[%s205 + $0x8] sm:$0xff]
        %v1844 = vld [vmem:[%s205 + $0x10] sm:$0xff]
        %v1845 = vld [vmem:[%s205 + $0x18] sm:$0xff]
        %v1846 = vld [vmem:[%s205 + $0x20] sm:$0xff]
        %v1847 = vld [vmem:[%s205 + $0x28] sm:$0xff]
        %v1848 = vld [vmem:[%s205 + $0x30] sm:$0xff]
        %v1849 = vld [vmem:[%s205 + $0x38] sm:$0xff]
        %v1850 = vld [vmem:[%s205 + $0x40] sm:$0xff]
        %v1851 = vld [vmem:[%s205 + $0x48] sm:$0xff]
        %v1852 = vld [vmem:[%s205 + $0x50] sm:$0xff]
        %v1853 = vld [vmem:[%s205 + $0x58] sm:$0xff]
        %v1854 = vld [vmem:[%s205 + $0x60] sm:$0xff]
        %v1855 = vld [vmem:[%s205 + $0x68] sm:$0xff]
        %v1856 = vld [vmem:[%s205 + $0x70] sm:$0xff]
        %v1857 = vld [vmem:[%s205 + $0x78] sm:$0xff]
        %v1858 = vld [vmem:[%s205 + $0x80] sm:$0xff]
        %v1859 = vld [vmem:[%s205 + $0x88] sm:$0xff]
        %v1860 = vld [vmem:[%s205 + $0x90] sm:$0xff]
        %v1861 = vld [vmem:[%s205 + $0x98] sm:$0xff]
        %v1862 = vld [vmem:[%s205 + $0xa0] sm:$0xff]
        %v1863 = vld [vmem:[%s205 + $0xa8] sm:$0xff]
        %v1864 = vld [vmem:[%s205 + $0xb0] sm:$0xff]
        %v1865 = vld [vmem:[%s205 + $0xb8] sm:$0xff]
        %v1866 = vld [vmem:[%s205 + $0xc0] sm:$0xff]
        %v1867 = vld [vmem:[%s205 + $0xc8] sm:$0xff]
        %v1868 = vld [vmem:[%s205 + $0xd0] sm:$0xff]
        %v1869 = vld [vmem:[%s205 + $0xd8] sm:$0xff]
        %v1870 = vld [vmem:[%s205 + $0xe0] sm:$0xff]
        %v1871 = vld [vmem:[%s205 + $0xe8] sm:$0xff]
        %v1872 = vld [vmem:[%s205 + $0xf0] sm:$0xff]
        %v1873 = vld [vmem:[%s205 + $0xf8] sm:$0xff]
        %v1874 = vld [vmem:[%s205 + $0x100] sm:$0xff]
        %v1875 = vld [vmem:[%s205 + $0x108] sm:$0xff]
        %v1876 = vld [vmem:[%s205 + $0x110] sm:$0xff]
        %v1877 = vld [vmem:[%s205 + $0x118] sm:$0xff]
        %v1878 = vadd.f32 %v1842, %v1753
        %v1879 = vadd.f32 %v1843, %v1755
        %v1880 = vadd.f32 %v1844, %v1758
        %v1881 = vadd.f32 %v1845, %v1760
        %v1882 = vadd.f32 %v1846, %v1763
        %v1883 = vadd.f32 %v1847, %v1765
        %v1884 = vadd.f32 %v1848, %v1768
        %v1885 = vadd.f32 %v1849, %v1770
        %v1886 = vadd.f32 %v1850, %v1773
        %v1887 = vadd.f32 %v1851, %v1775
        %v1888 = vadd.f32 %v1852, %v1778
        %v1889 = vadd.f32 %v1853, %v1780
        %v1890 = vadd.f32 %v1854, %v1783
        %v1891 = vadd.f32 %v1855, %v1785
        %v1892 = vadd.f32 %v1856, %v1788
        %v1893 = vadd.f32 %v1857, %v1790
        %v1894 = vadd.f32 %v1858, %v1793
        %v1895 = vadd.f32 %v1859, %v1795
        %v1896 = vadd.f32 %v1860, %v1798
        %v1897 = vadd.f32 %v1861, %v1800
        %v1898 = vadd.f32 %v1862, %v1803
        %v1899 = vadd.f32 %v1863, %v1805
        %v1900 = vadd.f32 %v1864, %v1808
        %v1901 = vadd.f32 %v1865, %v1810
        %v1902 = vadd.f32 %v1866, %v1813
        %v1903 = vadd.f32 %v1867, %v1815
        %v1904 = vadd.f32 %v1868, %v1818
        %v1905 = vadd.f32 %v1869, %v1820
        %v1906 = vadd.f32 %v1870, %v1823
        %v1907 = vadd.f32 %v1871, %v1825
        %v1908 = vadd.f32 %v1872, %v1828
        %v1909 = vadd.f32 %v1873, %v1830
        %v1910 = vadd.f32 %v1874, %v1833
        %v1911 = vadd.f32 %v1875, %v1835
        %v1912 = vadd.f32 %v1876, %v1838
        %v1913 = vadd.f32 %v1877, %v1840
        %1914 = vst [vmem:[%s205] sm:$0xff] %v1878
        %1915 = vst [vmem:[%s205 + $0x8] sm:$0xff] %v1879
        %1916 = vst [vmem:[%s205 + $0x10] sm:$0xff] %v1880
        %1917 = vst [vmem:[%s205 + $0x18] sm:$0xff] %v1881
        %1918 = vst [vmem:[%s205 + $0x20] sm:$0xff] %v1882
        %1919 = vst [vmem:[%s205 + $0x28] sm:$0xff] %v1883
        %1920 = vst [vmem:[%s205 + $0x30] sm:$0xff] %v1884
        %1921 = vst [vmem:[%s205 + $0x38] sm:$0xff] %v1885
        %1922 = vst [vmem:[%s205 + $0x40] sm:$0xff] %v1886
        %1923 = vst [vmem:[%s205 + $0x48] sm:$0xff] %v1887
        %1924 = vst [vmem:[%s205 + $0x50] sm:$0xff] %v1888
        %1925 = vst [vmem:[%s205 + $0x58] sm:$0xff] %v1889
        %1926 = vst [vmem:[%s205 + $0x60] sm:$0xff] %v1890
        %1927 = vst [vmem:[%s205 + $0x68] sm:$0xff] %v1891
        %1928 = vst [vmem:[%s205 + $0x70] sm:$0xff] %v1892
        %1929 = vst [vmem:[%s205 + $0x78] sm:$0xff] %v1893
        %1930 = vst [vmem:[%s205 + $0x80] sm:$0xff] %v1894
        %1931 = vst [vmem:[%s205 + $0x88] sm:$0xff] %v1895
        %1932 = vst [vmem:[%s205 + $0x90] sm:$0xff] %v1896
        %1933 = vst [vmem:[%s205 + $0x98] sm:$0xff] %v1897
        %1934 = vst [vmem:[%s205 + $0xa0] sm:$0xff] %v1898
        %1935 = vst [vmem:[%s205 + $0xa8] sm:$0xff] %v1899
        %1936 = vst [vmem:[%s205 + $0xb0] sm:$0xff] %v1900
        %1937 = vst [vmem:[%s205 + $0xb8] sm:$0xff] %v1901
        %1938 = vst [vmem:[%s205 + $0xc0] sm:$0xff] %v1902
        %1939 = vst [vmem:[%s205 + $0xc8] sm:$0xff] %v1903
        %1940 = vst [vmem:[%s205 + $0xd0] sm:$0xff] %v1904
        %1941 = vst [vmem:[%s205 + $0xd8] sm:$0xff] %v1905
        %1942 = vst [vmem:[%s205 + $0xe0] sm:$0xff] %v1906
        %1943 = vst [vmem:[%s205 + $0xe8] sm:$0xff] %v1907
        %1944 = vst [vmem:[%s205 + $0xf0] sm:$0xff] %v1908
        %1945 = vst [vmem:[%s205 + $0xf8] sm:$0xff] %v1909
        %1946 = vst [vmem:[%s205 + $0x100] sm:$0xff] %v1910
        %1947 = vst [vmem:[%s205 + $0x108] sm:$0xff] %v1911
        %1948 = vst [vmem:[%s205 + $0x110] sm:$0xff] %v1912
        %1949 = vst [vmem:[%s205 + $0x118] sm:$0xff] %v1913
        %v1950 = vld [vmem:[%s210 + $0x8] sm:$0xe]
        %v1951 = vld [vmem:[%s210 + $0xc] sm:$0xf]
        %v1952 = vld [vmem:[%s210 + $0x10] sm:$0xf]
        %v1953 = vld [vmem:[%s210 + $0x14] sm:$0xf]
        %v1954 = vld [vmem:[%s210 + $0x18] sm:$0xf]
        %v1955 = vld [vmem:[%s210 + $0x1c] sm:$0xf]
        %v1956 = vld [vmem:[%s210 + $0x20] sm:$0xf]
        %v1957 = vld [vmem:[%s210 + $0x24] sm:$0xf]
        %v1958 = vld [vmem:[%s210 + $0x28] sm:$0xf]
        %v1959 = vld [vmem:[%s210 + $0x2c] sm:$0xf]
        %v1960 = vld [vmem:[%s210 + $0x30] sm:$0xf]
        %v1961 = vld [vmem:[%s210 + $0x34] sm:$0xf]
        %v1962 = vld [vmem:[%s210 + $0x38] sm:$0xf]
        %v1963 = vld [vmem:[%s210 + $0x3c] sm:$0xf]
        %v1964 = vld [vmem:[%s210 + $0x40] sm:$0xf]
        %v1965 = vld [vmem:[%s210 + $0x44] sm:$0xf]
        %v1966 = vld [vmem:[%s210 + $0x48] sm:$0xf]
        %v1967 = vld [vmem:[%s210 + $0x4c] sm:$0xf]
        %v1968 = vld [vmem:[%s210 + $0x50] sm:$0xf]
        %v1969 = vld [vmem:[%s210 + $0x54] sm:$0xf]
        %v1970 = vld [vmem:[%s210 + $0x58] sm:$0xf]
        %v1971 = vld [vmem:[%s210 + $0x5c] sm:$0xf]
        %v1972 = vld [vmem:[%s210 + $0x60] sm:$0xf]
        %v1973 = vld [vmem:[%s210 + $0x64] sm:$0xf]
        %v1974 = vld [vmem:[%s210 + $0x68] sm:$0xf]
        %v1975 = vld [vmem:[%s210 + $0x6c] sm:$0xf]
        %v1976 = vld [vmem:[%s210 + $0x70] sm:$0xf]
        %v1977 = vld [vmem:[%s210 + $0x74] sm:$0xf]
        %v1978 = vld [vmem:[%s210 + $0x78] sm:$0xf]
        %v1979 = vld [vmem:[%s210 + $0x7c] sm:$0xf]
        %v1980 = vld [vmem:[%s210 + $0x80] sm:$0xf]
        %v1981 = vld [vmem:[%s210 + $0x84] sm:$0xf]
        %v1982 = vld [vmem:[%s210 + $0x88] sm:$0xf]
        %v1983 = vld [vmem:[%s210 + $0x8c] sm:$0xf]
        %v1984 = vld [vmem:[%s210 + $0x90] sm:$0xf]
        %v1985 = vld [vmem:[%s210 + $0x94] sm:$0xf]
        %v1986 = vld [vmem:[%s210 + $0x98] sm:$0x3]
        %s1987 = scalar_lea.vmem %s2, 16
        %v1988 = vld [vmem:[%s1987] sm:$0xf]
        %v2026 = vunpack.c.l.b16 %v1950
        %v2027 = vunpack.c.l.b16 %v1951
        %v2028 = vunpack.c.l.b16 %v1952
        %v2029 = vunpack.c.l.b16 %v1953
        %v2030 = vunpack.c.l.b16 %v1954
        %v2031 = vunpack.c.l.b16 %v1955
        %v2032 = vunpack.c.l.b16 %v1956
        %v2033 = vunpack.c.l.b16 %v1957
        %v2034 = vunpack.c.l.b16 %v1958
        %v2035 = vunpack.c.l.b16 %v1959
        %v2036 = vunpack.c.l.b16 %v1960
        %v2037 = vunpack.c.l.b16 %v1961
        %v2038 = vunpack.c.l.b16 %v1962
        %v2039 = vunpack.c.l.b16 %v1963
        %v2040 = vunpack.c.l.b16 %v1964
        %v2041 = vunpack.c.l.b16 %v1965
        %v2042 = vunpack.c.l.b16 %v1966
        %v2043 = vunpack.c.l.b16 %v1967
        %v2044 = vunpack.c.l.b16 %v1968
        %v2045 = vunpack.c.l.b16 %v1969
        %v2046 = vunpack.c.l.b16 %v1970
        %v2047 = vunpack.c.l.b16 %v1971
        %v2048 = vunpack.c.l.b16 %v1972
        %v2049 = vunpack.c.l.b16 %v1973
        %v2050 = vunpack.c.l.b16 %v1974
        %v2051 = vunpack.c.l.b16 %v1975
        %v2052 = vunpack.c.l.b16 %v1976
        %v2053 = vunpack.c.l.b16 %v1977
        %v2054 = vunpack.c.l.b16 %v1978
        %v2055 = vunpack.c.l.b16 %v1979
        %v2056 = vunpack.c.l.b16 %v1980
        %v2057 = vunpack.c.l.b16 %v1981
        %v2058 = vunpack.c.l.b16 %v1982
        %v2059 = vunpack.c.l.b16 %v1983
        %v2060 = vunpack.c.l.b16 %v1984
        %v2061 = vunpack.c.l.b16 %v1985
        %v2062 = vunpack.c.l.b16 %v1986
        %v2063 = vpack.c.b16 %v2027, %v2026
        %v2064 = vpack.c.b16 %v2029, %v2028
        %v2065 = vpack.c.b16 %v2031, %v2030
        %v2066 = vpack.c.b16 %v2033, %v2032
        %v2067 = vpack.c.b16 %v2035, %v2034
        %v2068 = vpack.c.b16 %v2037, %v2036
        %v2069 = vpack.c.b16 %v2039, %v2038
        %v2070 = vpack.c.b16 %v2041, %v2040
        %v2071 = vpack.c.b16 %v2043, %v2042
        %v2072 = vpack.c.b16 %v2045, %v2044
        %v2073 = vpack.c.b16 %v2047, %v2046
        %v2074 = vpack.c.b16 %v2049, %v2048
        %v2075 = vpack.c.b16 %v2051, %v2050
        %v2076 = vpack.c.b16 %v2053, %v2052
        %v2077 = vpack.c.b16 %v2055, %v2054
        %v2078 = vpack.c.b16 %v2057, %v2056
        %v2079 = vpack.c.b16 %v2059, %v2058
        %v2080 = vpack.c.b16 %v2061, %v2060
        %v2081 = vpack.c.b16 %v2062, %v2062
        %vm2082 = vsmask.f32 6400
        %v2084 = vshrl.u32 %v2063, 16
        %v2086 = vrot.slane %v2084, 1
        %v2087 = vshll.u32 %v2063, 16
        %v2089 = vrot.slane %v2087, 2
        %v2090 = vor.u32 %v2086, %v2089
        %v2092 = vshrl.u32 %v2064, 16
        %v2094 = vrot.slane %v2092, 1
        %v2095 = vshll.u32 %v2064, 16
        %v2097 = vrot.slane %v2095, 2
        %v2098 = vor.u32 %v2094, %v2097
        %v2099 = vsel %vm2082, %v2090, %v2098
        %v2101 = vshrl.u32 %v2065, 16
        %v2103 = vrot.slane %v2101, 1
        %v2104 = vshll.u32 %v2065, 16
        %v2106 = vrot.slane %v2104, 2
        %v2107 = vor.u32 %v2103, %v2106
        %v2108 = vsel %vm2082, %v2098, %v2107
        %v2110 = vshrl.u32 %v2066, 16
        %v2112 = vrot.slane %v2110, 1
        %v2113 = vshll.u32 %v2066, 16
        %v2115 = vrot.slane %v2113, 2
        %v2116 = vor.u32 %v2112, %v2115
        %v2117 = vsel %vm2082, %v2107, %v2116
        %v2119 = vshrl.u32 %v2067, 16
        %v2121 = vrot.slane %v2119, 1
        %v2122 = vshll.u32 %v2067, 16
        %v2124 = vrot.slane %v2122, 2
        %v2125 = vor.u32 %v2121, %v2124
        %v2126 = vsel %vm2082, %v2116, %v2125
        %v2128 = vshrl.u32 %v2068, 16
        %v2130 = vrot.slane %v2128, 1
        %v2131 = vshll.u32 %v2068, 16
        %v2133 = vrot.slane %v2131, 2
        %v2134 = vor.u32 %v2130, %v2133
        %v2135 = vsel %vm2082, %v2125, %v2134
        %v2137 = vshrl.u32 %v2069, 16
        %v2139 = vrot.slane %v2137, 1
        %v2140 = vshll.u32 %v2069, 16
        %v2142 = vrot.slane %v2140, 2
        %v2143 = vor.u32 %v2139, %v2142
        %v2144 = vsel %vm2082, %v2134, %v2143
        %v2146 = vshrl.u32 %v2070, 16
        %v2148 = vrot.slane %v2146, 1
        %v2149 = vshll.u32 %v2070, 16
        %v2151 = vrot.slane %v2149, 2
        %v2152 = vor.u32 %v2148, %v2151
        %v2153 = vsel %vm2082, %v2143, %v2152
        %v2155 = vshrl.u32 %v2071, 16
        %v2157 = vrot.slane %v2155, 1
        %v2158 = vshll.u32 %v2071, 16
        %v2160 = vrot.slane %v2158, 2
        %v2161 = vor.u32 %v2157, %v2160
        %v2162 = vsel %vm2082, %v2152, %v2161
        %v2164 = vshrl.u32 %v2072, 16
        %v2166 = vrot.slane %v2164, 1
        %v2167 = vshll.u32 %v2072, 16
        %v2169 = vrot.slane %v2167, 2
        %v2170 = vor.u32 %v2166, %v2169
        %v2171 = vsel %vm2082, %v2161, %v2170
        %v2173 = vshrl.u32 %v2073, 16
        %v2175 = vrot.slane %v2173, 1
        %v2176 = vshll.u32 %v2073, 16
        %v2178 = vrot.slane %v2176, 2
        %v2179 = vor.u32 %v2175, %v2178
        %v2180 = vsel %vm2082, %v2170, %v2179
        %v2182 = vshrl.u32 %v2074, 16
        %v2184 = vrot.slane %v2182, 1
        %v2185 = vshll.u32 %v2074, 16
        %v2187 = vrot.slane %v2185, 2
        %v2188 = vor.u32 %v2184, %v2187
        %v2189 = vsel %vm2082, %v2179, %v2188
        %v2191 = vshrl.u32 %v2075, 16
        %v2193 = vrot.slane %v2191, 1
        %v2194 = vshll.u32 %v2075, 16
        %v2196 = vrot.slane %v2194, 2
        %v2197 = vor.u32 %v2193, %v2196
        %v2198 = vsel %vm2082, %v2188, %v2197
        %v2200 = vshrl.u32 %v2076, 16
        %v2202 = vrot.slane %v2200, 1
        %v2203 = vshll.u32 %v2076, 16
        %v2205 = vrot.slane %v2203, 2
        %v2206 = vor.u32 %v2202, %v2205
        %v2207 = vsel %vm2082, %v2197, %v2206
        %v2209 = vshrl.u32 %v2077, 16
        %v2211 = vrot.slane %v2209, 1
        %v2212 = vshll.u32 %v2077, 16
        %v2214 = vrot.slane %v2212, 2
        %v2215 = vor.u32 %v2211, %v2214
        %v2216 = vsel %vm2082, %v2206, %v2215
        %v2218 = vshrl.u32 %v2078, 16
        %v2220 = vrot.slane %v2218, 1
        %v2221 = vshll.u32 %v2078, 16
        %v2223 = vrot.slane %v2221, 2
        %v2224 = vor.u32 %v2220, %v2223
        %v2225 = vsel %vm2082, %v2215, %v2224
        %v2227 = vshrl.u32 %v2079, 16
        %v2229 = vrot.slane %v2227, 1
        %v2230 = vshll.u32 %v2079, 16
        %v2232 = vrot.slane %v2230, 2
        %v2233 = vor.u32 %v2229, %v2232
        %v2234 = vsel %vm2082, %v2224, %v2233
        %v2236 = vshrl.u32 %v2080, 16
        %v2238 = vrot.slane %v2236, 1
        %v2239 = vshll.u32 %v2080, 16
        %v2241 = vrot.slane %v2239, 2
        %v2242 = vor.u32 %v2238, %v2241
        %v2243 = vsel %vm2082, %v2233, %v2242
        %v2245 = vshrl.u32 %v2081, 16
        %v2247 = vrot.slane %v2245, 1
        %v2248 = vshll.u32 %v2081, 16
        %v2250 = vrot.slane %v2248, 2
        %v2251 = vor.u32 %v2247, %v2250
        %v2252 = vsel %vm2082, %v2242, %v2251
        %v2254 = vsel %vm344, %v2099, 0
        %v2257 = vsel %vm344, %v2108, 0
        %v2260 = vsel %vm344, %v2117, 0
        %v2263 = vsel %vm344, %v2126, 0
        %v2266 = vsel %vm344, %v2135, 0
        %v2269 = vsel %vm344, %v2144, 0
        %v2272 = vsel %vm344, %v2153, 0
        %v2275 = vsel %vm344, %v2162, 0
        %v2278 = vsel %vm344, %v2171, 0
        %v2281 = vsel %vm344, %v2180, 0
        %v2284 = vsel %vm344, %v2189, 0
        %v2287 = vsel %vm344, %v2198, 0
        %v2290 = vsel %vm344, %v2207, 0
        %v2293 = vsel %vm344, %v2216, 0
        %v2296 = vsel %vm344, %v2225, 0
        %v2299 = vsel %vm344, %v2234, 0
        %v2302 = vsel %vm344, %v2243, 0
        %v2305 = vsel %vm344, %v2252, 0
        %v2308 = vsel %vm399, %v1988, 0
        %2310 = vmatpush.bf16.msra.mxu0 0
        %2311 = vmatpush.bf16.msra.mxu0 0
        %2312 = vmatpush.bf16.msra.mxu0 0
        %2313 = vmatpush.bf16.msra.mxu0 0
        %2314 = vmatpush.bf16.msra.mxu0 0
        %2315 = vmatpush.bf16.msra.mxu0 0
        %2316 = vmatpush.bf16.msra.mxu0 0
        %2317 = vmatpush.bf16.msra.mxu0 %v2308
        %2318 = vmatmul.bf16.gmra.mxu0 %v2254
        %v2319 = vpop.f32.mrf.mxu0
        %v2320 = vadd.f32 0.0, %v2319
        %v2321 = vpop.f32.mrf.mxu0
        %v2322 = vadd.f32 0.0, %v2321
        %2323 = vmatmul.bf16.gmra.mxu0 %v2257
        %v2324 = vpop.f32.mrf.mxu0
        %v2325 = vadd.f32 0.0, %v2324
        %v2326 = vpop.f32.mrf.mxu0
        %v2327 = vadd.f32 0.0, %v2326
        %2328 = vmatmul.bf16.gmra.mxu0 %v2260
        %v2329 = vpop.f32.mrf.mxu0
        %v2330 = vadd.f32 0.0, %v2329
        %v2331 = vpop.f32.mrf.mxu0
        %v2332 = vadd.f32 0.0, %v2331
        %2333 = vmatmul.bf16.gmra.mxu0 %v2263
        %v2334 = vpop.f32.mrf.mxu0
        %v2335 = vadd.f32 0.0, %v2334
        %v2336 = vpop.f32.mrf.mxu0
        %v2337 = vadd.f32 0.0, %v2336
        %2338 = vmatmul.bf16.gmra.mxu0 %v2266
        %v2339 = vpop.f32.mrf.mxu0
        %v2340 = vadd.f32 0.0, %v2339
        %v2341 = vpop.f32.mrf.mxu0
        %v2342 = vadd.f32 0.0, %v2341
        %2343 = vmatmul.bf16.gmra.mxu0 %v2269
        %v2344 = vpop.f32.mrf.mxu0
        %v2345 = vadd.f32 0.0, %v2344
        %v2346 = vpop.f32.mrf.mxu0
        %v2347 = vadd.f32 0.0, %v2346
        %2348 = vmatmul.bf16.gmra.mxu0 %v2272
        %v2349 = vpop.f32.mrf.mxu0
        %v2350 = vadd.f32 0.0, %v2349
        %v2351 = vpop.f32.mrf.mxu0
        %v2352 = vadd.f32 0.0, %v2351
        %2353 = vmatmul.bf16.gmra.mxu0 %v2275
        %v2354 = vpop.f32.mrf.mxu0
        %v2355 = vadd.f32 0.0, %v2354
        %v2356 = vpop.f32.mrf.mxu0
        %v2357 = vadd.f32 0.0, %v2356
        %2358 = vmatmul.bf16.gmra.mxu0 %v2278
        %v2359 = vpop.f32.mrf.mxu0
        %v2360 = vadd.f32 0.0, %v2359
        %v2361 = vpop.f32.mrf.mxu0
        %v2362 = vadd.f32 0.0, %v2361
        %2363 = vmatmul.bf16.gmra.mxu0 %v2281
        %v2364 = vpop.f32.mrf.mxu0
        %v2365 = vadd.f32 0.0, %v2364
        %v2366 = vpop.f32.mrf.mxu0
        %v2367 = vadd.f32 0.0, %v2366
        %2368 = vmatmul.bf16.gmra.mxu0 %v2284
        %v2369 = vpop.f32.mrf.mxu0
        %v2370 = vadd.f32 0.0, %v2369
        %v2371 = vpop.f32.mrf.mxu0
        %v2372 = vadd.f32 0.0, %v2371
        %2373 = vmatmul.bf16.gmra.mxu0 %v2287
        %v2374 = vpop.f32.mrf.mxu0
        %v2375 = vadd.f32 0.0, %v2374
        %v2376 = vpop.f32.mrf.mxu0
        %v2377 = vadd.f32 0.0, %v2376
        %2378 = vmatmul.bf16.gmra.mxu0 %v2290
        %v2379 = vpop.f32.mrf.mxu0
        %v2380 = vadd.f32 0.0, %v2379
        %v2381 = vpop.f32.mrf.mxu0
        %v2382 = vadd.f32 0.0, %v2381
        %2383 = vmatmul.bf16.gmra.mxu0 %v2293
        %v2384 = vpop.f32.mrf.mxu0
        %v2385 = vadd.f32 0.0, %v2384
        %v2386 = vpop.f32.mrf.mxu0
        %v2387 = vadd.f32 0.0, %v2386
        %2388 = vmatmul.bf16.gmra.mxu0 %v2296
        %v2389 = vpop.f32.mrf.mxu0
        %v2390 = vadd.f32 0.0, %v2389
        %v2391 = vpop.f32.mrf.mxu0
        %v2392 = vadd.f32 0.0, %v2391
        %2393 = vmatmul.bf16.gmra.mxu0 %v2299
        %v2394 = vpop.f32.mrf.mxu0
        %v2395 = vadd.f32 0.0, %v2394
        %v2396 = vpop.f32.mrf.mxu0
        %v2397 = vadd.f32 0.0, %v2396
        %2398 = vmatmul.bf16.gmra.mxu0 %v2302
        %v2399 = vpop.f32.mrf.mxu0
        %v2400 = vadd.f32 0.0, %v2399
        %v2401 = vpop.f32.mrf.mxu0
        %v2402 = vadd.f32 0.0, %v2401
        %2403 = vmatmul.bf16.gmra.mxu0 %v2305
        %v2404 = vpop.f32.mrf.mxu0
        %v2405 = vadd.f32 0.0, %v2404
        %v2406 = vpop.f32.mrf.mxu0
        %v2407 = vadd.f32 0.0, %v2406
        %2408 = vdwg.mxu0
        %v2409 = vld [vmem:[%s205] sm:$0xff]
        %v2410 = vld [vmem:[%s205 + $0x8] sm:$0xff]
        %v2411 = vld [vmem:[%s205 + $0x10] sm:$0xff]
        %v2412 = vld [vmem:[%s205 + $0x18] sm:$0xff]
        %v2413 = vld [vmem:[%s205 + $0x20] sm:$0xff]
        %v2414 = vld [vmem:[%s205 + $0x28] sm:$0xff]
        %v2415 = vld [vmem:[%s205 + $0x30] sm:$0xff]
        %v2416 = vld [vmem:[%s205 + $0x38] sm:$0xff]
        %v2417 = vld [vmem:[%s205 + $0x40] sm:$0xff]
        %v2418 = vld [vmem:[%s205 + $0x48] sm:$0xff]
        %v2419 = vld [vmem:[%s205 + $0x50] sm:$0xff]
        %v2420 = vld [vmem:[%s205 + $0x58] sm:$0xff]
        %v2421 = vld [vmem:[%s205 + $0x60] sm:$0xff]
        %v2422 = vld [vmem:[%s205 + $0x68] sm:$0xff]
        %v2423 = vld [vmem:[%s205 + $0x70] sm:$0xff]
        %v2424 = vld [vmem:[%s205 + $0x78] sm:$0xff]
        %v2425 = vld [vmem:[%s205 + $0x80] sm:$0xff]
        %v2426 = vld [vmem:[%s205 + $0x88] sm:$0xff]
        %v2427 = vld [vmem:[%s205 + $0x90] sm:$0xff]
        %v2428 = vld [vmem:[%s205 + $0x98] sm:$0xff]
        %v2429 = vld [vmem:[%s205 + $0xa0] sm:$0xff]
        %v2430 = vld [vmem:[%s205 + $0xa8] sm:$0xff]
        %v2431 = vld [vmem:[%s205 + $0xb0] sm:$0xff]
        %v2432 = vld [vmem:[%s205 + $0xb8] sm:$0xff]
        %v2433 = vld [vmem:[%s205 + $0xc0] sm:$0xff]
        %v2434 = vld [vmem:[%s205 + $0xc8] sm:$0xff]
        %v2435 = vld [vmem:[%s205 + $0xd0] sm:$0xff]
        %v2436 = vld [vmem:[%s205 + $0xd8] sm:$0xff]
        %v2437 = vld [vmem:[%s205 + $0xe0] sm:$0xff]
        %v2438 = vld [vmem:[%s205 + $0xe8] sm:$0xff]
        %v2439 = vld [vmem:[%s205 + $0xf0] sm:$0xff]
        %v2440 = vld [vmem:[%s205 + $0xf8] sm:$0xff]
        %v2441 = vld [vmem:[%s205 + $0x100] sm:$0xff]
        %v2442 = vld [vmem:[%s205 + $0x108] sm:$0xff]
        %v2443 = vld [vmem:[%s205 + $0x110] sm:$0xff]
        %v2444 = vld [vmem:[%s205 + $0x118] sm:$0xff]
        %v2445 = vadd.f32 %v2409, %v2320
        %v2446 = vadd.f32 %v2410, %v2322
        %v2447 = vadd.f32 %v2411, %v2325
        %v2448 = vadd.f32 %v2412, %v2327
        %v2449 = vadd.f32 %v2413, %v2330
        %v2450 = vadd.f32 %v2414, %v2332
        %v2451 = vadd.f32 %v2415, %v2335
        %v2452 = vadd.f32 %v2416, %v2337
        %v2453 = vadd.f32 %v2417, %v2340
        %v2454 = vadd.f32 %v2418, %v2342
        %v2455 = vadd.f32 %v2419, %v2345
        %v2456 = vadd.f32 %v2420, %v2347
        %v2457 = vadd.f32 %v2421, %v2350
        %v2458 = vadd.f32 %v2422, %v2352
        %v2459 = vadd.f32 %v2423, %v2355
        %v2460 = vadd.f32 %v2424, %v2357
        %v2461 = vadd.f32 %v2425, %v2360
        %v2462 = vadd.f32 %v2426, %v2362
        %v2463 = vadd.f32 %v2427, %v2365
        %v2464 = vadd.f32 %v2428, %v2367
        %v2465 = vadd.f32 %v2429, %v2370
        %v2466 = vadd.f32 %v2430, %v2372
        %v2467 = vadd.f32 %v2431, %v2375
        %v2468 = vadd.f32 %v2432, %v2377
        %v2469 = vadd.f32 %v2433, %v2380
        %v2470 = vadd.f32 %v2434, %v2382
        %v2471 = vadd.f32 %v2435, %v2385
        %v2472 = vadd.f32 %v2436, %v2387
        %v2473 = vadd.f32 %v2437, %v2390
        %v2474 = vadd.f32 %v2438, %v2392
        %v2475 = vadd.f32 %v2439, %v2395
        %v2476 = vadd.f32 %v2440, %v2397
        %v2477 = vadd.f32 %v2441, %v2400
        %v2478 = vadd.f32 %v2442, %v2402
        %v2479 = vadd.f32 %v2443, %v2405
        %v2480 = vadd.f32 %v2444, %v2407
        %2481 = vst [vmem:[%s205] sm:$0xff] %v2445
        %2482 = vst [vmem:[%s205 + $0x8] sm:$0xff] %v2446
        %2483 = vst [vmem:[%s205 + $0x10] sm:$0xff] %v2447
        %2484 = vst [vmem:[%s205 + $0x18] sm:$0xff] %v2448
        %2485 = vst [vmem:[%s205 + $0x20] sm:$0xff] %v2449
        %2486 = vst [vmem:[%s205 + $0x28] sm:$0xff] %v2450
        %2487 = vst [vmem:[%s205 + $0x30] sm:$0xff] %v2451
        %2488 = vst [vmem:[%s205 + $0x38] sm:$0xff] %v2452
        %2489 = vst [vmem:[%s205 + $0x40] sm:$0xff] %v2453
        %2490 = vst [vmem:[%s205 + $0x48] sm:$0xff] %v2454
        %2491 = vst [vmem:[%s205 + $0x50] sm:$0xff] %v2455
        %2492 = vst [vmem:[%s205 + $0x58] sm:$0xff] %v2456
        %2493 = vst [vmem:[%s205 + $0x60] sm:$0xff] %v2457
        %2494 = vst [vmem:[%s205 + $0x68] sm:$0xff] %v2458
        %2495 = vst [vmem:[%s205 + $0x70] sm:$0xff] %v2459
        %2496 = vst [vmem:[%s205 + $0x78] sm:$0xff] %v2460
        %2497 = vst [vmem:[%s205 + $0x80] sm:$0xff] %v2461
        %2498 = vst [vmem:[%s205 + $0x88] sm:$0xff] %v2462
        %2499 = vst [vmem:[%s205 + $0x90] sm:$0xff] %v2463
        %2500 = vst [vmem:[%s205 + $0x98] sm:$0xff] %v2464
        %2501 = vst [vmem:[%s205 + $0xa0] sm:$0xff] %v2465
        %2502 = vst [vmem:[%s205 + $0xa8] sm:$0xff] %v2466
        %2503 = vst [vmem:[%s205 + $0xb0] sm:$0xff] %v2467
        %2504 = vst [vmem:[%s205 + $0xb8] sm:$0xff] %v2468
        %2505 = vst [vmem:[%s205 + $0xc0] sm:$0xff] %v2469
        %2506 = vst [vmem:[%s205 + $0xc8] sm:$0xff] %v2470
        %2507 = vst [vmem:[%s205 + $0xd0] sm:$0xff] %v2471
        %2508 = vst [vmem:[%s205 + $0xd8] sm:$0xff] %v2472
        %2509 = vst [vmem:[%s205 + $0xe0] sm:$0xff] %v2473
        %2510 = vst [vmem:[%s205 + $0xe8] sm:$0xff] %v2474
        %2511 = vst [vmem:[%s205 + $0xf0] sm:$0xff] %v2475
        %2512 = vst [vmem:[%s205 + $0xf8] sm:$0xff] %v2476
        %2513 = vst [vmem:[%s205 + $0x100] sm:$0xff] %v2477
        %2514 = vst [vmem:[%s205 + $0x108] sm:$0xff] %v2478
        %2515 = vst [vmem:[%s205 + $0x110] sm:$0xff] %v2479
        %2516 = vst [vmem:[%s205 + $0x118] sm:$0xff] %v2480
        %v2517 = vld [vmem:[%s210 + $0x8] sm:$0xc]
        %v2518 = vld [vmem:[%s210 + $0xc] sm:$0xf]
        %v2519 = vld [vmem:[%s210 + $0x10] sm:$0xf]
        %v2520 = vld [vmem:[%s210 + $0x14] sm:$0xf]
        %v2521 = vld [vmem:[%s210 + $0x18] sm:$0xf]
        %v2522 = vld [vmem:[%s210 + $0x1c] sm:$0xf]
        %v2523 = vld [vmem:[%s210 + $0x20] sm:$0xf]
        %v2524 = vld [vmem:[%s210 + $0x24] sm:$0xf]
        %v2525 = vld [vmem:[%s210 + $0x28] sm:$0xf]
        %v2526 = vld [vmem:[%s210 + $0x2c] sm:$0xf]
        %v2527 = vld [vmem:[%s210 + $0x30] sm:$0xf]
        %v2528 = vld [vmem:[%s210 + $0x34] sm:$0xf]
        %v2529 = vld [vmem:[%s210 + $0x38] sm:$0xf]
        %v2530 = vld [vmem:[%s210 + $0x3c] sm:$0xf]
        %v2531 = vld [vmem:[%s210 + $0x40] sm:$0xf]
        %v2532 = vld [vmem:[%s210 + $0x44] sm:$0xf]
        %v2533 = vld [vmem:[%s210 + $0x48] sm:$0xf]
        %v2534 = vld [vmem:[%s210 + $0x4c] sm:$0xf]
        %v2535 = vld [vmem:[%s210 + $0x50] sm:$0xf]
        %v2536 = vld [vmem:[%s210 + $0x54] sm:$0xf]
        %v2537 = vld [vmem:[%s210 + $0x58] sm:$0xf]
        %v2538 = vld [vmem:[%s210 + $0x5c] sm:$0xf]
        %v2539 = vld [vmem:[%s210 + $0x60] sm:$0xf]
        %v2540 = vld [vmem:[%s210 + $0x64] sm:$0xf]
        %v2541 = vld [vmem:[%s210 + $0x68] sm:$0xf]
        %v2542 = vld [vmem:[%s210 + $0x6c] sm:$0xf]
        %v2543 = vld [vmem:[%s210 + $0x70] sm:$0xf]
        %v2544 = vld [vmem:[%s210 + $0x74] sm:$0xf]
        %v2545 = vld [vmem:[%s210 + $0x78] sm:$0xf]
        %v2546 = vld [vmem:[%s210 + $0x7c] sm:$0xf]
        %v2547 = vld [vmem:[%s210 + $0x80] sm:$0xf]
        %v2548 = vld [vmem:[%s210 + $0x84] sm:$0xf]
        %v2549 = vld [vmem:[%s210 + $0x88] sm:$0xf]
        %v2550 = vld [vmem:[%s210 + $0x8c] sm:$0xf]
        %v2551 = vld [vmem:[%s210 + $0x90] sm:$0xf]
        %v2552 = vld [vmem:[%s210 + $0x94] sm:$0xf]
        %v2553 = vld [vmem:[%s210 + $0x98] sm:$0x3]
        %s2554 = scalar_lea.vmem %s2, 20
        %v2555 = vld [vmem:[%s2554] sm:$0xf]
        %v2593 = vunpack.c.l.b16 %v2517
        %v2594 = vunpack.c.l.b16 %v2518
        %v2595 = vunpack.c.l.b16 %v2519
        %v2596 = vunpack.c.l.b16 %v2520
        %v2597 = vunpack.c.l.b16 %v2521
        %v2598 = vunpack.c.l.b16 %v2522
        %v2599 = vunpack.c.l.b16 %v2523
        %v2600 = vunpack.c.l.b16 %v2524
        %v2601 = vunpack.c.l.b16 %v2525
        %v2602 = vunpack.c.l.b16 %v2526
        %v2603 = vunpack.c.l.b16 %v2527
        %v2604 = vunpack.c.l.b16 %v2528
        %v2605 = vunpack.c.l.b16 %v2529
        %v2606 = vunpack.c.l.b16 %v2530
        %v2607 = vunpack.c.l.b16 %v2531
        %v2608 = vunpack.c.l.b16 %v2532
        %v2609 = vunpack.c.l.b16 %v2533
        %v2610 = vunpack.c.l.b16 %v2534
        %v2611 = vunpack.c.l.b16 %v2535
        %v2612 = vunpack.c.l.b16 %v2536
        %v2613 = vunpack.c.l.b16 %v2537
        %v2614 = vunpack.c.l.b16 %v2538
        %v2615 = vunpack.c.l.b16 %v2539
        %v2616 = vunpack.c.l.b16 %v2540
        %v2617 = vunpack.c.l.b16 %v2541
        %v2618 = vunpack.c.l.b16 %v2542
        %v2619 = vunpack.c.l.b16 %v2543
        %v2620 = vunpack.c.l.b16 %v2544
        %v2621 = vunpack.c.l.b16 %v2545
        %v2622 = vunpack.c.l.b16 %v2546
        %v2623 = vunpack.c.l.b16 %v2547
        %v2624 = vunpack.c.l.b16 %v2548
        %v2625 = vunpack.c.l.b16 %v2549
        %v2626 = vunpack.c.l.b16 %v2550
        %v2627 = vunpack.c.l.b16 %v2551
        %v2628 = vunpack.c.l.b16 %v2552
        %v2629 = vunpack.c.l.b16 %v2553
        %v2630 = vpack.c.b16 %v2594, %v2593
        %v2631 = vpack.c.b16 %v2596, %v2595
        %v2632 = vpack.c.b16 %v2598, %v2597
        %v2633 = vpack.c.b16 %v2600, %v2599
        %v2634 = vpack.c.b16 %v2602, %v2601
        %v2635 = vpack.c.b16 %v2604, %v2603
        %v2636 = vpack.c.b16 %v2606, %v2605
        %v2637 = vpack.c.b16 %v2608, %v2607
        %v2638 = vpack.c.b16 %v2610, %v2609
        %v2639 = vpack.c.b16 %v2612, %v2611
        %v2640 = vpack.c.b16 %v2614, %v2613
        %v2641 = vpack.c.b16 %v2616, %v2615
        %v2642 = vpack.c.b16 %v2618, %v2617
        %v2643 = vpack.c.b16 %v2620, %v2619
        %v2644 = vpack.c.b16 %v2622, %v2621
        %v2645 = vpack.c.b16 %v2624, %v2623
        %v2646 = vpack.c.b16 %v2626, %v2625
        %v2647 = vpack.c.b16 %v2628, %v2627
        %v2648 = vpack.c.b16 %v2629, %v2629
        %vm2649 = vcmask 1045504
        %v2650 = vrot.slane %v2630, 2
        %v2651 = vrot.slane %v2631, 2
        %v2652 = vsel %vm2649, %v2650, %v2651
        %v2653 = vrot.slane %v2632, 2
        %v2654 = vsel %vm2649, %v2651, %v2653
        %v2655 = vrot.slane %v2633, 2
        %v2656 = vsel %vm2649, %v2653, %v2655
        %v2657 = vrot.slane %v2634, 2
        %v2658 = vsel %vm2649, %v2655, %v2657
        %v2659 = vrot.slane %v2635, 2
        %v2660 = vsel %vm2649, %v2657, %v2659
        %v2661 = vrot.slane %v2636, 2
        %v2662 = vsel %vm2649, %v2659, %v2661
        %v2663 = vrot.slane %v2637, 2
        %v2664 = vsel %vm2649, %v2661, %v2663
        %v2665 = vrot.slane %v2638, 2
        %v2666 = vsel %vm2649, %v2663, %v2665
        %v2667 = vrot.slane %v2639, 2
        %v2668 = vsel %vm2649, %v2665, %v2667
        %v2669 = vrot.slane %v2640, 2
        %v2670 = vsel %vm2649, %v2667, %v2669
        %v2671 = vrot.slane %v2641, 2
        %v2672 = vsel %vm2649, %v2669, %v2671
        %v2673 = vrot.slane %v2642, 2
        %v2674 = vsel %vm2649, %v2671, %v2673
        %v2675 = vrot.slane %v2643, 2
        %v2676 = vsel %vm2649, %v2673, %v2675
        %v2677 = vrot.slane %v2644, 2
        %v2678 = vsel %vm2649, %v2675, %v2677
        %v2679 = vrot.slane %v2645, 2
        %v2680 = vsel %vm2649, %v2677, %v2679
        %v2681 = vrot.slane %v2646, 2
        %v2682 = vsel %vm2649, %v2679, %v2681
        %v2683 = vrot.slane %v2647, 2
        %v2684 = vsel %vm2649, %v2681, %v2683
        %v2685 = vrot.slane %v2648, 2
        %v2686 = vsel %vm2649, %v2683, %v2685
        %v2688 = vsel %vm344, %v2652, 0
        %v2691 = vsel %vm344, %v2654, 0
        %v2694 = vsel %vm344, %v2656, 0
        %v2697 = vsel %vm344, %v2658, 0
        %v2700 = vsel %vm344, %v2660, 0
        %v2703 = vsel %vm344, %v2662, 0
        %v2706 = vsel %vm344, %v2664, 0
        %v2709 = vsel %vm344, %v2666, 0
        %v2712 = vsel %vm344, %v2668, 0
        %v2715 = vsel %vm344, %v2670, 0
        %v2718 = vsel %vm344, %v2672, 0
        %v2721 = vsel %vm344, %v2674, 0
        %v2724 = vsel %vm344, %v2676, 0
        %v2727 = vsel %vm344, %v2678, 0
        %v2730 = vsel %vm344, %v2680, 0
        %v2733 = vsel %vm344, %v2682, 0
        %v2736 = vsel %vm344, %v2684, 0
        %v2739 = vsel %vm344, %v2686, 0
        %v2742 = vsel %vm399, %v2555, 0
        %2744 = vmatpush.bf16.msra.mxu0 0
        %2745 = vmatpush.bf16.msra.mxu0 0
        %2746 = vmatpush.bf16.msra.mxu0 0
        %2747 = vmatpush.bf16.msra.mxu0 0
        %2748 = vmatpush.bf16.msra.mxu0 0
        %2749 = vmatpush.bf16.msra.mxu0 0
        %2750 = vmatpush.bf16.msra.mxu0 0
        %2751 = vmatpush.bf16.msra.mxu0 %v2742
        %2752 = vmatmul.bf16.gmra.mxu0 %v2688
        %v2753 = vpop.f32.mrf.mxu0
        %v2754 = vadd.f32 0.0, %v2753
        %v2755 = vpop.f32.mrf.mxu0
        %v2756 = vadd.f32 0.0, %v2755
        %2757 = vmatmul.bf16.gmra.mxu0 %v2691
        %v2758 = vpop.f32.mrf.mxu0
        %v2759 = vadd.f32 0.0, %v2758
        %v2760 = vpop.f32.mrf.mxu0
        %v2761 = vadd.f32 0.0, %v2760
        %2762 = vmatmul.bf16.gmra.mxu0 %v2694
        %v2763 = vpop.f32.mrf.mxu0
        %v2764 = vadd.f32 0.0, %v2763
        %v2765 = vpop.f32.mrf.mxu0
        %v2766 = vadd.f32 0.0, %v2765
        %2767 = vmatmul.bf16.gmra.mxu0 %v2697
        %v2768 = vpop.f32.mrf.mxu0
        %v2769 = vadd.f32 0.0, %v2768
        %v2770 = vpop.f32.mrf.mxu0
        %v2771 = vadd.f32 0.0, %v2770
        %2772 = vmatmul.bf16.gmra.mxu0 %v2700
        %v2773 = vpop.f32.mrf.mxu0
        %v2774 = vadd.f32 0.0, %v2773
        %v2775 = vpop.f32.mrf.mxu0
        %v2776 = vadd.f32 0.0, %v2775
        %2777 = vmatmul.bf16.gmra.mxu0 %v2703
        %v2778 = vpop.f32.mrf.mxu0
        %v2779 = vadd.f32 0.0, %v2778
        %v2780 = vpop.f32.mrf.mxu0
        %v2781 = vadd.f32 0.0, %v2780
        %2782 = vmatmul.bf16.gmra.mxu0 %v2706
        %v2783 = vpop.f32.mrf.mxu0
        %v2784 = vadd.f32 0.0, %v2783
        %v2785 = vpop.f32.mrf.mxu0
        %v2786 = vadd.f32 0.0, %v2785
        %2787 = vmatmul.bf16.gmra.mxu0 %v2709
        %v2788 = vpop.f32.mrf.mxu0
        %v2789 = vadd.f32 0.0, %v2788
        %v2790 = vpop.f32.mrf.mxu0
        %v2791 = vadd.f32 0.0, %v2790
        %2792 = vmatmul.bf16.gmra.mxu0 %v2712
        %v2793 = vpop.f32.mrf.mxu0
        %v2794 = vadd.f32 0.0, %v2793
        %v2795 = vpop.f32.mrf.mxu0
        %v2796 = vadd.f32 0.0, %v2795
        %2797 = vmatmul.bf16.gmra.mxu0 %v2715
        %v2798 = vpop.f32.mrf.mxu0
        %v2799 = vadd.f32 0.0, %v2798
        %v2800 = vpop.f32.mrf.mxu0
        %v2801 = vadd.f32 0.0, %v2800
        %2802 = vmatmul.bf16.gmra.mxu0 %v2718
        %v2803 = vpop.f32.mrf.mxu0
        %v2804 = vadd.f32 0.0, %v2803
        %v2805 = vpop.f32.mrf.mxu0
        %v2806 = vadd.f32 0.0, %v2805
        %2807 = vmatmul.bf16.gmra.mxu0 %v2721
        %v2808 = vpop.f32.mrf.mxu0
        %v2809 = vadd.f32 0.0, %v2808
        %v2810 = vpop.f32.mrf.mxu0
        %v2811 = vadd.f32 0.0, %v2810
        %2812 = vmatmul.bf16.gmra.mxu0 %v2724
        %v2813 = vpop.f32.mrf.mxu0
        %v2814 = vadd.f32 0.0, %v2813
        %v2815 = vpop.f32.mrf.mxu0
        %v2816 = vadd.f32 0.0, %v2815
        %2817 = vmatmul.bf16.gmra.mxu0 %v2727
        %v2818 = vpop.f32.mrf.mxu0
        %v2819 = vadd.f32 0.0, %v2818
        %v2820 = vpop.f32.mrf.mxu0
        %v2821 = vadd.f32 0.0, %v2820
        %2822 = vmatmul.bf16.gmra.mxu0 %v2730
        %v2823 = vpop.f32.mrf.mxu0
        %v2824 = vadd.f32 0.0, %v2823
        %v2825 = vpop.f32.mrf.mxu0
        %v2826 = vadd.f32 0.0, %v2825
        %2827 = vmatmul.bf16.gmra.mxu0 %v2733
        %v2828 = vpop.f32.mrf.mxu0
        %v2829 = vadd.f32 0.0, %v2828
        %v2830 = vpop.f32.mrf.mxu0
        %v2831 = vadd.f32 0.0, %v2830
        %2832 = vmatmul.bf16.gmra.mxu0 %v2736
        %v2833 = vpop.f32.mrf.mxu0
        %v2834 = vadd.f32 0.0, %v2833
        %v2835 = vpop.f32.mrf.mxu0
        %v2836 = vadd.f32 0.0, %v2835
        %2837 = vmatmul.bf16.gmra.mxu0 %v2739
        %v2838 = vpop.f32.mrf.mxu0
        %v2839 = vadd.f32 0.0, %v2838
        %v2840 = vpop.f32.mrf.mxu0
        %v2841 = vadd.f32 0.0, %v2840
        %2842 = vdwg.mxu0
        %v2843 = vld [vmem:[%s205] sm:$0xff]
        %v2844 = vld [vmem:[%s205 + $0x8] sm:$0xff]
        %v2845 = vld [vmem:[%s205 + $0x10] sm:$0xff]
        %v2846 = vld [vmem:[%s205 + $0x18] sm:$0xff]
        %v2847 = vld [vmem:[%s205 + $0x20] sm:$0xff]
        %v2848 = vld [vmem:[%s205 + $0x28] sm:$0xff]
        %v2849 = vld [vmem:[%s205 + $0x30] sm:$0xff]
        %v2850 = vld [vmem:[%s205 + $0x38] sm:$0xff]
        %v2851 = vld [vmem:[%s205 + $0x40] sm:$0xff]
        %v2852 = vld [vmem:[%s205 + $0x48] sm:$0xff]
        %v2853 = vld [vmem:[%s205 + $0x50] sm:$0xff]
        %v2854 = vld [vmem:[%s205 + $0x58] sm:$0xff]
        %v2855 = vld [vmem:[%s205 + $0x60] sm:$0xff]
        %v2856 = vld [vmem:[%s205 + $0x68] sm:$0xff]
        %v2857 = vld [vmem:[%s205 + $0x70] sm:$0xff]
        %v2858 = vld [vmem:[%s205 + $0x78] sm:$0xff]
        %v2859 = vld [vmem:[%s205 + $0x80] sm:$0xff]
        %v2860 = vld [vmem:[%s205 + $0x88] sm:$0xff]
        %v2861 = vld [vmem:[%s205 + $0x90] sm:$0xff]
        %v2862 = vld [vmem:[%s205 + $0x98] sm:$0xff]
        %v2863 = vld [vmem:[%s205 + $0xa0] sm:$0xff]
        %v2864 = vld [vmem:[%s205 + $0xa8] sm:$0xff]
        %v2865 = vld [vmem:[%s205 + $0xb0] sm:$0xff]
        %v2866 = vld [vmem:[%s205 + $0xb8] sm:$0xff]
        %v2867 = vld [vmem:[%s205 + $0xc0] sm:$0xff]
        %v2868 = vld [vmem:[%s205 + $0xc8] sm:$0xff]
        %v2869 = vld [vmem:[%s205 + $0xd0] sm:$0xff]
        %v2870 = vld [vmem:[%s205 + $0xd8] sm:$0xff]
        %v2871 = vld [vmem:[%s205 + $0xe0] sm:$0xff]
        %v2872 = vld [vmem:[%s205 + $0xe8] sm:$0xff]
        %v2873 = vld [vmem:[%s205 + $0xf0] sm:$0xff]
        %v2874 = vld [vmem:[%s205 + $0xf8] sm:$0xff]
        %v2875 = vld [vmem:[%s205 + $0x100] sm:$0xff]
        %v2876 = vld [vmem:[%s205 + $0x108] sm:$0xff]
        %v2877 = vld [vmem:[%s205 + $0x110] sm:$0xff]
        %v2878 = vld [vmem:[%s205 + $0x118] sm:$0xff]
        %v2879 = vadd.f32 %v2843, %v2754
        %v2880 = vadd.f32 %v2844, %v2756
        %v2881 = vadd.f32 %v2845, %v2759
        %v2882 = vadd.f32 %v2846, %v2761
        %v2883 = vadd.f32 %v2847, %v2764
        %v2884 = vadd.f32 %v2848, %v2766
        %v2885 = vadd.f32 %v2849, %v2769
        %v2886 = vadd.f32 %v2850, %v2771
        %v2887 = vadd.f32 %v2851, %v2774
        %v2888 = vadd.f32 %v2852, %v2776
        %v2889 = vadd.f32 %v2853, %v2779
        %v2890 = vadd.f32 %v2854, %v2781
        %v2891 = vadd.f32 %v2855, %v2784
        %v2892 = vadd.f32 %v2856, %v2786
        %v2893 = vadd.f32 %v2857, %v2789
        %v2894 = vadd.f32 %v2858, %v2791
        %v2895 = vadd.f32 %v2859, %v2794
        %v2896 = vadd.f32 %v2860, %v2796
        %v2897 = vadd.f32 %v2861, %v2799
        %v2898 = vadd.f32 %v2862, %v2801
        %v2899 = vadd.f32 %v2863, %v2804
        %v2900 = vadd.f32 %v2864, %v2806
        %v2901 = vadd.f32 %v2865, %v2809
        %v2902 = vadd.f32 %v2866, %v2811
        %v2903 = vadd.f32 %v2867, %v2814
        %v2904 = vadd.f32 %v2868, %v2816
        %v2905 = vadd.f32 %v2869, %v2819
        %v2906 = vadd.f32 %v2870, %v2821
        %v2907 = vadd.f32 %v2871, %v2824
        %v2908 = vadd.f32 %v2872, %v2826
        %v2909 = vadd.f32 %v2873, %v2829
        %v2910 = vadd.f32 %v2874, %v2831
        %v2911 = vadd.f32 %v2875, %v2834
        %v2912 = vadd.f32 %v2876, %v2836
        %v2913 = vadd.f32 %v2877, %v2839
        %v2914 = vadd.f32 %v2878, %v2841
        %2915 = vst [vmem:[%s205] sm:$0xff] %v2879
        %2916 = vst [vmem:[%s205 + $0x8] sm:$0xff] %v2880
        %2917 = vst [vmem:[%s205 + $0x10] sm:$0xff] %v2881
        %2918 = vst [vmem:[%s205 + $0x18] sm:$0xff] %v2882
        %2919 = vst [vmem:[%s205 + $0x20] sm:$0xff] %v2883
        %2920 = vst [vmem:[%s205 + $0x28] sm:$0xff] %v2884
        %2921 = vst [vmem:[%s205 + $0x30] sm:$0xff] %v2885
        %2922 = vst [vmem:[%s205 + $0x38] sm:$0xff] %v2886
        %2923 = vst [vmem:[%s205 + $0x40] sm:$0xff] %v2887
        %2924 = vst [vmem:[%s205 + $0x48] sm:$0xff] %v2888
        %2925 = vst [vmem:[%s205 + $0x50] sm:$0xff] %v2889
        %2926 = vst [vmem:[%s205 + $0x58] sm:$0xff] %v2890
        %2927 = vst [vmem:[%s205 + $0x60] sm:$0xff] %v2891
        %2928 = vst [vmem:[%s205 + $0x68] sm:$0xff] %v2892
        %2929 = vst [vmem:[%s205 + $0x70] sm:$0xff] %v2893
        %2930 = vst [vmem:[%s205 + $0x78] sm:$0xff] %v2894
        %2931 = vst [vmem:[%s205 + $0x80] sm:$0xff] %v2895
        %2932 = vst [vmem:[%s205 + $0x88] sm:$0xff] %v2896
        %2933 = vst [vmem:[%s205 + $0x90] sm:$0xff] %v2897
        %2934 = vst [vmem:[%s205 + $0x98] sm:$0xff] %v2898
        %2935 = vst [vmem:[%s205 + $0xa0] sm:$0xff] %v2899
        %2936 = vst [vmem:[%s205 + $0xa8] sm:$0xff] %v2900
        %2937 = vst [vmem:[%s205 + $0xb0] sm:$0xff] %v2901
        %2938 = vst [vmem:[%s205 + $0xb8] sm:$0xff] %v2902
        %2939 = vst [vmem:[%s205 + $0xc0] sm:$0xff] %v2903
        %2940 = vst [vmem:[%s205 + $0xc8] sm:$0xff] %v2904
        %2941 = vst [vmem:[%s205 + $0xd0] sm:$0xff] %v2905
        %2942 = vst [vmem:[%s205 + $0xd8] sm:$0xff] %v2906
        %2943 = vst [vmem:[%s205 + $0xe0] sm:$0xff] %v2907
        %2944 = vst [vmem:[%s205 + $0xe8] sm:$0xff] %v2908
        %2945 = vst [vmem:[%s205 + $0xf0] sm:$0xff] %v2909
        %2946 = vst [vmem:[%s205 + $0xf8] sm:$0xff] %v2910
        %2947 = vst [vmem:[%s205 + $0x100] sm:$0xff] %v2911
        %2948 = vst [vmem:[%s205 + $0x108] sm:$0xff] %v2912
        %2949 = vst [vmem:[%s205 + $0x110] sm:$0xff] %v2913
        %2950 = vst [vmem:[%s205 + $0x118] sm:$0xff] %v2914
        %v2951 = vld [vmem:[%s210 + $0x10] sm:$0xc]
        %v2952 = vld [vmem:[%s210 + $0x14] sm:$0xf]
        %v2953 = vld [vmem:[%s210 + $0x18] sm:$0xf]
        %v2954 = vld [vmem:[%s210 + $0x1c] sm:$0xf]
        %v2955 = vld [vmem:[%s210 + $0x20] sm:$0xf]
        %v2956 = vld [vmem:[%s210 + $0x24] sm:$0xf]
        %v2957 = vld [vmem:[%s210 + $0x28] sm:$0xf]
        %v2958 = vld [vmem:[%s210 + $0x2c] sm:$0xf]
        %v2959 = vld [vmem:[%s210 + $0x30] sm:$0xf]
        %v2960 = vld [vmem:[%s210 + $0x34] sm:$0xf]
        %v2961 = vld [vmem:[%s210 + $0x38] sm:$0xf]
        %v2962 = vld [vmem:[%s210 + $0x3c] sm:$0xf]
        %v2963 = vld [vmem:[%s210 + $0x40] sm:$0xf]
        %v2964 = vld [vmem:[%s210 + $0x44] sm:$0xf]
        %v2965 = vld [vmem:[%s210 + $0x48] sm:$0xf]
        %v2966 = vld [vmem:[%s210 + $0x4c] sm:$0xf]
        %v2967 = vld [vmem:[%s210 + $0x50] sm:$0xf]
        %v2968 = vld [vmem:[%s210 + $0x54] sm:$0xf]
        %v2969 = vld [vmem:[%s210 + $0x58] sm:$0xf]
        %v2970 = vld [vmem:[%s210 + $0x5c] sm:$0xf]
        %v2971 = vld [vmem:[%s210 + $0x60] sm:$0xf]
        %v2972 = vld [vmem:[%s210 + $0x64] sm:$0xf]
        %v2973 = vld [vmem:[%s210 + $0x68] sm:$0xf]
        %v2974 = vld [vmem:[%s210 + $0x6c] sm:$0xf]
        %v2975 = vld [vmem:[%s210 + $0x70] sm:$0xf]
        %v2976 = vld [vmem:[%s210 + $0x74] sm:$0xf]
        %v2977 = vld [vmem:[%s210 + $0x78] sm:$0xf]
        %v2978 = vld [vmem:[%s210 + $0x7c] sm:$0xf]
        %v2979 = vld [vmem:[%s210 + $0x80] sm:$0xf]
        %v2980 = vld [vmem:[%s210 + $0x84] sm:$0xf]
        %v2981 = vld [vmem:[%s210 + $0x88] sm:$0xf]
        %v2982 = vld [vmem:[%s210 + $0x8c] sm:$0xf]
        %v2983 = vld [vmem:[%s210 + $0x90] sm:$0xf]
        %v2984 = vld [vmem:[%s210 + $0x94] sm:$0xf]
        %v2985 = vld [vmem:[%s210 + $0x98] sm:$0xf]
        %v2986 = vld [vmem:[%s210 + $0x9c] sm:$0xf]
        %v2987 = vld [vmem:[%s210 + $0xa0] sm:$0x3]
        %s2988 = scalar_lea.vmem %s2, 24
        %v2989 = vld [vmem:[%s2988] sm:$0xf]
        %v3027 = vunpack.c.l.b16 %v2951
        %v3028 = vunpack.c.l.b16 %v2952
        %v3029 = vunpack.c.l.b16 %v2953
        %v3030 = vunpack.c.l.b16 %v2954
        %v3031 = vunpack.c.l.b16 %v2955
        %v3032 = vunpack.c.l.b16 %v2956
        %v3033 = vunpack.c.l.b16 %v2957
        %v3034 = vunpack.c.l.b16 %v2958
        %v3035 = vunpack.c.l.b16 %v2959
        %v3036 = vunpack.c.l.b16 %v2960
        %v3037 = vunpack.c.l.b16 %v2961
        %v3038 = vunpack.c.l.b16 %v2962
        %v3039 = vunpack.c.l.b16 %v2963
        %v3040 = vunpack.c.l.b16 %v2964
        %v3041 = vunpack.c.l.b16 %v2965
        %v3042 = vunpack.c.l.b16 %v2966
        %v3043 = vunpack.c.l.b16 %v2967
        %v3044 = vunpack.c.l.b16 %v2968
        %v3045 = vunpack.c.l.b16 %v2969
        %v3046 = vunpack.c.l.b16 %v2970
        %v3047 = vunpack.c.l.b16 %v2971
        %v3048 = vunpack.c.l.b16 %v2972
        %v3049 = vunpack.c.l.b16 %v2973
        %v3050 = vunpack.c.l.b16 %v2974
        %v3051 = vunpack.c.l.b16 %v2975
        %v3052 = vunpack.c.l.b16 %v2976
        %v3053 = vunpack.c.l.b16 %v2977
        %v3054 = vunpack.c.l.b16 %v2978
        %v3055 = vunpack.c.l.b16 %v2979
        %v3056 = vunpack.c.l.b16 %v2980
        %v3057 = vunpack.c.l.b16 %v2981
        %v3058 = vunpack.c.l.b16 %v2982
        %v3059 = vunpack.c.l.b16 %v2983
        %v3060 = vunpack.c.l.b16 %v2984
        %v3061 = vunpack.c.l.b16 %v2985
        %v3062 = vunpack.c.l.b16 %v2986
        %v3063 = vunpack.c.l.b16 %v2987
        %v3064 = vpack.c.b16 %v3028, %v3027
        %v3065 = vpack.c.b16 %v3030, %v3029
        %v3066 = vpack.c.b16 %v3032, %v3031
        %v3067 = vpack.c.b16 %v3034, %v3033
        %v3068 = vpack.c.b16 %v3036, %v3035
        %v3069 = vpack.c.b16 %v3038, %v3037
        %v3070 = vpack.c.b16 %v3040, %v3039
        %v3071 = vpack.c.b16 %v3042, %v3041
        %v3072 = vpack.c.b16 %v3044, %v3043
        %v3073 = vpack.c.b16 %v3046, %v3045
        %v3074 = vpack.c.b16 %v3048, %v3047
        %v3075 = vpack.c.b16 %v3050, %v3049
        %v3076 = vpack.c.b16 %v3052, %v3051
        %v3077 = vpack.c.b16 %v3054, %v3053
        %v3078 = vpack.c.b16 %v3056, %v3055
        %v3079 = vpack.c.b16 %v3058, %v3057
        %v3080 = vpack.c.b16 %v3060, %v3059
        %v3081 = vpack.c.b16 %v3062, %v3061
        %v3082 = vpack.c.b16 %v3063, %v3063
        %v3083 = vrot.slane %v3064, 2
        %v3084 = vrot.slane %v3065, 2
        %v3085 = vsel %vm2649, %v3083, %v3084
        %v3086 = vrot.slane %v3066, 2
        %v3087 = vsel %vm2649, %v3084, %v3086
        %v3088 = vrot.slane %v3067, 2
        %v3089 = vsel %vm2649, %v3086, %v3088
        %v3090 = vrot.slane %v3068, 2
        %v3091 = vsel %vm2649, %v3088, %v3090
        %v3092 = vrot.slane %v3069, 2
        %v3093 = vsel %vm2649, %v3090, %v3092
        %v3094 = vrot.slane %v3070, 2
        %v3095 = vsel %vm2649, %v3092, %v3094
        %v3096 = vrot.slane %v3071, 2
        %v3097 = vsel %vm2649, %v3094, %v3096
        %v3098 = vrot.slane %v3072, 2
        %v3099 = vsel %vm2649, %v3096, %v3098
        %v3100 = vrot.slane %v3073, 2
        %v3101 = vsel %vm2649, %v3098, %v3100
        %v3102 = vrot.slane %v3074, 2
        %v3103 = vsel %vm2649, %v3100, %v3102
        %v3104 = vrot.slane %v3075, 2
        %v3105 = vsel %vm2649, %v3102, %v3104
        %v3106 = vrot.slane %v3076, 2
        %v3107 = vsel %vm2649, %v3104, %v3106
        %v3108 = vrot.slane %v3077, 2
        %v3109 = vsel %vm2649, %v3106, %v3108
        %v3110 = vrot.slane %v3078, 2
        %v3111 = vsel %vm2649, %v3108, %v3110
        %v3112 = vrot.slane %v3079, 2
        %v3113 = vsel %vm2649, %v3110, %v3112
        %v3114 = vrot.slane %v3080, 2
        %v3115 = vsel %vm2649, %v3112, %v3114
        %v3116 = vrot.slane %v3081, 2
        %v3117 = vsel %vm2649, %v3114, %v3116
        %v3118 = vrot.slane %v3082, 2
        %v3119 = vsel %vm2649, %v3116, %v3118
        %v3121 = vsel %vm344, %v3085, 0
        %v3124 = vsel %vm344, %v3087, 0
        %v3127 = vsel %vm344, %v3089, 0
        %v3130 = vsel %vm344, %v3091, 0
        %v3133 = vsel %vm344, %v3093, 0
        %v3136 = vsel %vm344, %v3095, 0
        %v3139 = vsel %vm344, %v3097, 0
        %v3142 = vsel %vm344, %v3099, 0
        %v3145 = vsel %vm344, %v3101, 0
        %v3148 = vsel %vm344, %v3103, 0
        %v3151 = vsel %vm344, %v3105, 0
        %v3154 = vsel %vm344, %v3107, 0
        %v3157 = vsel %vm344, %v3109, 0
        %v3160 = vsel %vm344, %v3111, 0
        %v3163 = vsel %vm344, %v3113, 0
        %v3166 = vsel %vm344, %v3115, 0
        %v3169 = vsel %vm344, %v3117, 0
        %v3172 = vsel %vm344, %v3119, 0
        %v3175 = vsel %vm399, %v2989, 0
        %3177 = vmatpush.bf16.msra.mxu0 0
        %3178 = vmatpush.bf16.msra.mxu0 0
        %3179 = vmatpush.bf16.msra.mxu0 0
        %3180 = vmatpush.bf16.msra.mxu0 0
        %3181 = vmatpush.bf16.msra.mxu0 0
        %3182 = vmatpush.bf16.msra.mxu0 0
        %3183 = vmatpush.bf16.msra.mxu0 0
        %3184 = vmatpush.bf16.msra.mxu0 %v3175
        %3185 = vmatmul.bf16.gmra.mxu0 %v3121
        %v3186 = vpop.f32.mrf.mxu0
        %v3187 = vadd.f32 0.0, %v3186
        %v3188 = vpop.f32.mrf.mxu0
        %v3189 = vadd.f32 0.0, %v3188
        %3190 = vmatmul.bf16.gmra.mxu0 %v3124
        %v3191 = vpop.f32.mrf.mxu0
        %v3192 = vadd.f32 0.0, %v3191
        %v3193 = vpop.f32.mrf.mxu0
        %v3194 = vadd.f32 0.0, %v3193
        %3195 = vmatmul.bf16.gmra.mxu0 %v3127
        %v3196 = vpop.f32.mrf.mxu0
        %v3197 = vadd.f32 0.0, %v3196
        %v3198 = vpop.f32.mrf.mxu0
        %v3199 = vadd.f32 0.0, %v3198
        %3200 = vmatmul.bf16.gmra.mxu0 %v3130
        %v3201 = vpop.f32.mrf.mxu0
        %v3202 = vadd.f32 0.0, %v3201
        %v3203 = vpop.f32.mrf.mxu0
        %v3204 = vadd.f32 0.0, %v3203
        %3205 = vmatmul.bf16.gmra.mxu0 %v3133
        %v3206 = vpop.f32.mrf.mxu0
        %v3207 = vadd.f32 0.0, %v3206
        %v3208 = vpop.f32.mrf.mxu0
        %v3209 = vadd.f32 0.0, %v3208
        %3210 = vmatmul.bf16.gmra.mxu0 %v3136
        %v3211 = vpop.f32.mrf.mxu0
        %v3212 = vadd.f32 0.0, %v3211
        %v3213 = vpop.f32.mrf.mxu0
        %v3214 = vadd.f32 0.0, %v3213
        %3215 = vmatmul.bf16.gmra.mxu0 %v3139
        %v3216 = vpop.f32.mrf.mxu0
        %v3217 = vadd.f32 0.0, %v3216
        %v3218 = vpop.f32.mrf.mxu0
        %v3219 = vadd.f32 0.0, %v3218
        %3220 = vmatmul.bf16.gmra.mxu0 %v3142
        %v3221 = vpop.f32.mrf.mxu0
        %v3222 = vadd.f32 0.0, %v3221
        %v3223 = vpop.f32.mrf.mxu0
        %v3224 = vadd.f32 0.0, %v3223
        %3225 = vmatmul.bf16.gmra.mxu0 %v3145
        %v3226 = vpop.f32.mrf.mxu0
        %v3227 = vadd.f32 0.0, %v3226
        %v3228 = vpop.f32.mrf.mxu0
        %v3229 = vadd.f32 0.0, %v3228
        %3230 = vmatmul.bf16.gmra.mxu0 %v3148
        %v3231 = vpop.f32.mrf.mxu0
        %v3232 = vadd.f32 0.0, %v3231
        %v3233 = vpop.f32.mrf.mxu0
        %v3234 = vadd.f32 0.0, %v3233
        %3235 = vmatmul.bf16.gmra.mxu0 %v3151
        %v3236 = vpop.f32.mrf.mxu0
        %v3237 = vadd.f32 0.0, %v3236
        %v3238 = vpop.f32.mrf.mxu0
        %v3239 = vadd.f32 0.0, %v3238
        %3240 = vmatmul.bf16.gmra.mxu0 %v3154
        %v3241 = vpop.f32.mrf.mxu0
        %v3242 = vadd.f32 0.0, %v3241
        %v3243 = vpop.f32.mrf.mxu0
        %v3244 = vadd.f32 0.0, %v3243
        %3245 = vmatmul.bf16.gmra.mxu0 %v3157
        %v3246 = vpop.f32.mrf.mxu0
        %v3247 = vadd.f32 0.0, %v3246
        %v3248 = vpop.f32.mrf.mxu0
        %v3249 = vadd.f32 0.0, %v3248
        %3250 = vmatmul.bf16.gmra.mxu0 %v3160
        %v3251 = vpop.f32.mrf.mxu0
        %v3252 = vadd.f32 0.0, %v3251
        %v3253 = vpop.f32.mrf.mxu0
        %v3254 = vadd.f32 0.0, %v3253
        %3255 = vmatmul.bf16.gmra.mxu0 %v3163
        %v3256 = vpop.f32.mrf.mxu0
        %v3257 = vadd.f32 0.0, %v3256
        %v3258 = vpop.f32.mrf.mxu0
        %v3259 = vadd.f32 0.0, %v3258
        %3260 = vmatmul.bf16.gmra.mxu0 %v3166
        %v3261 = vpop.f32.mrf.mxu0
        %v3262 = vadd.f32 0.0, %v3261
        %v3263 = vpop.f32.mrf.mxu0
        %v3264 = vadd.f32 0.0, %v3263
        %3265 = vmatmul.bf16.gmra.mxu0 %v3169
        %v3266 = vpop.f32.mrf.mxu0
        %v3267 = vadd.f32 0.0, %v3266
        %v3268 = vpop.f32.mrf.mxu0
        %v3269 = vadd.f32 0.0, %v3268
        %3270 = vmatmul.bf16.gmra.mxu0 %v3172
        %v3271 = vpop.f32.mrf.mxu0
        %v3272 = vadd.f32 0.0, %v3271
        %v3273 = vpop.f32.mrf.mxu0
        %v3274 = vadd.f32 0.0, %v3273
        %3275 = vdwg.mxu0
        %v3276 = vld [vmem:[%s205] sm:$0xff]
        %v3277 = vld [vmem:[%s205 + $0x8] sm:$0xff]
        %v3278 = vld [vmem:[%s205 + $0x10] sm:$0xff]
        %v3279 = vld [vmem:[%s205 + $0x18] sm:$0xff]
        %v3280 = vld [vmem:[%s205 + $0x20] sm:$0xff]
        %v3281 = vld [vmem:[%s205 + $0x28] sm:$0xff]
        %v3282 = vld [vmem:[%s205 + $0x30] sm:$0xff]
        %v3283 = vld [vmem:[%s205 + $0x38] sm:$0xff]
        %v3284 = vld [vmem:[%s205 + $0x40] sm:$0xff]
        %v3285 = vld [vmem:[%s205 + $0x48] sm:$0xff]
        %v3286 = vld [vmem:[%s205 + $0x50] sm:$0xff]
        %v3287 = vld [vmem:[%s205 + $0x58] sm:$0xff]
        %v3288 = vld [vmem:[%s205 + $0x60] sm:$0xff]
        %v3289 = vld [vmem:[%s205 + $0x68] sm:$0xff]
        %v3290 = vld [vmem:[%s205 + $0x70] sm:$0xff]
        %v3291 = vld [vmem:[%s205 + $0x78] sm:$0xff]
        %v3292 = vld [vmem:[%s205 + $0x80] sm:$0xff]
        %v3293 = vld [vmem:[%s205 + $0x88] sm:$0xff]
        %v3294 = vld [vmem:[%s205 + $0x90] sm:$0xff]
        %v3295 = vld [vmem:[%s205 + $0x98] sm:$0xff]
        %v3296 = vld [vmem:[%s205 + $0xa0] sm:$0xff]
        %v3297 = vld [vmem:[%s205 + $0xa8] sm:$0xff]
        %v3298 = vld [vmem:[%s205 + $0xb0] sm:$0xff]
        %v3299 = vld [vmem:[%s205 + $0xb8] sm:$0xff]
        %v3300 = vld [vmem:[%s205 + $0xc0] sm:$0xff]
        %v3301 = vld [vmem:[%s205 + $0xc8] sm:$0xff]
        %v3302 = vld [vmem:[%s205 + $0xd0] sm:$0xff]
        %v3303 = vld [vmem:[%s205 + $0xd8] sm:$0xff]
        %v3304 = vld [vmem:[%s205 + $0xe0] sm:$0xff]
        %v3305 = vld [vmem:[%s205 + $0xe8] sm:$0xff]
        %v3306 = vld [vmem:[%s205 + $0xf0] sm:$0xff]
        %v3307 = vld [vmem:[%s205 + $0xf8] sm:$0xff]
        %v3308 = vld [vmem:[%s205 + $0x100] sm:$0xff]
        %v3309 = vld [vmem:[%s205 + $0x108] sm:$0xff]
        %v3310 = vld [vmem:[%s205 + $0x110] sm:$0xff]
        %v3311 = vld [vmem:[%s205 + $0x118] sm:$0xff]
        %v3312 = vadd.f32 %v3276, %v3187
        %v3313 = vadd.f32 %v3277, %v3189
        %v3314 = vadd.f32 %v3278, %v3192
        %v3315 = vadd.f32 %v3279, %v3194
        %v3316 = vadd.f32 %v3280, %v3197
        %v3317 = vadd.f32 %v3281, %v3199
        %v3318 = vadd.f32 %v3282, %v3202
        %v3319 = vadd.f32 %v3283, %v3204
        %v3320 = vadd.f32 %v3284, %v3207
        %v3321 = vadd.f32 %v3285, %v3209
        %v3322 = vadd.f32 %v3286, %v3212
        %v3323 = vadd.f32 %v3287, %v3214
        %v3324 = vadd.f32 %v3288, %v3217
        %v3325 = vadd.f32 %v3289, %v3219
        %v3326 = vadd.f32 %v3290, %v3222
        %v3327 = vadd.f32 %v3291, %v3224
        %v3328 = vadd.f32 %v3292, %v3227
        %v3329 = vadd.f32 %v3293, %v3229
        %v3330 = vadd.f32 %v3294, %v3232
        %v3331 = vadd.f32 %v3295, %v3234
        %v3332 = vadd.f32 %v3296, %v3237
        %v3333 = vadd.f32 %v3297, %v3239
        %v3334 = vadd.f32 %v3298, %v3242
        %v3335 = vadd.f32 %v3299, %v3244
        %v3336 = vadd.f32 %v3300, %v3247
        %v3337 = vadd.f32 %v3301, %v3249
        %v3338 = vadd.f32 %v3302, %v3252
        %v3339 = vadd.f32 %v3303, %v3254
        %v3340 = vadd.f32 %v3304, %v3257
        %v3341 = vadd.f32 %v3305, %v3259
        %v3342 = vadd.f32 %v3306, %v3262
        %v3343 = vadd.f32 %v3307, %v3264
        %v3344 = vadd.f32 %v3308, %v3267
        %v3345 = vadd.f32 %v3309, %v3269
        %v3346 = vadd.f32 %v3310, %v3272
        %v3347 = vadd.f32 %v3311, %v3274
        %3348 = vst [vmem:[%s205] sm:$0xff] %v3312
        %3349 = vst [vmem:[%s205 + $0x8] sm:$0xff] %v3313
        %3350 = vst [vmem:[%s205 + $0x10] sm:$0xff] %v3314
        %3351 = vst [vmem:[%s205 + $0x18] sm:$0xff] %v3315
        %3352 = vst [vmem:[%s205 + $0x20] sm:$0xff] %v3316
        %3353 = vst [vmem:[%s205 + $0x28] sm:$0xff] %v3317
        %3354 = vst [vmem:[%s205 + $0x30] sm:$0xff] %v3318
        %3355 = vst [vmem:[%s205 + $0x38] sm:$0xff] %v3319
        %3356 = vst [vmem:[%s205 + $0x40] sm:$0xff] %v3320
        %3357 = vst [vmem:[%s205 + $0x48] sm:$0xff] %v3321
        %3358 = vst [vmem:[%s205 + $0x50] sm:$0xff] %v3322
        %3359 = vst [vmem:[%s205 + $0x58] sm:$0xff] %v3323
        %3360 = vst [vmem:[%s205 + $0x60] sm:$0xff] %v3324
        %3361 = vst [vmem:[%s205 + $0x68] sm:$0xff] %v3325
        %3362 = vst [vmem:[%s205 + $0x70] sm:$0xff] %v3326
        %3363 = vst [vmem:[%s205 + $0x78] sm:$0xff] %v3327
        %3364 = vst [vmem:[%s205 + $0x80] sm:$0xff] %v3328
        %3365 = vst [vmem:[%s205 + $0x88] sm:$0xff] %v3329
        %3366 = vst [vmem:[%s205 + $0x90] sm:$0xff] %v3330
        %3367 = vst [vmem:[%s205 + $0x98] sm:$0xff] %v3331
        %3368 = vst [vmem:[%s205 + $0xa0] sm:$0xff] %v3332
        %3369 = vst [vmem:[%s205 + $0xa8] sm:$0xff] %v3333
        %3370 = vst [vmem:[%s205 + $0xb0] sm:$0xff] %v3334
        %3371 = vst [vmem:[%s205 + $0xb8] sm:$0xff] %v3335
        %3372 = vst [vmem:[%s205 + $0xc0] sm:$0xff] %v3336
        %3373 = vst [vmem:[%s205 + $0xc8] sm:$0xff] %v3337
        %3374 = vst [vmem:[%s205 + $0xd0] sm:$0xff] %v3338
        %3375 = vst [vmem:[%s205 + $0xd8] sm:$0xff] %v3339
        %3376 = vst [vmem:[%s205 + $0xe0] sm:$0xff] %v3340
        %3377 = vst [vmem:[%s205 + $0xe8] sm:$0xff] %v3341
        %3378 = vst [vmem:[%s205 + $0xf0] sm:$0xff] %v3342
        %3379 = vst [vmem:[%s205 + $0xf8] sm:$0xff] %v3343
        %3380 = vst [vmem:[%s205 + $0x100] sm:$0xff] %v3344
        %3381 = vst [vmem:[%s205 + $0x108] sm:$0xff] %v3345
        %3382 = vst [vmem:[%s205 + $0x110] sm:$0xff] %v3346
        %3383 = vst [vmem:[%s205 + $0x118] sm:$0xff] %v3347
        %v3384 = vld [vmem:[%s210 + $0x10] sm:$0xc]
        %v3385 = vld [vmem:[%s210 + $0x14] sm:$0xf]
        %v3386 = vld [vmem:[%s210 + $0x18] sm:$0xf]
        %v3387 = vld [vmem:[%s210 + $0x1c] sm:$0xf]
        %v3388 = vld [vmem:[%s210 + $0x20] sm:$0xf]
        %v3389 = vld [vmem:[%s210 + $0x24] sm:$0xf]
        %v3390 = vld [vmem:[%s210 + $0x28] sm:$0xf]
        %v3391 = vld [vmem:[%s210 + $0x2c] sm:$0xf]
        %v3392 = vld [vmem:[%s210 + $0x30] sm:$0xf]
        %v3393 = vld [vmem:[%s210 + $0x34] sm:$0xf]
        %v3394 = vld [vmem:[%s210 + $0x38] sm:$0xf]
        %v3395 = vld [vmem:[%s210 + $0x3c] sm:$0xf]
        %v3396 = vld [vmem:[%s210 + $0x40] sm:$0xf]
        %v3397 = vld [vmem:[%s210 + $0x44] sm:$0xf]
        %v3398 = vld [vmem:[%s210 + $0x48] sm:$0xf]
        %v3399 = vld [vmem:[%s210 + $0x4c] sm:$0xf]
        %v3400 = vld [vmem:[%s210 + $0x50] sm:$0xf]
        %v3401 = vld [vmem:[%s210 + $0x54] sm:$0xf]
        %v3402 = vld [vmem:[%s210 + $0x58] sm:$0xf]
        %v3403 = vld [vmem:[%s210 + $0x5c] sm:$0xf]
        %v3404 = vld [vmem:[%s210 + $0x60] sm:$0xf]
        %v3405 = vld [vmem:[%s210 + $0x64] sm:$0xf]
        %v3406 = vld [vmem:[%s210 + $0x68] sm:$0xf]
        %v3407 = vld [vmem:[%s210 + $0x6c] sm:$0xf]
        %v3408 = vld [vmem:[%s210 + $0x70] sm:$0xf]
        %v3409 = vld [vmem:[%s210 + $0x74] sm:$0xf]
        %v3410 = vld [vmem:[%s210 + $0x78] sm:$0xf]
        %v3411 = vld [vmem:[%s210 + $0x7c] sm:$0xf]
        %v3412 = vld [vmem:[%s210 + $0x80] sm:$0xf]
        %v3413 = vld [vmem:[%s210 + $0x84] sm:$0xf]
        %v3414 = vld [vmem:[%s210 + $0x88] sm:$0xf]
        %v3415 = vld [vmem:[%s210 + $0x8c] sm:$0xf]
        %v3416 = vld [vmem:[%s210 + $0x90] sm:$0xf]
        %v3417 = vld [vmem:[%s210 + $0x94] sm:$0xf]
        %v3418 = vld [vmem:[%s210 + $0x98] sm:$0xf]
        %v3419 = vld [vmem:[%s210 + $0x9c] sm:$0xf]
        %v3420 = vld [vmem:[%s210 + $0xa0] sm:$0x7]
        %s3421 = scalar_lea.vmem %s2, 28
        %v3422 = vld [vmem:[%s3421] sm:$0xf]
        %v3460 = vunpack.c.l.b16 %v3384
        %v3461 = vunpack.c.l.b16 %v3385
        %v3462 = vunpack.c.l.b16 %v3386
        %v3463 = vunpack.c.l.b16 %v3387
        %v3464 = vunpack.c.l.b16 %v3388
        %v3465 = vunpack.c.l.b16 %v3389
        %v3466 = vunpack.c.l.b16 %v3390
        %v3467 = vunpack.c.l.b16 %v3391
        %v3468 = vunpack.c.l.b16 %v3392
        %v3469 = vunpack.c.l.b16 %v3393
        %v3470 = vunpack.c.l.b16 %v3394
        %v3471 = vunpack.c.l.b16 %v3395
        %v3472 = vunpack.c.l.b16 %v3396
        %v3473 = vunpack.c.l.b16 %v3397
        %v3474 = vunpack.c.l.b16 %v3398
        %v3475 = vunpack.c.l.b16 %v3399
        %v3476 = vunpack.c.l.b16 %v3400
        %v3477 = vunpack.c.l.b16 %v3401
        %v3478 = vunpack.c.l.b16 %v3402
        %v3479 = vunpack.c.l.b16 %v3403
        %v3480 = vunpack.c.l.b16 %v3404
        %v3481 = vunpack.c.l.b16 %v3405
        %v3482 = vunpack.c.l.b16 %v3406
        %v3483 = vunpack.c.l.b16 %v3407
        %v3484 = vunpack.c.l.b16 %v3408
        %v3485 = vunpack.c.l.b16 %v3409
        %v3486 = vunpack.c.l.b16 %v3410
        %v3487 = vunpack.c.l.b16 %v3411
        %v3488 = vunpack.c.l.b16 %v3412
        %v3489 = vunpack.c.l.b16 %v3413
        %v3490 = vunpack.c.l.b16 %v3414
        %v3491 = vunpack.c.l.b16 %v3415
        %v3492 = vunpack.c.l.b16 %v3416
        %v3493 = vunpack.c.l.b16 %v3417
        %v3494 = vunpack.c.l.b16 %v3418
        %v3495 = vunpack.c.l.b16 %v3419
        %v3496 = vunpack.c.l.b16 %v3420
        %v3497 = vpack.c.b16 %v3461, %v3460
        %v3498 = vpack.c.b16 %v3463, %v3462
        %v3499 = vpack.c.b16 %v3465, %v3464
        %v3500 = vpack.c.b16 %v3467, %v3466
        %v3501 = vpack.c.b16 %v3469, %v3468
        %v3502 = vpack.c.b16 %v3471, %v3470
        %v3503 = vpack.c.b16 %v3473, %v3472
        %v3504 = vpack.c.b16 %v3475, %v3474
        %v3505 = vpack.c.b16 %v3477, %v3476
        %v3506 = vpack.c.b16 %v3479, %v3478
        %v3507 = vpack.c.b16 %v3481, %v3480
        %v3508 = vpack.c.b16 %v3483, %v3482
        %v3509 = vpack.c.b16 %v3485, %v3484
        %v3510 = vpack.c.b16 %v3487, %v3486
        %v3511 = vpack.c.b16 %v3489, %v3488
        %v3512 = vpack.c.b16 %v3491, %v3490
        %v3513 = vpack.c.b16 %v3493, %v3492
        %v3514 = vpack.c.b16 %v3495, %v3494
        %v3515 = vpack.c.b16 %v3496, %v3496
        %vm3516 = vsmask.f32 5376
        %v3518 = vshrl.u32 %v3497, 16
        %v3520 = vrot.slane %v3518, 2
        %v3521 = vshll.u32 %v3497, 16
        %v3523 = vrot.slane %v3521, 3
        %v3524 = vor.u32 %v3520, %v3523
        %v3526 = vshrl.u32 %v3498, 16
        %v3528 = vrot.slane %v3526, 2
        %v3529 = vshll.u32 %v3498, 16
        %v3531 = vrot.slane %v3529, 3
        %v3532 = vor.u32 %v3528, %v3531
        %v3533 = vsel %vm3516, %v3524, %v3532
        %v3535 = vshrl.u32 %v3499, 16
        %v3537 = vrot.slane %v3535, 2
        %v3538 = vshll.u32 %v3499, 16
        %v3540 = vrot.slane %v3538, 3
        %v3541 = vor.u32 %v3537, %v3540
        %v3542 = vsel %vm3516, %v3532, %v3541
        %v3544 = vshrl.u32 %v3500, 16
        %v3546 = vrot.slane %v3544, 2
        %v3547 = vshll.u32 %v3500, 16
        %v3549 = vrot.slane %v3547, 3
        %v3550 = vor.u32 %v3546, %v3549
        %v3551 = vsel %vm3516, %v3541, %v3550
        %v3553 = vshrl.u32 %v3501, 16
        %v3555 = vrot.slane %v3553, 2
        %v3556 = vshll.u32 %v3501, 16
        %v3558 = vrot.slane %v3556, 3
        %v3559 = vor.u32 %v3555, %v3558
        %v3560 = vsel %vm3516, %v3550, %v3559
        %v3562 = vshrl.u32 %v3502, 16
        %v3564 = vrot.slane %v3562, 2
        %v3565 = vshll.u32 %v3502, 16
        %v3567 = vrot.slane %v3565, 3
        %v3568 = vor.u32 %v3564, %v3567
        %v3569 = vsel %vm3516, %v3559, %v3568
        %v3571 = vshrl.u32 %v3503, 16
        %v3573 = vrot.slane %v3571, 2
        %v3574 = vshll.u32 %v3503, 16
        %v3576 = vrot.slane %v3574, 3
        %v3577 = vor.u32 %v3573, %v3576
        %v3578 = vsel %vm3516, %v3568, %v3577
        %v3580 = vshrl.u32 %v3504, 16
        %v3582 = vrot.slane %v3580, 2
        %v3583 = vshll.u32 %v3504, 16
        %v3585 = vrot.slane %v3583, 3
        %v3586 = vor.u32 %v3582, %v3585
        %v3587 = vsel %vm3516, %v3577, %v3586
        %v3589 = vshrl.u32 %v3505, 16
        %v3591 = vrot.slane %v3589, 2
        %v3592 = vshll.u32 %v3505, 16
        %v3594 = vrot.slane %v3592, 3
        %v3595 = vor.u32 %v3591, %v3594
        %v3596 = vsel %vm3516, %v3586, %v3595
        %v3598 = vshrl.u32 %v3506, 16
        %v3600 = vrot.slane %v3598, 2
        %v3601 = vshll.u32 %v3506, 16
        %v3603 = vrot.slane %v3601, 3
        %v3604 = vor.u32 %v3600, %v3603
        %v3605 = vsel %vm3516, %v3595, %v3604
        %v3607 = vshrl.u32 %v3507, 16
        %v3609 = vrot.slane %v3607, 2
        %v3610 = vshll.u32 %v3507, 16
        %v3612 = vrot.slane %v3610, 3
        %v3613 = vor.u32 %v3609, %v3612
        %v3614 = vsel %vm3516, %v3604, %v3613
        %v3616 = vshrl.u32 %v3508, 16
        %v3618 = vrot.slane %v3616, 2
        %v3619 = vshll.u32 %v3508, 16
        %v3621 = vrot.slane %v3619, 3
        %v3622 = vor.u32 %v3618, %v3621
        %v3623 = vsel %vm3516, %v3613, %v3622
        %v3625 = vshrl.u32 %v3509, 16
        %v3627 = vrot.slane %v3625, 2
        %v3628 = vshll.u32 %v3509, 16
        %v3630 = vrot.slane %v3628, 3
        %v3631 = vor.u32 %v3627, %v3630
        %v3632 = vsel %vm3516, %v3622, %v3631
        %v3634 = vshrl.u32 %v3510, 16
        %v3636 = vrot.slane %v3634, 2
        %v3637 = vshll.u32 %v3510, 16
        %v3639 = vrot.slane %v3637, 3
        %v3640 = vor.u32 %v3636, %v3639
        %v3641 = vsel %vm3516, %v3631, %v3640
        %v3643 = vshrl.u32 %v3511, 16
        %v3645 = vrot.slane %v3643, 2
        %v3646 = vshll.u32 %v3511, 16
        %v3648 = vrot.slane %v3646, 3
        %v3649 = vor.u32 %v3645, %v3648
        %v3650 = vsel %vm3516, %v3640, %v3649
        %v3652 = vshrl.u32 %v3512, 16
        %v3654 = vrot.slane %v3652, 2
        %v3655 = vshll.u32 %v3512, 16
        %v3657 = vrot.slane %v3655, 3
        %v3658 = vor.u32 %v3654, %v3657
        %v3659 = vsel %vm3516, %v3649, %v3658
        %v3661 = vshrl.u32 %v3513, 16
        %v3663 = vrot.slane %v3661, 2
        %v3664 = vshll.u32 %v3513, 16
        %v3666 = vrot.slane %v3664, 3
        %v3667 = vor.u32 %v3663, %v3666
        %v3668 = vsel %vm3516, %v3658, %v3667
        %v3670 = vshrl.u32 %v3514, 16
        %v3672 = vrot.slane %v3670, 2
        %v3673 = vshll.u32 %v3514, 16
        %v3675 = vrot.slane %v3673, 3
        %v3676 = vor.u32 %v3672, %v3675
        %v3677 = vsel %vm3516, %v3667, %v3676
        %v3679 = vshrl.u32 %v3515, 16
        %v3681 = vrot.slane %v3679, 2
        %v3682 = vshll.u32 %v3515, 16
        %v3684 = vrot.slane %v3682, 3
        %v3685 = vor.u32 %v3681, %v3684
        %v3686 = vsel %vm3516, %v3676, %v3685
        %v3688 = vsel %vm344, %v3533, 0
        %v3691 = vsel %vm344, %v3542, 0
        %v3694 = vsel %vm344, %v3551, 0
        %v3697 = vsel %vm344, %v3560, 0
        %v3700 = vsel %vm344, %v3569, 0
        %v3703 = vsel %vm344, %v3578, 0
        %v3706 = vsel %vm344, %v3587, 0
        %v3709 = vsel %vm344, %v3596, 0
        %v3712 = vsel %vm344, %v3605, 0
        %v3715 = vsel %vm344, %v3614, 0
        %v3718 = vsel %vm344, %v3623, 0
        %v3721 = vsel %vm344, %v3632, 0
        %v3724 = vsel %vm344, %v3641, 0
        %v3727 = vsel %vm344, %v3650, 0
        %v3730 = vsel %vm344, %v3659, 0
        %v3733 = vsel %vm344, %v3668, 0
        %v3736 = vsel %vm344, %v3677, 0
        %v3739 = vsel %vm344, %v3686, 0
        %v3742 = vsel %vm399, %v3422, 0
        %3744 = vmatpush.bf16.msra.mxu0 0
        %3745 = vmatpush.bf16.msra.mxu0 0
        %3746 = vmatpush.bf16.msra.mxu0 0
        %3747 = vmatpush.bf16.msra.mxu0 0
        %3748 = vmatpush.bf16.msra.mxu0 0
        %3749 = vmatpush.bf16.msra.mxu0 0
        %3750 = vmatpush.bf16.msra.mxu0 0
        %3751 = vmatpush.bf16.msra.mxu0 %v3742
        %3752 = vmatmul.bf16.gmra.mxu0 %v3688
        %v3753 = vpop.f32.mrf.mxu0
        %v3754 = vadd.f32 0.0, %v3753
        %v3755 = vpop.f32.mrf.mxu0
        %v3756 = vadd.f32 0.0, %v3755
        %3757 = vmatmul.bf16.gmra.mxu0 %v3691
        %v3758 = vpop.f32.mrf.mxu0
        %v3759 = vadd.f32 0.0, %v3758
        %v3760 = vpop.f32.mrf.mxu0
        %v3761 = vadd.f32 0.0, %v3760
        %3762 = vmatmul.bf16.gmra.mxu0 %v3694
        %v3763 = vpop.f32.mrf.mxu0
        %v3764 = vadd.f32 0.0, %v3763
        %v3765 = vpop.f32.mrf.mxu0
        %v3766 = vadd.f32 0.0, %v3765
        %3767 = vmatmul.bf16.gmra.mxu0 %v3697
        %v3768 = vpop.f32.mrf.mxu0
        %v3769 = vadd.f32 0.0, %v3768
        %v3770 = vpop.f32.mrf.mxu0
        %v3771 = vadd.f32 0.0, %v3770
        %3772 = vmatmul.bf16.gmra.mxu0 %v3700
        %v3773 = vpop.f32.mrf.mxu0
        %v3774 = vadd.f32 0.0, %v3773
        %v3775 = vpop.f32.mrf.mxu0
        %v3776 = vadd.f32 0.0, %v3775
        %3777 = vmatmul.bf16.gmra.mxu0 %v3703
        %v3778 = vpop.f32.mrf.mxu0
        %v3779 = vadd.f32 0.0, %v3778
        %v3780 = vpop.f32.mrf.mxu0
        %v3781 = vadd.f32 0.0, %v3780
        %3782 = vmatmul.bf16.gmra.mxu0 %v3706
        %v3783 = vpop.f32.mrf.mxu0
        %v3784 = vadd.f32 0.0, %v3783
        %v3785 = vpop.f32.mrf.mxu0
        %v3786 = vadd.f32 0.0, %v3785
        %3787 = vmatmul.bf16.gmra.mxu0 %v3709
        %v3788 = vpop.f32.mrf.mxu0
        %v3789 = vadd.f32 0.0, %v3788
        %v3790 = vpop.f32.mrf.mxu0
        %v3791 = vadd.f32 0.0, %v3790
        %3792 = vmatmul.bf16.gmra.mxu0 %v3712
        %v3793 = vpop.f32.mrf.mxu0
        %v3794 = vadd.f32 0.0, %v3793
        %v3795 = vpop.f32.mrf.mxu0
        %v3796 = vadd.f32 0.0, %v3795
        %3797 = vmatmul.bf16.gmra.mxu0 %v3715
        %v3798 = vpop.f32.mrf.mxu0
        %v3799 = vadd.f32 0.0, %v3798
        %v3800 = vpop.f32.mrf.mxu0
        %v3801 = vadd.f32 0.0, %v3800
        %3802 = vmatmul.bf16.gmra.mxu0 %v3718
        %v3803 = vpop.f32.mrf.mxu0
        %v3804 = vadd.f32 0.0, %v3803
        %v3805 = vpop.f32.mrf.mxu0
        %v3806 = vadd.f32 0.0, %v3805
        %3807 = vmatmul.bf16.gmra.mxu0 %v3721
        %v3808 = vpop.f32.mrf.mxu0
        %v3809 = vadd.f32 0.0, %v3808
        %v3810 = vpop.f32.mrf.mxu0
        %v3811 = vadd.f32 0.0, %v3810
        %3812 = vmatmul.bf16.gmra.mxu0 %v3724
        %v3813 = vpop.f32.mrf.mxu0
        %v3814 = vadd.f32 0.0, %v3813
        %v3815 = vpop.f32.mrf.mxu0
        %v3816 = vadd.f32 0.0, %v3815
        %3817 = vmatmul.bf16.gmra.mxu0 %v3727
        %v3818 = vpop.f32.mrf.mxu0
        %v3819 = vadd.f32 0.0, %v3818
        %v3820 = vpop.f32.mrf.mxu0
        %v3821 = vadd.f32 0.0, %v3820
        %3822 = vmatmul.bf16.gmra.mxu0 %v3730
        %v3823 = vpop.f32.mrf.mxu0
        %v3824 = vadd.f32 0.0, %v3823
        %v3825 = vpop.f32.mrf.mxu0
        %v3826 = vadd.f32 0.0, %v3825
        %3827 = vmatmul.bf16.gmra.mxu0 %v3733
        %v3828 = vpop.f32.mrf.mxu0
        %v3829 = vadd.f32 0.0, %v3828
        %v3830 = vpop.f32.mrf.mxu0
        %v3831 = vadd.f32 0.0, %v3830
        %3832 = vmatmul.bf16.gmra.mxu0 %v3736
        %v3833 = vpop.f32.mrf.mxu0
        %v3834 = vadd.f32 0.0, %v3833
        %v3835 = vpop.f32.mrf.mxu0
        %v3836 = vadd.f32 0.0, %v3835
        %3837 = vmatmul.bf16.gmra.mxu0 %v3739
        %v3838 = vpop.f32.mrf.mxu0
        %v3839 = vadd.f32 0.0, %v3838
        %v3840 = vpop.f32.mrf.mxu0
        %v3841 = vadd.f32 0.0, %v3840
        %3842 = vdwg.mxu0
        %v3843 = vld [vmem:[%s205] sm:$0xff]
        %v3844 = vld [vmem:[%s205 + $0x8] sm:$0xff]
        %v3845 = vld [vmem:[%s205 + $0x10] sm:$0xff]
        %v3846 = vld [vmem:[%s205 + $0x18] sm:$0xff]
        %v3847 = vld [vmem:[%s205 + $0x20] sm:$0xff]
        %v3848 = vld [vmem:[%s205 + $0x28] sm:$0xff]
        %v3849 = vld [vmem:[%s205 + $0x30] sm:$0xff]
        %v3850 = vld [vmem:[%s205 + $0x38] sm:$0xff]
        %v3851 = vld [vmem:[%s205 + $0x40] sm:$0xff]
        %v3852 = vld [vmem:[%s205 + $0x48] sm:$0xff]
        %v3853 = vld [vmem:[%s205 + $0x50] sm:$0xff]
        %v3854 = vld [vmem:[%s205 + $0x58] sm:$0xff]
        %v3855 = vld [vmem:[%s205 + $0x60] sm:$0xff]
        %v3856 = vld [vmem:[%s205 + $0x68] sm:$0xff]
        %v3857 = vld [vmem:[%s205 + $0x70] sm:$0xff]
        %v3858 = vld [vmem:[%s205 + $0x78] sm:$0xff]
        %v3859 = vld [vmem:[%s205 + $0x80] sm:$0xff]
        %v3860 = vld [vmem:[%s205 + $0x88] sm:$0xff]
        %v3861 = vld [vmem:[%s205 + $0x90] sm:$0xff]
        %v3862 = vld [vmem:[%s205 + $0x98] sm:$0xff]
        %v3863 = vld [vmem:[%s205 + $0xa0] sm:$0xff]
        %v3864 = vld [vmem:[%s205 + $0xa8] sm:$0xff]
        %v3865 = vld [vmem:[%s205 + $0xb0] sm:$0xff]
        %v3866 = vld [vmem:[%s205 + $0xb8] sm:$0xff]
        %v3867 = vld [vmem:[%s205 + $0xc0] sm:$0xff]
        %v3868 = vld [vmem:[%s205 + $0xc8] sm:$0xff]
        %v3869 = vld [vmem:[%s205 + $0xd0] sm:$0xff]
        %v3870 = vld [vmem:[%s205 + $0xd8] sm:$0xff]
        %v3871 = vld [vmem:[%s205 + $0xe0] sm:$0xff]
        %v3872 = vld [vmem:[%s205 + $0xe8] sm:$0xff]
        %v3873 = vld [vmem:[%s205 + $0xf0] sm:$0xff]
        %v3874 = vld [vmem:[%s205 + $0xf8] sm:$0xff]
        %v3875 = vld [vmem:[%s205 + $0x100] sm:$0xff]
        %v3876 = vld [vmem:[%s205 + $0x108] sm:$0xff]
        %v3877 = vld [vmem:[%s205 + $0x110] sm:$0xff]
        %v3878 = vld [vmem:[%s205 + $0x118] sm:$0xff]
        %v3879 = vadd.f32 %v3843, %v3754
        %v3880 = vadd.f32 %v3844, %v3756
        %v3881 = vadd.f32 %v3845, %v3759
        %v3882 = vadd.f32 %v3846, %v3761
        %v3883 = vadd.f32 %v3847, %v3764
        %v3884 = vadd.f32 %v3848, %v3766
        %v3885 = vadd.f32 %v3849, %v3769
        %v3886 = vadd.f32 %v3850, %v3771
        %v3887 = vadd.f32 %v3851, %v3774
        %v3888 = vadd.f32 %v3852, %v3776
        %v3889 = vadd.f32 %v3853, %v3779
        %v3890 = vadd.f32 %v3854, %v3781
        %v3891 = vadd.f32 %v3855, %v3784
        %v3892 = vadd.f32 %v3856, %v3786
        %v3893 = vadd.f32 %v3857, %v3789
        %v3894 = vadd.f32 %v3858, %v3791
        %v3895 = vadd.f32 %v3859, %v3794
        %v3896 = vadd.f32 %v3860, %v3796
        %v3897 = vadd.f32 %v3861, %v3799
        %v3898 = vadd.f32 %v3862, %v3801
        %v3899 = vadd.f32 %v3863, %v3804
        %v3900 = vadd.f32 %v3864, %v3806
        %v3901 = vadd.f32 %v3865, %v3809
        %v3902 = vadd.f32 %v3866, %v3811
        %v3903 = vadd.f32 %v3867, %v3814
        %v3904 = vadd.f32 %v3868, %v3816
        %v3905 = vadd.f32 %v3869, %v3819
        %v3906 = vadd.f32 %v3870, %v3821
        %v3907 = vadd.f32 %v3871, %v3824
        %v3908 = vadd.f32 %v3872, %v3826
        %v3909 = vadd.f32 %v3873, %v3829
        %v3910 = vadd.f32 %v3874, %v3831
        %v3911 = vadd.f32 %v3875, %v3834
        %v3912 = vadd.f32 %v3876, %v3836
        %v3913 = vadd.f32 %v3877, %v3839
        %v3914 = vadd.f32 %v3878, %v3841
        %3915 = vst [vmem:[%s205] sm:$0xff] %v3879
        %3916 = vst [vmem:[%s205 + $0x8] sm:$0xff] %v3880
        %3917 = vst [vmem:[%s205 + $0x10] sm:$0xff] %v3881
        %3918 = vst [vmem:[%s205 + $0x18] sm:$0xff] %v3882
        %3919 = vst [vmem:[%s205 + $0x20] sm:$0xff] %v3883
        %3920 = vst [vmem:[%s205 + $0x28] sm:$0xff] %v3884
        %3921 = vst [vmem:[%s205 + $0x30] sm:$0xff] %v3885
        %3922 = vst [vmem:[%s205 + $0x38] sm:$0xff] %v3886
        %3923 = vst [vmem:[%s205 + $0x40] sm:$0xff] %v3887
        %3924 = vst [vmem:[%s205 + $0x48] sm:$0xff] %v3888
        %3925 = vst [vmem:[%s205 + $0x50] sm:$0xff] %v3889
        %3926 = vst [vmem:[%s205 + $0x58] sm:$0xff] %v3890
        %3927 = vst [vmem:[%s205 + $0x60] sm:$0xff] %v3891
        %3928 = vst [vmem:[%s205 + $0x68] sm:$0xff] %v3892
        %3929 = vst [vmem:[%s205 + $0x70] sm:$0xff] %v3893
        %3930 = vst [vmem:[%s205 + $0x78] sm:$0xff] %v3894
        %3931 = vst [vmem:[%s205 + $0x80] sm:$0xff] %v3895
        %3932 = vst [vmem:[%s205 + $0x88] sm:$0xff] %v3896
        %3933 = vst [vmem:[%s205 + $0x90] sm:$0xff] %v3897
        %3934 = vst [vmem:[%s205 + $0x98] sm:$0xff] %v3898
        %3935 = vst [vmem:[%s205 + $0xa0] sm:$0xff] %v3899
        %3936 = vst [vmem:[%s205 + $0xa8] sm:$0xff] %v3900
        %3937 = vst [vmem:[%s205 + $0xb0] sm:$0xff] %v3901
        %3938 = vst [vmem:[%s205 + $0xb8] sm:$0xff] %v3902
        %3939 = vst [vmem:[%s205 + $0xc0] sm:$0xff] %v3903
        %3940 = vst [vmem:[%s205 + $0xc8] sm:$0xff] %v3904
        %3941 = vst [vmem:[%s205 + $0xd0] sm:$0xff] %v3905
        %3942 = vst [vmem:[%s205 + $0xd8] sm:$0xff] %v3906
        %3943 = vst [vmem:[%s205 + $0xe0] sm:$0xff] %v3907
        %3944 = vst [vmem:[%s205 + $0xe8] sm:$0xff] %v3908
        %3945 = vst [vmem:[%s205 + $0xf0] sm:$0xff] %v3909
        %3946 = vst [vmem:[%s205 + $0xf8] sm:$0xff] %v3910
        %3947 = vst [vmem:[%s205 + $0x100] sm:$0xff] %v3911
        %3948 = vst [vmem:[%s205 + $0x108] sm:$0xff] %v3912
        %3949 = vst [vmem:[%s205 + $0x110] sm:$0xff] %v3913
        %3950 = vst [vmem:[%s205 + $0x118] sm:$0xff] %v3914
        %v3951 = vld [vmem:[%s210 + $0x10] sm:$0x8]
        %v3952 = vld [vmem:[%s210 + $0x14] sm:$0xf]
        %v3953 = vld [vmem:[%s210 + $0x18] sm:$0xf]
        %v3954 = vld [vmem:[%s210 + $0x1c] sm:$0xf]
        %v3955 = vld [vmem:[%s210 + $0x20] sm:$0xf]
        %v3956 = vld [vmem:[%s210 + $0x24] sm:$0xf]
        %v3957 = vld [vmem:[%s210 + $0x28] sm:$0xf]
        %v3958 = vld [vmem:[%s210 + $0x2c] sm:$0xf]
        %v3959 = vld [vmem:[%s210 + $0x30] sm:$0xf]
        %v3960 = vld [vmem:[%s210 + $0x34] sm:$0xf]
        %v3961 = vld [vmem:[%s210 + $0x38] sm:$0xf]
        %v3962 = vld [vmem:[%s210 + $0x3c] sm:$0xf]
        %v3963 = vld [vmem:[%s210 + $0x40] sm:$0xf]
        %v3964 = vld [vmem:[%s210 + $0x44] sm:$0xf]
        %v3965 = vld [vmem:[%s210 + $0x48] sm:$0xf]
        %v3966 = vld [vmem:[%s210 + $0x4c] sm:$0xf]
        %v3967 = vld [vmem:[%s210 + $0x50] sm:$0xf]
        %v3968 = vld [vmem:[%s210 + $0x54] sm:$0xf]
        %v3969 = vld [vmem:[%s210 + $0x58] sm:$0xf]
        %v3970 = vld [vmem:[%s210 + $0x5c] sm:$0xf]
        %v3971 = vld [vmem:[%s210 + $0x60] sm:$0xf]
        %v3972 = vld [vmem:[%s210 + $0x64] sm:$0xf]
        %v3973 = vld [vmem:[%s210 + $0x68] sm:$0xf]
        %v3974 = vld [vmem:[%s210 + $0x6c] sm:$0xf]
        %v3975 = vld [vmem:[%s210 + $0x70] sm:$0xf]
        %v3976 = vld [vmem:[%s210 + $0x74] sm:$0xf]
        %v3977 = vld [vmem:[%s210 + $0x78] sm:$0xf]
        %v3978 = vld [vmem:[%s210 + $0x7c] sm:$0xf]
        %v3979 = vld [vmem:[%s210 + $0x80] sm:$0xf]
        %v3980 = vld [vmem:[%s210 + $0x84] sm:$0xf]
        %v3981 = vld [vmem:[%s210 + $0x88] sm:$0xf]
        %v3982 = vld [vmem:[%s210 + $0x8c] sm:$0xf]
        %v3983 = vld [vmem:[%s210 + $0x90] sm:$0xf]
        %v3984 = vld [vmem:[%s210 + $0x94] sm:$0xf]
        %v3985 = vld [vmem:[%s210 + $0x98] sm:$0xf]
        %v3986 = vld [vmem:[%s210 + $0x9c] sm:$0xf]
        %v3987 = vld [vmem:[%s210 + $0xa0] sm:$0x7]
        %s3988 = scalar_lea.vmem %s2, 32
        %v3989 = vld [vmem:[%s3988] sm:$0xf]
        %v4027 = vunpack.c.l.b16 %v3951
        %v4028 = vunpack.c.l.b16 %v3952
        %v4029 = vunpack.c.l.b16 %v3953
        %v4030 = vunpack.c.l.b16 %v3954
        %v4031 = vunpack.c.l.b16 %v3955
        %v4032 = vunpack.c.l.b16 %v3956
        %v4033 = vunpack.c.l.b16 %v3957
        %v4034 = vunpack.c.l.b16 %v3958
        %v4035 = vunpack.c.l.b16 %v3959
        %v4036 = vunpack.c.l.b16 %v3960
        %v4037 = vunpack.c.l.b16 %v3961
        %v4038 = vunpack.c.l.b16 %v3962
        %v4039 = vunpack.c.l.b16 %v3963
        %v4040 = vunpack.c.l.b16 %v3964
        %v4041 = vunpack.c.l.b16 %v3965
        %v4042 = vunpack.c.l.b16 %v3966
        %v4043 = vunpack.c.l.b16 %v3967
        %v4044 = vunpack.c.l.b16 %v3968
        %v4045 = vunpack.c.l.b16 %v3969
        %v4046 = vunpack.c.l.b16 %v3970
        %v4047 = vunpack.c.l.b16 %v3971
        %v4048 = vunpack.c.l.b16 %v3972
        %v4049 = vunpack.c.l.b16 %v3973
        %v4050 = vunpack.c.l.b16 %v3974
        %v4051 = vunpack.c.l.b16 %v3975
        %v4052 = vunpack.c.l.b16 %v3976
        %v4053 = vunpack.c.l.b16 %v3977
        %v4054 = vunpack.c.l.b16 %v3978
        %v4055 = vunpack.c.l.b16 %v3979
        %v4056 = vunpack.c.l.b16 %v3980
        %v4057 = vunpack.c.l.b16 %v3981
        %v4058 = vunpack.c.l.b16 %v3982
        %v4059 = vunpack.c.l.b16 %v3983
        %v4060 = vunpack.c.l.b16 %v3984
        %v4061 = vunpack.c.l.b16 %v3985
        %v4062 = vunpack.c.l.b16 %v3986
        %v4063 = vunpack.c.l.b16 %v3987
        %v4064 = vpack.c.b16 %v4028, %v4027
        %v4065 = vpack.c.b16 %v4030, %v4029
        %v4066 = vpack.c.b16 %v4032, %v4031
        %v4067 = vpack.c.b16 %v4034, %v4033
        %v4068 = vpack.c.b16 %v4036, %v4035
        %v4069 = vpack.c.b16 %v4038, %v4037
        %v4070 = vpack.c.b16 %v4040, %v4039
        %v4071 = vpack.c.b16 %v4042, %v4041
        %v4072 = vpack.c.b16 %v4044, %v4043
        %v4073 = vpack.c.b16 %v4046, %v4045
        %v4074 = vpack.c.b16 %v4048, %v4047
        %v4075 = vpack.c.b16 %v4050, %v4049
        %v4076 = vpack.c.b16 %v4052, %v4051
        %v4077 = vpack.c.b16 %v4054, %v4053
        %v4078 = vpack.c.b16 %v4056, %v4055
        %v4079 = vpack.c.b16 %v4058, %v4057
        %v4080 = vpack.c.b16 %v4060, %v4059
        %v4081 = vpack.c.b16 %v4062, %v4061
        %v4082 = vpack.c.b16 %v4063, %v4063
        %vm4083 = vcmask 1044480
        %v4084 = vrot.slane %v4064, 3
        %v4085 = vrot.slane %v4065, 3
        %v4086 = vsel %vm4083, %v4084, %v4085
        %v4087 = vrot.slane %v4066, 3
        %v4088 = vsel %vm4083, %v4085, %v4087
        %v4089 = vrot.slane %v4067, 3
        %v4090 = vsel %vm4083, %v4087, %v4089
        %v4091 = vrot.slane %v4068, 3
        %v4092 = vsel %vm4083, %v4089, %v4091
        %v4093 = vrot.slane %v4069, 3
        %v4094 = vsel %vm4083, %v4091, %v4093
        %v4095 = vrot.slane %v4070, 3
        %v4096 = vsel %vm4083, %v4093, %v4095
        %v4097 = vrot.slane %v4071, 3
        %v4098 = vsel %vm4083, %v4095, %v4097
        %v4099 = vrot.slane %v4072, 3
        %v4100 = vsel %vm4083, %v4097, %v4099
        %v4101 = vrot.slane %v4073, 3
        %v4102 = vsel %vm4083, %v4099, %v4101
        %v4103 = vrot.slane %v4074, 3
        %v4104 = vsel %vm4083, %v4101, %v4103
        %v4105 = vrot.slane %v4075, 3
        %v4106 = vsel %vm4083, %v4103, %v4105
        %v4107 = vrot.slane %v4076, 3
        %v4108 = vsel %vm4083, %v4105, %v4107
        %v4109 = vrot.slane %v4077, 3
        %v4110 = vsel %vm4083, %v4107, %v4109
        %v4111 = vrot.slane %v4078, 3
        %v4112 = vsel %vm4083, %v4109, %v4111
        %v4113 = vrot.slane %v4079, 3
        %v4114 = vsel %vm4083, %v4111, %v4113
        %v4115 = vrot.slane %v4080, 3
        %v4116 = vsel %vm4083, %v4113, %v4115
        %v4117 = vrot.slane %v4081, 3
        %v4118 = vsel %vm4083, %v4115, %v4117
        %v4119 = vrot.slane %v4082, 3
        %v4120 = vsel %vm4083, %v4117, %v4119
        %v4122 = vsel %vm344, %v4086, 0
        %v4125 = vsel %vm344, %v4088, 0
        %v4128 = vsel %vm344, %v4090, 0
        %v4131 = vsel %vm344, %v4092, 0
        %v4134 = vsel %vm344, %v4094, 0
        %v4137 = vsel %vm344, %v4096, 0
        %v4140 = vsel %vm344, %v4098, 0
        %v4143 = vsel %vm344, %v4100, 0
        %v4146 = vsel %vm344, %v4102, 0
        %v4149 = vsel %vm344, %v4104, 0
        %v4152 = vsel %vm344, %v4106, 0
        %v4155 = vsel %vm344, %v4108, 0
        %v4158 = vsel %vm344, %v4110, 0
        %v4161 = vsel %vm344, %v4112, 0
        %v4164 = vsel %vm344, %v4114, 0
        %v4167 = vsel %vm344, %v4116, 0
        %v4170 = vsel %vm344, %v4118, 0
        %v4173 = vsel %vm344, %v4120, 0
        %v4176 = vsel %vm399, %v3989, 0
        %4178 = vmatpush.bf16.msra.mxu0 0
        %4179 = vmatpush.bf16.msra.mxu0 0
        %4180 = vmatpush.bf16.msra.mxu0 0
        %4181 = vmatpush.bf16.msra.mxu0 0
        %4182 = vmatpush.bf16.msra.mxu0 0
        %4183 = vmatpush.bf16.msra.mxu0 0
        %4184 = vmatpush.bf16.msra.mxu0 0
        %4185 = vmatpush.bf16.msra.mxu0 %v4176
        %4186 = vmatmul.bf16.gmra.mxu0 %v4122
        %v4187 = vpop.f32.mrf.mxu0
        %v4188 = vadd.f32 0.0, %v4187
        %v4189 = vpop.f32.mrf.mxu0
        %v4190 = vadd.f32 0.0, %v4189
        %4191 = vmatmul.bf16.gmra.mxu0 %v4125
        %v4192 = vpop.f32.mrf.mxu0
        %v4193 = vadd.f32 0.0, %v4192
        %v4194 = vpop.f32.mrf.mxu0
        %v4195 = vadd.f32 0.0, %v4194
        %4196 = vmatmul.bf16.gmra.mxu0 %v4128
        %v4197 = vpop.f32.mrf.mxu0
        %v4198 = vadd.f32 0.0, %v4197
        %v4199 = vpop.f32.mrf.mxu0
        %v4200 = vadd.f32 0.0, %v4199
        %4201 = vmatmul.bf16.gmra.mxu0 %v4131
        %v4202 = vpop.f32.mrf.mxu0
        %v4203 = vadd.f32 0.0, %v4202
        %v4204 = vpop.f32.mrf.mxu0
        %v4205 = vadd.f32 0.0, %v4204
        %4206 = vmatmul.bf16.gmra.mxu0 %v4134
        %v4207 = vpop.f32.mrf.mxu0
        %v4208 = vadd.f32 0.0, %v4207
        %v4209 = vpop.f32.mrf.mxu0
        %v4210 = vadd.f32 0.0, %v4209
        %4211 = vmatmul.bf16.gmra.mxu0 %v4137
        %v4212 = vpop.f32.mrf.mxu0
        %v4213 = vadd.f32 0.0, %v4212
        %v4214 = vpop.f32.mrf.mxu0
        %v4215 = vadd.f32 0.0, %v4214
        %4216 = vmatmul.bf16.gmra.mxu0 %v4140
        %v4217 = vpop.f32.mrf.mxu0
        %v4218 = vadd.f32 0.0, %v4217
        %v4219 = vpop.f32.mrf.mxu0
        %v4220 = vadd.f32 0.0, %v4219
        %4221 = vmatmul.bf16.gmra.mxu0 %v4143
        %v4222 = vpop.f32.mrf.mxu0
        %v4223 = vadd.f32 0.0, %v4222
        %v4224 = vpop.f32.mrf.mxu0
        %v4225 = vadd.f32 0.0, %v4224
        %4226 = vmatmul.bf16.gmra.mxu0 %v4146
        %v4227 = vpop.f32.mrf.mxu0
        %v4228 = vadd.f32 0.0, %v4227
        %v4229 = vpop.f32.mrf.mxu0
        %v4230 = vadd.f32 0.0, %v4229
        %4231 = vmatmul.bf16.gmra.mxu0 %v4149
        %v4232 = vpop.f32.mrf.mxu0
        %v4233 = vadd.f32 0.0, %v4232
        %v4234 = vpop.f32.mrf.mxu0
        %v4235 = vadd.f32 0.0, %v4234
        %4236 = vmatmul.bf16.gmra.mxu0 %v4152
        %v4237 = vpop.f32.mrf.mxu0
        %v4238 = vadd.f32 0.0, %v4237
        %v4239 = vpop.f32.mrf.mxu0
        %v4240 = vadd.f32 0.0, %v4239
        %4241 = vmatmul.bf16.gmra.mxu0 %v4155
        %v4242 = vpop.f32.mrf.mxu0
        %v4243 = vadd.f32 0.0, %v4242
        %v4244 = vpop.f32.mrf.mxu0
        %v4245 = vadd.f32 0.0, %v4244
        %4246 = vmatmul.bf16.gmra.mxu0 %v4158
        %v4247 = vpop.f32.mrf.mxu0
        %v4248 = vadd.f32 0.0, %v4247
        %v4249 = vpop.f32.mrf.mxu0
        %v4250 = vadd.f32 0.0, %v4249
        %4251 = vmatmul.bf16.gmra.mxu0 %v4161
        %v4252 = vpop.f32.mrf.mxu0
        %v4253 = vadd.f32 0.0, %v4252
        %v4254 = vpop.f32.mrf.mxu0
        %v4255 = vadd.f32 0.0, %v4254
        %4256 = vmatmul.bf16.gmra.mxu0 %v4164
        %v4257 = vpop.f32.mrf.mxu0
        %v4258 = vadd.f32 0.0, %v4257
        %v4259 = vpop.f32.mrf.mxu0
        %v4260 = vadd.f32 0.0, %v4259
        %4261 = vmatmul.bf16.gmra.mxu0 %v4167
        %v4262 = vpop.f32.mrf.mxu0
        %v4263 = vadd.f32 0.0, %v4262
        %v4264 = vpop.f32.mrf.mxu0
        %v4265 = vadd.f32 0.0, %v4264
        %4266 = vmatmul.bf16.gmra.mxu0 %v4170
        %v4267 = vpop.f32.mrf.mxu0
        %v4268 = vadd.f32 0.0, %v4267
        %v4269 = vpop.f32.mrf.mxu0
        %v4270 = vadd.f32 0.0, %v4269
        %4271 = vmatmul.bf16.gmra.mxu0 %v4173
        %v4272 = vpop.f32.mrf.mxu0
        %v4273 = vadd.f32 0.0, %v4272
        %v4274 = vpop.f32.mrf.mxu0
        %v4275 = vadd.f32 0.0, %v4274
        %4276 = vdwg.mxu0
        %v4277 = vld [vmem:[%s205] sm:$0xff]
        %v4278 = vld [vmem:[%s205 + $0x8] sm:$0xff]
        %v4279 = vld [vmem:[%s205 + $0x10] sm:$0xff]
        %v4280 = vld [vmem:[%s205 + $0x18] sm:$0xff]
        %v4281 = vld [vmem:[%s205 + $0x20] sm:$0xff]
        %v4282 = vld [vmem:[%s205 + $0x28] sm:$0xff]
        %v4283 = vld [vmem:[%s205 + $0x30] sm:$0xff]
        %v4284 = vld [vmem:[%s205 + $0x38] sm:$0xff]
        %v4285 = vld [vmem:[%s205 + $0x40] sm:$0xff]
        %v4286 = vld [vmem:[%s205 + $0x48] sm:$0xff]
        %v4287 = vld [vmem:[%s205 + $0x50] sm:$0xff]
        %v4288 = vld [vmem:[%s205 + $0x58] sm:$0xff]
        %v4289 = vld [vmem:[%s205 + $0x60] sm:$0xff]
        %v4290 = vld [vmem:[%s205 + $0x68] sm:$0xff]
        %v4291 = vld [vmem:[%s205 + $0x70] sm:$0xff]
        %v4292 = vld [vmem:[%s205 + $0x78] sm:$0xff]
        %v4293 = vld [vmem:[%s205 + $0x80] sm:$0xff]
        %v4294 = vld [vmem:[%s205 + $0x88] sm:$0xff]
        %v4295 = vld [vmem:[%s205 + $0x90] sm:$0xff]
        %v4296 = vld [vmem:[%s205 + $0x98] sm:$0xff]
        %v4297 = vld [vmem:[%s205 + $0xa0] sm:$0xff]
        %v4298 = vld [vmem:[%s205 + $0xa8] sm:$0xff]
        %v4299 = vld [vmem:[%s205 + $0xb0] sm:$0xff]
        %v4300 = vld [vmem:[%s205 + $0xb8] sm:$0xff]
        %v4301 = vld [vmem:[%s205 + $0xc0] sm:$0xff]
        %v4302 = vld [vmem:[%s205 + $0xc8] sm:$0xff]
        %v4303 = vld [vmem:[%s205 + $0xd0] sm:$0xff]
        %v4304 = vld [vmem:[%s205 + $0xd8] sm:$0xff]
        %v4305 = vld [vmem:[%s205 + $0xe0] sm:$0xff]
        %v4306 = vld [vmem:[%s205 + $0xe8] sm:$0xff]
        %v4307 = vld [vmem:[%s205 + $0xf0] sm:$0xff]
        %v4308 = vld [vmem:[%s205 + $0xf8] sm:$0xff]
        %v4309 = vld [vmem:[%s205 + $0x100] sm:$0xff]
        %v4310 = vld [vmem:[%s205 + $0x108] sm:$0xff]
        %v4311 = vld [vmem:[%s205 + $0x110] sm:$0xff]
        %v4312 = vld [vmem:[%s205 + $0x118] sm:$0xff]
        %v4313 = vadd.f32 %v4277, %v4188
        %v4314 = vadd.f32 %v4278, %v4190
        %v4315 = vadd.f32 %v4279, %v4193
        %v4316 = vadd.f32 %v4280, %v4195
        %v4317 = vadd.f32 %v4281, %v4198
        %v4318 = vadd.f32 %v4282, %v4200
        %v4319 = vadd.f32 %v4283, %v4203
        %v4320 = vadd.f32 %v4284, %v4205
        %v4321 = vadd.f32 %v4285, %v4208
        %v4322 = vadd.f32 %v4286, %v4210
        %v4323 = vadd.f32 %v4287, %v4213
        %v4324 = vadd.f32 %v4288, %v4215
        %v4325 = vadd.f32 %v4289, %v4218
        %v4326 = vadd.f32 %v4290, %v4220
        %v4327 = vadd.f32 %v4291, %v4223
        %v4328 = vadd.f32 %v4292, %v4225
        %v4329 = vadd.f32 %v4293, %v4228
        %v4330 = vadd.f32 %v4294, %v4230
        %v4331 = vadd.f32 %v4295, %v4233
        %v4332 = vadd.f32 %v4296, %v4235
        %v4333 = vadd.f32 %v4297, %v4238
        %v4334 = vadd.f32 %v4298, %v4240
        %v4335 = vadd.f32 %v4299, %v4243
        %v4336 = vadd.f32 %v4300, %v4245
        %v4337 = vadd.f32 %v4301, %v4248
        %v4338 = vadd.f32 %v4302, %v4250
        %v4339 = vadd.f32 %v4303, %v4253
        %v4340 = vadd.f32 %v4304, %v4255
        %v4341 = vadd.f32 %v4305, %v4258
        %v4342 = vadd.f32 %v4306, %v4260
        %v4343 = vadd.f32 %v4307, %v4263
        %v4344 = vadd.f32 %v4308, %v4265
        %v4345 = vadd.f32 %v4309, %v4268
        %v4346 = vadd.f32 %v4310, %v4270
        %v4347 = vadd.f32 %v4311, %v4273
        %v4348 = vadd.f32 %v4312, %v4275
        %4349 = vst [vmem:[%s205] sm:$0xff] %v4313
        %4350 = vst [vmem:[%s205 + $0x8] sm:$0xff] %v4314
        %4351 = vst [vmem:[%s205 + $0x10] sm:$0xff] %v4315
        %4352 = vst [vmem:[%s205 + $0x18] sm:$0xff] %v4316
        %4353 = vst [vmem:[%s205 + $0x20] sm:$0xff] %v4317
        %4354 = vst [vmem:[%s205 + $0x28] sm:$0xff] %v4318
        %4355 = vst [vmem:[%s205 + $0x30] sm:$0xff] %v4319
        %4356 = vst [vmem:[%s205 + $0x38] sm:$0xff] %v4320
        %4357 = vst [vmem:[%s205 + $0x40] sm:$0xff] %v4321
        %4358 = vst [vmem:[%s205 + $0x48] sm:$0xff] %v4322
        %4359 = vst [vmem:[%s205 + $0x50] sm:$0xff] %v4323
        %4360 = vst [vmem:[%s205 + $0x58] sm:$0xff] %v4324
        %4361 = vst [vmem:[%s205 + $0x60] sm:$0xff] %v4325
        %4362 = vst [vmem:[%s205 + $0x68] sm:$0xff] %v4326
        %4363 = vst [vmem:[%s205 + $0x70] sm:$0xff] %v4327
        %4364 = vst [vmem:[%s205 + $0x78] sm:$0xff] %v4328
        %4365 = vst [vmem:[%s205 + $0x80] sm:$0xff] %v4329
        %4366 = vst [vmem:[%s205 + $0x88] sm:$0xff] %v4330
        %4367 = vst [vmem:[%s205 + $0x90] sm:$0xff] %v4331
        %4368 = vst [vmem:[%s205 + $0x98] sm:$0xff] %v4332
        %4369 = vst [vmem:[%s205 + $0xa0] sm:$0xff] %v4333
        %4370 = vst [vmem:[%s205 + $0xa8] sm:$0xff] %v4334
        %4371 = vst [vmem:[%s205 + $0xb0] sm:$0xff] %v4335
        %4372 = vst [vmem:[%s205 + $0xb8] sm:$0xff] %v4336
        %4373 = vst [vmem:[%s205 + $0xc0] sm:$0xff] %v4337
        %4374 = vst [vmem:[%s205 + $0xc8] sm:$0xff] %v4338
        %4375 = vst [vmem:[%s205 + $0xd0] sm:$0xff] %v4339
        %4376 = vst [vmem:[%s205 + $0xd8] sm:$0xff] %v4340
        %4377 = vst [vmem:[%s205 + $0xe0] sm:$0xff] %v4341
        %4378 = vst [vmem:[%s205 + $0xe8] sm:$0xff] %v4342
        %4379 = vst [vmem:[%s205 + $0xf0] sm:$0xff] %v4343
        %4380 = vst [vmem:[%s205 + $0xf8] sm:$0xff] %v4344
        %4381 = vst [vmem:[%s205 + $0x100] sm:$0xff] %v4345
        %4382 = vst [vmem:[%s205 + $0x108] sm:$0xff] %v4346
        %4383 = vst [vmem:[%s205 + $0x110] sm:$0xff] %v4347
        %4384 = vst [vmem:[%s205 + $0x118] sm:$0xff] %v4348
        %v4385 = vld [vmem:[%s215] sm:$0xff]
        %v4386 = vld [vmem:[%s215 + $0x8] sm:$0xff]
        %v4387 = vld [vmem:[%s215 + $0x10] sm:$0xff]
        %v4388 = vld [vmem:[%s215 + $0x18] sm:$0xff]
        %v4389 = vld [vmem:[%s215 + $0x20] sm:$0xff]
        %v4390 = vld [vmem:[%s215 + $0x28] sm:$0xff]
        %v4391 = vld [vmem:[%s215 + $0x30] sm:$0xff]
        %v4392 = vld [vmem:[%s215 + $0x38] sm:$0xff]
        %v4393 = vld [vmem:[%s215 + $0x40] sm:$0xff]
        %v4394 = vld [vmem:[%s215 + $0x48] sm:$0xff]
        %v4395 = vld [vmem:[%s215 + $0x50] sm:$0xff]
        %v4396 = vld [vmem:[%s215 + $0x58] sm:$0xff]
        %v4397 = vld [vmem:[%s215 + $0x60] sm:$0xff]
        %v4398 = vld [vmem:[%s215 + $0x68] sm:$0xff]
        %v4399 = vld [vmem:[%s215 + $0x70] sm:$0xff]
        %v4400 = vld [vmem:[%s215 + $0x78] sm:$0xff]
        %v4401 = vld [vmem:[%s215 + $0x80] sm:$0xff]
        %v4402 = vld [vmem:[%s215 + $0x88] sm:$0xff]
        %v4403 = vld [vmem:[%s215 + $0x90] sm:$0xff]
        %v4404 = vld [vmem:[%s215 + $0x98] sm:$0xff]
        %v4405 = vld [vmem:[%s215 + $0xa0] sm:$0xff]
        %v4406 = vld [vmem:[%s215 + $0xa8] sm:$0xff]
        %v4407 = vld [vmem:[%s215 + $0xb0] sm:$0xff]
        %v4408 = vld [vmem:[%s215 + $0xb8] sm:$0xff]
        %v4409 = vld [vmem:[%s215 + $0xc0] sm:$0xff]
        %v4410 = vld [vmem:[%s215 + $0xc8] sm:$0xff]
        %v4411 = vld [vmem:[%s215 + $0xd0] sm:$0xff]
        %v4412 = vld [vmem:[%s215 + $0xd8] sm:$0xff]
        %v4413 = vld [vmem:[%s215 + $0xe0] sm:$0xff]
        %v4414 = vld [vmem:[%s215 + $0xe8] sm:$0xff]
        %v4415 = vld [vmem:[%s215 + $0xf0] sm:$0xff]
        %v4416 = vld [vmem:[%s215 + $0xf8] sm:$0xff]
        %v4417 = vld [vmem:[%s215 + $0x100] sm:$0xff]
        %v4418 = vld [vmem:[%s215 + $0x108] sm:$0xff]
        %v4419 = vld [vmem:[%s215 + $0x110] sm:$0xff]
        %v4420 = vld [vmem:[%s215 + $0x118] sm:$0xff]
        %vm4421 = vcmp.eq.f32.partialorder %v4385, 0.0
        %vm4422 = vcmp.eq.f32.partialorder %v4386, 0.0
        %vm4423 = vcmp.eq.f32.partialorder %v4387, 0.0
        %vm4424 = vcmp.eq.f32.partialorder %v4388, 0.0
        %vm4425 = vcmp.eq.f32.partialorder %v4389, 0.0
        %vm4426 = vcmp.eq.f32.partialorder %v4390, 0.0
        %vm4427 = vcmp.eq.f32.partialorder %v4391, 0.0
        %vm4428 = vcmp.eq.f32.partialorder %v4392, 0.0
        %vm4429 = vcmp.eq.f32.partialorder %v4393, 0.0
        %vm4430 = vcmp.eq.f32.partialorder %v4394, 0.0
        %vm4431 = vcmp.eq.f32.partialorder %v4395, 0.0
        %vm4432 = vcmp.eq.f32.partialorder %v4396, 0.0
        %vm4433 = vcmp.eq.f32.partialorder %v4397, 0.0
        %vm4434 = vcmp.eq.f32.partialorder %v4398, 0.0
        %vm4435 = vcmp.eq.f32.partialorder %v4399, 0.0
        %vm4436 = vcmp.eq.f32.partialorder %v4400, 0.0
        %vm4437 = vcmp.eq.f32.partialorder %v4401, 0.0
        %vm4438 = vcmp.eq.f32.partialorder %v4402, 0.0
        %vm4439 = vcmp.eq.f32.partialorder %v4403, 0.0
        %vm4440 = vcmp.eq.f32.partialorder %v4404, 0.0
        %vm4441 = vcmp.eq.f32.partialorder %v4405, 0.0
        %vm4442 = vcmp.eq.f32.partialorder %v4406, 0.0
        %vm4443 = vcmp.eq.f32.partialorder %v4407, 0.0
        %vm4444 = vcmp.eq.f32.partialorder %v4408, 0.0
        %vm4445 = vcmp.eq.f32.partialorder %v4409, 0.0
        %vm4446 = vcmp.eq.f32.partialorder %v4410, 0.0
        %vm4447 = vcmp.eq.f32.partialorder %v4411, 0.0
        %vm4448 = vcmp.eq.f32.partialorder %v4412, 0.0
        %vm4449 = vcmp.eq.f32.partialorder %v4413, 0.0
        %vm4450 = vcmp.eq.f32.partialorder %v4414, 0.0
        %vm4451 = vcmp.eq.f32.partialorder %v4415, 0.0
        %vm4452 = vcmp.eq.f32.partialorder %v4416, 0.0
        %vm4453 = vcmp.eq.f32.partialorder %v4417, 0.0
        %vm4454 = vcmp.eq.f32.partialorder %v4418, 0.0
        %vm4455 = vcmp.eq.f32.partialorder %v4419, 0.0
        %vm4456 = vcmp.eq.f32.partialorder %v4420, 0.0
        %v4457 = vsel %vm4421, 1.0, %v4385
        %v4458 = vsel %vm4422, 1.0, %v4386
        %v4459 = vsel %vm4423, 1.0, %v4387
        %v4460 = vsel %vm4424, 1.0, %v4388
        %v4461 = vsel %vm4425, 1.0, %v4389
        %v4462 = vsel %vm4426, 1.0, %v4390
        %v4463 = vsel %vm4427, 1.0, %v4391
        %v4464 = vsel %vm4428, 1.0, %v4392
        %v4465 = vsel %vm4429, 1.0, %v4393
        %v4466 = vsel %vm4430, 1.0, %v4394
        %v4467 = vsel %vm4431, 1.0, %v4395
        %v4468 = vsel %vm4432, 1.0, %v4396
        %v4469 = vsel %vm4433, 1.0, %v4397
        %v4470 = vsel %vm4434, 1.0, %v4398
        %v4471 = vsel %vm4435, 1.0, %v4399
        %v4472 = vsel %vm4436, 1.0, %v4400
        %v4473 = vsel %vm4437, 1.0, %v4401
        %v4474 = vsel %vm4438, 1.0, %v4402
        %v4475 = vsel %vm4439, 1.0, %v4403
        %v4476 = vsel %vm4440, 1.0, %v4404
        %v4477 = vsel %vm4441, 1.0, %v4405
        %v4478 = vsel %vm4442, 1.0, %v4406
        %v4479 = vsel %vm4443, 1.0, %v4407
        %v4480 = vsel %vm4444, 1.0, %v4408
        %v4481 = vsel %vm4445, 1.0, %v4409
        %v4482 = vsel %vm4446, 1.0, %v4410
        %v4483 = vsel %vm4447, 1.0, %v4411
        %v4484 = vsel %vm4448, 1.0, %v4412
        %v4485 = vsel %vm4449, 1.0, %v4413
        %v4486 = vsel %vm4450, 1.0, %v4414
        %v4487 = vsel %vm4451, 1.0, %v4415
        %v4488 = vsel %vm4452, 1.0, %v4416
        %v4489 = vsel %vm4453, 1.0, %v4417
        %v4490 = vsel %vm4454, 1.0, %v4418
        %v4491 = vsel %vm4455, 1.0, %v4419
        %v4492 = vsel %vm4456, 1.0, %v4420
        %v4493 = vrcp.pop %v4457
        %v4494 = vmul.f32 %v4457, %v4493
        %v4495 = vsub.f32 1.0, %v4494
        %v4496 = vmul.f32 %v4493, %v4495
        %v4497 = vadd.f32 %v4493, %v4496
        %vm4498 = vweird.f32 %v4457
        %vm4499 = vweird.f32 %v4493
        %vm4500 = vmor %vm4498, %vm4499
        %v4501 = vsel %vm4500, %v4493, %v4497
        %v4502 = vand.u32 2147483647, %v4457
        %vm4503 = vcmp.eq.f32.partialorder %v4502, 8.507059e+37
        %v4504 = vand.u32 %v4457, 2147483648
        %v4505 = vor.u32 1.1754944e-38, %v4504
        %v4506 = vsel %vm4503, %v4505, %v4501
        %v4507 = vrcp.pop %v4458
        %v4508 = vmul.f32 %v4458, %v4507
        %v4509 = vsub.f32 1.0, %v4508
        %v4510 = vmul.f32 %v4507, %v4509
        %v4511 = vadd.f32 %v4507, %v4510
        %vm4512 = vweird.f32 %v4458
        %vm4513 = vweird.f32 %v4507
        %vm4514 = vmor %vm4512, %vm4513
        %v4515 = vsel %vm4514, %v4507, %v4511
        %v4516 = vand.u32 2147483647, %v4458
        %vm4517 = vcmp.eq.f32.partialorder %v4516, 8.507059e+37
        %v4518 = vand.u32 %v4458, 2147483648
        %v4519 = vor.u32 1.1754944e-38, %v4518
        %v4520 = vsel %vm4517, %v4519, %v4515
        %v4521 = vrcp.pop %v4459
        %v4522 = vmul.f32 %v4459, %v4521
        %v4523 = vsub.f32 1.0, %v4522
        %v4524 = vmul.f32 %v4521, %v4523
        %v4525 = vadd.f32 %v4521, %v4524
        %vm4526 = vweird.f32 %v4459
        %vm4527 = vweird.f32 %v4521
        %vm4528 = vmor %vm4526, %vm4527
        %v4529 = vsel %vm4528, %v4521, %v4525
        %v4530 = vand.u32 2147483647, %v4459
        %vm4531 = vcmp.eq.f32.partialorder %v4530, 8.507059e+37
        %v4532 = vand.u32 %v4459, 2147483648
        %v4533 = vor.u32 1.1754944e-38, %v4532
        %v4534 = vsel %vm4531, %v4533, %v4529
        %v4535 = vrcp.pop %v4460
        %v4536 = vmul.f32 %v4460, %v4535
        %v4537 = vsub.f32 1.0, %v4536
        %v4538 = vmul.f32 %v4535, %v4537
        %v4539 = vadd.f32 %v4535, %v4538
        %vm4540 = vweird.f32 %v4460
        %vm4541 = vweird.f32 %v4535
        %vm4542 = vmor %vm4540, %vm4541
        %v4543 = vsel %vm4542, %v4535, %v4539
        %v4544 = vand.u32 2147483647, %v4460
        %vm4545 = vcmp.eq.f32.partialorder %v4544, 8.507059e+37
        %v4546 = vand.u32 %v4460, 2147483648
        %v4547 = vor.u32 1.1754944e-38, %v4546
        %v4548 = vsel %vm4545, %v4547, %v4543
        %v4549 = vrcp.pop %v4461
        %v4550 = vmul.f32 %v4461, %v4549
        %v4551 = vsub.f32 1.0, %v4550
        %v4552 = vmul.f32 %v4549, %v4551
        %v4553 = vadd.f32 %v4549, %v4552
        %vm4554 = vweird.f32 %v4461
        %vm4555 = vweird.f32 %v4549
        %vm4556 = vmor %vm4554, %vm4555
        %v4557 = vsel %vm4556, %v4549, %v4553
        %v4558 = vand.u32 2147483647, %v4461
        %vm4559 = vcmp.eq.f32.partialorder %v4558, 8.507059e+37
        %v4560 = vand.u32 %v4461, 2147483648
        %v4561 = vor.u32 1.1754944e-38, %v4560
        %v4562 = vsel %vm4559, %v4561, %v4557
        %v4563 = vrcp.pop %v4462
        %v4564 = vmul.f32 %v4462, %v4563
        %v4565 = vsub.f32 1.0, %v4564
        %v4566 = vmul.f32 %v4563, %v4565
        %v4567 = vadd.f32 %v4563, %v4566
        %vm4568 = vweird.f32 %v4462
        %vm4569 = vweird.f32 %v4563
        %vm4570 = vmor %vm4568, %vm4569
        %v4571 = vsel %vm4570, %v4563, %v4567
        %v4572 = vand.u32 2147483647, %v4462
        %vm4573 = vcmp.eq.f32.partialorder %v4572, 8.507059e+37
        %v4574 = vand.u32 %v4462, 2147483648
        %v4575 = vor.u32 1.1754944e-38, %v4574
        %v4576 = vsel %vm4573, %v4575, %v4571
        %v4577 = vrcp.pop %v4463
        %v4578 = vmul.f32 %v4463, %v4577
        %v4579 = vsub.f32 1.0, %v4578
        %v4580 = vmul.f32 %v4577, %v4579
        %v4581 = vadd.f32 %v4577, %v4580
        %vm4582 = vweird.f32 %v4463
        %vm4583 = vweird.f32 %v4577
        %vm4584 = vmor %vm4582, %vm4583
        %v4585 = vsel %vm4584, %v4577, %v4581
        %v4586 = vand.u32 2147483647, %v4463
        %vm4587 = vcmp.eq.f32.partialorder %v4586, 8.507059e+37
        %v4588 = vand.u32 %v4463, 2147483648
        %v4589 = vor.u32 1.1754944e-38, %v4588
        %v4590 = vsel %vm4587, %v4589, %v4585
        %v4591 = vrcp.pop %v4464
        %v4592 = vmul.f32 %v4464, %v4591
        %v4593 = vsub.f32 1.0, %v4592
        %v4594 = vmul.f32 %v4591, %v4593
        %v4595 = vadd.f32 %v4591, %v4594
        %vm4596 = vweird.f32 %v4464
        %vm4597 = vweird.f32 %v4591
        %vm4598 = vmor %vm4596, %vm4597
        %v4599 = vsel %vm4598, %v4591, %v4595
        %v4600 = vand.u32 2147483647, %v4464
        %vm4601 = vcmp.eq.f32.partialorder %v4600, 8.507059e+37
        %v4602 = vand.u32 %v4464, 2147483648
        %v4603 = vor.u32 1.1754944e-38, %v4602
        %v4604 = vsel %vm4601, %v4603, %v4599
        %v4605 = vrcp.pop %v4465
        %v4606 = vmul.f32 %v4465, %v4605
        %v4607 = vsub.f32 1.0, %v4606
        %v4608 = vmul.f32 %v4605, %v4607
        %v4609 = vadd.f32 %v4605, %v4608
        %vm4610 = vweird.f32 %v4465
        %vm4611 = vweird.f32 %v4605
        %vm4612 = vmor %vm4610, %vm4611
        %v4613 = vsel %vm4612, %v4605, %v4609
        %v4614 = vand.u32 2147483647, %v4465
        %vm4615 = vcmp.eq.f32.partialorder %v4614, 8.507059e+37
        %v4616 = vand.u32 %v4465, 2147483648
        %v4617 = vor.u32 1.1754944e-38, %v4616
        %v4618 = vsel %vm4615, %v4617, %v4613
        %v4619 = vrcp.pop %v4466
        %v4620 = vmul.f32 %v4466, %v4619
        %v4621 = vsub.f32 1.0, %v4620
        %v4622 = vmul.f32 %v4619, %v4621
        %v4623 = vadd.f32 %v4619, %v4622
        %vm4624 = vweird.f32 %v4466
        %vm4625 = vweird.f32 %v4619
        %vm4626 = vmor %vm4624, %vm4625
        %v4627 = vsel %vm4626, %v4619, %v4623
        %v4628 = vand.u32 2147483647, %v4466
        %vm4629 = vcmp.eq.f32.partialorder %v4628, 8.507059e+37
        %v4630 = vand.u32 %v4466, 2147483648
        %v4631 = vor.u32 1.1754944e-38, %v4630
        %v4632 = vsel %vm4629, %v4631, %v4627
        %v4633 = vrcp.pop %v4467
        %v4634 = vmul.f32 %v4467, %v4633
        %v4635 = vsub.f32 1.0, %v4634
        %v4636 = vmul.f32 %v4633, %v4635
        %v4637 = vadd.f32 %v4633, %v4636
        %vm4638 = vweird.f32 %v4467
        %vm4639 = vweird.f32 %v4633
        %vm4640 = vmor %vm4638, %vm4639
        %v4641 = vsel %vm4640, %v4633, %v4637
        %v4642 = vand.u32 2147483647, %v4467
        %vm4643 = vcmp.eq.f32.partialorder %v4642, 8.507059e+37
        %v4644 = vand.u32 %v4467, 2147483648
        %v4645 = vor.u32 1.1754944e-38, %v4644
        %v4646 = vsel %vm4643, %v4645, %v4641
        %v4647 = vrcp.pop %v4468
        %v4648 = vmul.f32 %v4468, %v4647
        %v4649 = vsub.f32 1.0, %v4648
        %v4650 = vmul.f32 %v4647, %v4649
        %v4651 = vadd.f32 %v4647, %v4650
        %vm4652 = vweird.f32 %v4468
        %vm4653 = vweird.f32 %v4647
        %vm4654 = vmor %vm4652, %vm4653
        %v4655 = vsel %vm4654, %v4647, %v4651
        %v4656 = vand.u32 2147483647, %v4468
        %vm4657 = vcmp.eq.f32.partialorder %v4656, 8.507059e+37
        %v4658 = vand.u32 %v4468, 2147483648
        %v4659 = vor.u32 1.1754944e-38, %v4658
        %v4660 = vsel %vm4657, %v4659, %v4655
        %v4661 = vrcp.pop %v4469
        %v4662 = vmul.f32 %v4469, %v4661
        %v4663 = vsub.f32 1.0, %v4662
        %v4664 = vmul.f32 %v4661, %v4663
        %v4665 = vadd.f32 %v4661, %v4664
        %vm4666 = vweird.f32 %v4469
        %vm4667 = vweird.f32 %v4661
        %vm4668 = vmor %vm4666, %vm4667
        %v4669 = vsel %vm4668, %v4661, %v4665
        %v4670 = vand.u32 2147483647, %v4469
        %vm4671 = vcmp.eq.f32.partialorder %v4670, 8.507059e+37
        %v4672 = vand.u32 %v4469, 2147483648
        %v4673 = vor.u32 1.1754944e-38, %v4672
        %v4674 = vsel %vm4671, %v4673, %v4669
        %v4675 = vrcp.pop %v4470
        %v4676 = vmul.f32 %v4470, %v4675
        %v4677 = vsub.f32 1.0, %v4676
        %v4678 = vmul.f32 %v4675, %v4677
        %v4679 = vadd.f32 %v4675, %v4678
        %vm4680 = vweird.f32 %v4470
        %vm4681 = vweird.f32 %v4675
        %vm4682 = vmor %vm4680, %vm4681
        %v4683 = vsel %vm4682, %v4675, %v4679
        %v4684 = vand.u32 2147483647, %v4470
        %vm4685 = vcmp.eq.f32.partialorder %v4684, 8.507059e+37
        %v4686 = vand.u32 %v4470, 2147483648
        %v4687 = vor.u32 1.1754944e-38, %v4686
        %v4688 = vsel %vm4685, %v4687, %v4683
        %v4689 = vrcp.pop %v4471
        %v4690 = vmul.f32 %v4471, %v4689
        %v4691 = vsub.f32 1.0, %v4690
        %v4692 = vmul.f32 %v4689, %v4691
        %v4693 = vadd.f32 %v4689, %v4692
        %vm4694 = vweird.f32 %v4471
        %vm4695 = vweird.f32 %v4689
        %vm4696 = vmor %vm4694, %vm4695
        %v4697 = vsel %vm4696, %v4689, %v4693
        %v4698 = vand.u32 2147483647, %v4471
        %vm4699 = vcmp.eq.f32.partialorder %v4698, 8.507059e+37
        %v4700 = vand.u32 %v4471, 2147483648
        %v4701 = vor.u32 1.1754944e-38, %v4700
        %v4702 = vsel %vm4699, %v4701, %v4697
        %v4703 = vrcp.pop %v4472
        %v4704 = vmul.f32 %v4472, %v4703
        %v4705 = vsub.f32 1.0, %v4704
        %v4706 = vmul.f32 %v4703, %v4705
        %v4707 = vadd.f32 %v4703, %v4706
        %vm4708 = vweird.f32 %v4472
        %vm4709 = vweird.f32 %v4703
        %vm4710 = vmor %vm4708, %vm4709
        %v4711 = vsel %vm4710, %v4703, %v4707
        %v4712 = vand.u32 2147483647, %v4472
        %vm4713 = vcmp.eq.f32.partialorder %v4712, 8.507059e+37
        %v4714 = vand.u32 %v4472, 2147483648
        %v4715 = vor.u32 1.1754944e-38, %v4714
        %v4716 = vsel %vm4713, %v4715, %v4711
        %v4717 = vrcp.pop %v4473
        %v4718 = vmul.f32 %v4473, %v4717
        %v4719 = vsub.f32 1.0, %v4718
        %v4720 = vmul.f32 %v4717, %v4719
        %v4721 = vadd.f32 %v4717, %v4720
        %vm4722 = vweird.f32 %v4473
        %vm4723 = vweird.f32 %v4717
        %vm4724 = vmor %vm4722, %vm4723
        %v4725 = vsel %vm4724, %v4717, %v4721
        %v4726 = vand.u32 2147483647, %v4473
        %vm4727 = vcmp.eq.f32.partialorder %v4726, 8.507059e+37
        %v4728 = vand.u32 %v4473, 2147483648
        %v4729 = vor.u32 1.1754944e-38, %v4728
        %v4730 = vsel %vm4727, %v4729, %v4725
        %v4731 = vrcp.pop %v4474
        %v4732 = vmul.f32 %v4474, %v4731
        %v4733 = vsub.f32 1.0, %v4732
        %v4734 = vmul.f32 %v4731, %v4733
        %v4735 = vadd.f32 %v4731, %v4734
        %vm4736 = vweird.f32 %v4474
        %vm4737 = vweird.f32 %v4731
        %vm4738 = vmor %vm4736, %vm4737
        %v4739 = vsel %vm4738, %v4731, %v4735
        %v4740 = vand.u32 2147483647, %v4474
        %vm4741 = vcmp.eq.f32.partialorder %v4740, 8.507059e+37
        %v4742 = vand.u32 %v4474, 2147483648
        %v4743 = vor.u32 1.1754944e-38, %v4742
        %v4744 = vsel %vm4741, %v4743, %v4739
        %v4745 = vrcp.pop %v4475
        %v4746 = vmul.f32 %v4475, %v4745
        %v4747 = vsub.f32 1.0, %v4746
        %v4748 = vmul.f32 %v4745, %v4747
        %v4749 = vadd.f32 %v4745, %v4748
        %vm4750 = vweird.f32 %v4475
        %vm4751 = vweird.f32 %v4745
        %vm4752 = vmor %vm4750, %vm4751
        %v4753 = vsel %vm4752, %v4745, %v4749
        %v4754 = vand.u32 2147483647, %v4475
        %vm4755 = vcmp.eq.f32.partialorder %v4754, 8.507059e+37
        %v4756 = vand.u32 %v4475, 2147483648
        %v4757 = vor.u32 1.1754944e-38, %v4756
        %v4758 = vsel %vm4755, %v4757, %v4753
        %v4759 = vrcp.pop %v4476
        %v4760 = vmul.f32 %v4476, %v4759
        %v4761 = vsub.f32 1.0, %v4760
        %v4762 = vmul.f32 %v4759, %v4761
        %v4763 = vadd.f32 %v4759, %v4762
        %vm4764 = vweird.f32 %v4476
        %vm4765 = vweird.f32 %v4759
        %vm4766 = vmor %vm4764, %vm4765
        %v4767 = vsel %vm4766, %v4759, %v4763
        %v4768 = vand.u32 2147483647, %v4476
        %vm4769 = vcmp.eq.f32.partialorder %v4768, 8.507059e+37
        %v4770 = vand.u32 %v4476, 2147483648
        %v4771 = vor.u32 1.1754944e-38, %v4770
        %v4772 = vsel %vm4769, %v4771, %v4767
        %v4773 = vrcp.pop %v4477
        %v4774 = vmul.f32 %v4477, %v4773
        %v4775 = vsub.f32 1.0, %v4774
        %v4776 = vmul.f32 %v4773, %v4775
        %v4777 = vadd.f32 %v4773, %v4776
        %vm4778 = vweird.f32 %v4477
        %vm4779 = vweird.f32 %v4773
        %vm4780 = vmor %vm4778, %vm4779
        %v4781 = vsel %vm4780, %v4773, %v4777
        %v4782 = vand.u32 2147483647, %v4477
        %vm4783 = vcmp.eq.f32.partialorder %v4782, 8.507059e+37
        %v4784 = vand.u32 %v4477, 2147483648
        %v4785 = vor.u32 1.1754944e-38, %v4784
        %v4786 = vsel %vm4783, %v4785, %v4781
        %v4787 = vrcp.pop %v4478
        %v4788 = vmul.f32 %v4478, %v4787
        %v4789 = vsub.f32 1.0, %v4788
        %v4790 = vmul.f32 %v4787, %v4789
        %v4791 = vadd.f32 %v4787, %v4790
        %vm4792 = vweird.f32 %v4478
        %vm4793 = vweird.f32 %v4787
        %vm4794 = vmor %vm4792, %vm4793
        %v4795 = vsel %vm4794, %v4787, %v4791
        %v4796 = vand.u32 2147483647, %v4478
        %vm4797 = vcmp.eq.f32.partialorder %v4796, 8.507059e+37
        %v4798 = vand.u32 %v4478, 2147483648
        %v4799 = vor.u32 1.1754944e-38, %v4798
        %v4800 = vsel %vm4797, %v4799, %v4795
        %v4801 = vrcp.pop %v4479
        %v4802 = vmul.f32 %v4479, %v4801
        %v4803 = vsub.f32 1.0, %v4802
        %v4804 = vmul.f32 %v4801, %v4803
        %v4805 = vadd.f32 %v4801, %v4804
        %vm4806 = vweird.f32 %v4479
        %vm4807 = vweird.f32 %v4801
        %vm4808 = vmor %vm4806, %vm4807
        %v4809 = vsel %vm4808, %v4801, %v4805
        %v4810 = vand.u32 2147483647, %v4479
        %vm4811 = vcmp.eq.f32.partialorder %v4810, 8.507059e+37
        %v4812 = vand.u32 %v4479, 2147483648
        %v4813 = vor.u32 1.1754944e-38, %v4812
        %v4814 = vsel %vm4811, %v4813, %v4809
        %v4815 = vrcp.pop %v4480
        %v4816 = vmul.f32 %v4480, %v4815
        %v4817 = vsub.f32 1.0, %v4816
        %v4818 = vmul.f32 %v4815, %v4817
        %v4819 = vadd.f32 %v4815, %v4818
        %vm4820 = vweird.f32 %v4480
        %vm4821 = vweird.f32 %v4815
        %vm4822 = vmor %vm4820, %vm4821
        %v4823 = vsel %vm4822, %v4815, %v4819
        %v4824 = vand.u32 2147483647, %v4480
        %vm4825 = vcmp.eq.f32.partialorder %v4824, 8.507059e+37
        %v4826 = vand.u32 %v4480, 2147483648
        %v4827 = vor.u32 1.1754944e-38, %v4826
        %v4828 = vsel %vm4825, %v4827, %v4823
        %v4829 = vrcp.pop %v4481
        %v4830 = vmul.f32 %v4481, %v4829
        %v4831 = vsub.f32 1.0, %v4830
        %v4832 = vmul.f32 %v4829, %v4831
        %v4833 = vadd.f32 %v4829, %v4832
        %vm4834 = vweird.f32 %v4481
        %vm4835 = vweird.f32 %v4829
        %vm4836 = vmor %vm4834, %vm4835
        %v4837 = vsel %vm4836, %v4829, %v4833
        %v4838 = vand.u32 2147483647, %v4481
        %vm4839 = vcmp.eq.f32.partialorder %v4838, 8.507059e+37
        %v4840 = vand.u32 %v4481, 2147483648
        %v4841 = vor.u32 1.1754944e-38, %v4840
        %v4842 = vsel %vm4839, %v4841, %v4837
        %v4843 = vrcp.pop %v4482
        %v4844 = vmul.f32 %v4482, %v4843
        %v4845 = vsub.f32 1.0, %v4844
        %v4846 = vmul.f32 %v4843, %v4845
        %v4847 = vadd.f32 %v4843, %v4846
        %vm4848 = vweird.f32 %v4482
        %vm4849 = vweird.f32 %v4843
        %vm4850 = vmor %vm4848, %vm4849
        %v4851 = vsel %vm4850, %v4843, %v4847
        %v4852 = vand.u32 2147483647, %v4482
        %vm4853 = vcmp.eq.f32.partialorder %v4852, 8.507059e+37
        %v4854 = vand.u32 %v4482, 2147483648
        %v4855 = vor.u32 1.1754944e-38, %v4854
        %v4856 = vsel %vm4853, %v4855, %v4851
        %v4857 = vrcp.pop %v4483
        %v4858 = vmul.f32 %v4483, %v4857
        %v4859 = vsub.f32 1.0, %v4858
        %v4860 = vmul.f32 %v4857, %v4859
        %v4861 = vadd.f32 %v4857, %v4860
        %vm4862 = vweird.f32 %v4483
        %vm4863 = vweird.f32 %v4857
        %vm4864 = vmor %vm4862, %vm4863
        %v4865 = vsel %vm4864, %v4857, %v4861
        %v4866 = vand.u32 2147483647, %v4483
        %vm4867 = vcmp.eq.f32.partialorder %v4866, 8.507059e+37
        %v4868 = vand.u32 %v4483, 2147483648
        %v4869 = vor.u32 1.1754944e-38, %v4868
        %v4870 = vsel %vm4867, %v4869, %v4865
        %v4871 = vrcp.pop %v4484
        %v4872 = vmul.f32 %v4484, %v4871
        %v4873 = vsub.f32 1.0, %v4872
        %v4874 = vmul.f32 %v4871, %v4873
        %v4875 = vadd.f32 %v4871, %v4874
        %vm4876 = vweird.f32 %v4484
        %vm4877 = vweird.f32 %v4871
        %vm4878 = vmor %vm4876, %vm4877
        %v4879 = vsel %vm4878, %v4871, %v4875
        %v4880 = vand.u32 2147483647, %v4484
        %vm4881 = vcmp.eq.f32.partialorder %v4880, 8.507059e+37
        %v4882 = vand.u32 %v4484, 2147483648
        %v4883 = vor.u32 1.1754944e-38, %v4882
        %v4884 = vsel %vm4881, %v4883, %v4879
        %v4885 = vrcp.pop %v4485
        %v4886 = vmul.f32 %v4485, %v4885
        %v4887 = vsub.f32 1.0, %v4886
        %v4888 = vmul.f32 %v4885, %v4887
        %v4889 = vadd.f32 %v4885, %v4888
        %vm4890 = vweird.f32 %v4485
        %vm4891 = vweird.f32 %v4885
        %vm4892 = vmor %vm4890, %vm4891
        %v4893 = vsel %vm4892, %v4885, %v4889
        %v4894 = vand.u32 2147483647, %v4485
        %vm4895 = vcmp.eq.f32.partialorder %v4894, 8.507059e+37
        %v4896 = vand.u32 %v4485, 2147483648
        %v4897 = vor.u32 1.1754944e-38, %v4896
        %v4898 = vsel %vm4895, %v4897, %v4893
        %v4899 = vrcp.pop %v4486
        %v4900 = vmul.f32 %v4486, %v4899
        %v4901 = vsub.f32 1.0, %v4900
        %v4902 = vmul.f32 %v4899, %v4901
        %v4903 = vadd.f32 %v4899, %v4902
        %vm4904 = vweird.f32 %v4486
        %vm4905 = vweird.f32 %v4899
        %vm4906 = vmor %vm4904, %vm4905
        %v4907 = vsel %vm4906, %v4899, %v4903
        %v4908 = vand.u32 2147483647, %v4486
        %vm4909 = vcmp.eq.f32.partialorder %v4908, 8.507059e+37
        %v4910 = vand.u32 %v4486, 2147483648
        %v4911 = vor.u32 1.1754944e-38, %v4910
        %v4912 = vsel %vm4909, %v4911, %v4907
        %v4913 = vrcp.pop %v4487
        %v4914 = vmul.f32 %v4487, %v4913
        %v4915 = vsub.f32 1.0, %v4914
        %v4916 = vmul.f32 %v4913, %v4915
        %v4917 = vadd.f32 %v4913, %v4916
        %vm4918 = vweird.f32 %v4487
        %vm4919 = vweird.f32 %v4913
        %vm4920 = vmor %vm4918, %vm4919
        %v4921 = vsel %vm4920, %v4913, %v4917
        %v4922 = vand.u32 2147483647, %v4487
        %vm4923 = vcmp.eq.f32.partialorder %v4922, 8.507059e+37
        %v4924 = vand.u32 %v4487, 2147483648
        %v4925 = vor.u32 1.1754944e-38, %v4924
        %v4926 = vsel %vm4923, %v4925, %v4921
        %v4927 = vrcp.pop %v4488
        %v4928 = vmul.f32 %v4488, %v4927
        %v4929 = vsub.f32 1.0, %v4928
        %v4930 = vmul.f32 %v4927, %v4929
        %v4931 = vadd.f32 %v4927, %v4930
        %vm4932 = vweird.f32 %v4488
        %vm4933 = vweird.f32 %v4927
        %vm4934 = vmor %vm4932, %vm4933
        %v4935 = vsel %vm4934, %v4927, %v4931
        %v4936 = vand.u32 2147483647, %v4488
        %vm4937 = vcmp.eq.f32.partialorder %v4936, 8.507059e+37
        %v4938 = vand.u32 %v4488, 2147483648
        %v4939 = vor.u32 1.1754944e-38, %v4938
        %v4940 = vsel %vm4937, %v4939, %v4935
        %v4941 = vrcp.pop %v4489
        %v4942 = vmul.f32 %v4489, %v4941
        %v4943 = vsub.f32 1.0, %v4942
        %v4944 = vmul.f32 %v4941, %v4943
        %v4945 = vadd.f32 %v4941, %v4944
        %vm4946 = vweird.f32 %v4489
        %vm4947 = vweird.f32 %v4941
        %vm4948 = vmor %vm4946, %vm4947
        %v4949 = vsel %vm4948, %v4941, %v4945
        %v4950 = vand.u32 2147483647, %v4489
        %vm4951 = vcmp.eq.f32.partialorder %v4950, 8.507059e+37
        %v4952 = vand.u32 %v4489, 2147483648
        %v4953 = vor.u32 1.1754944e-38, %v4952
        %v4954 = vsel %vm4951, %v4953, %v4949
        %v4955 = vrcp.pop %v4490
        %v4956 = vmul.f32 %v4490, %v4955
        %v4957 = vsub.f32 1.0, %v4956
        %v4958 = vmul.f32 %v4955, %v4957
        %v4959 = vadd.f32 %v4955, %v4958
        %vm4960 = vweird.f32 %v4490
        %vm4961 = vweird.f32 %v4955
        %vm4962 = vmor %vm4960, %vm4961
        %v4963 = vsel %vm4962, %v4955, %v4959
        %v4964 = vand.u32 2147483647, %v4490
        %vm4965 = vcmp.eq.f32.partialorder %v4964, 8.507059e+37
        %v4966 = vand.u32 %v4490, 2147483648
        %v4967 = vor.u32 1.1754944e-38, %v4966
        %v4968 = vsel %vm4965, %v4967, %v4963
        %v4969 = vrcp.pop %v4491
        %v4970 = vmul.f32 %v4491, %v4969
        %v4971 = vsub.f32 1.0, %v4970
        %v4972 = vmul.f32 %v4969, %v4971
        %v4973 = vadd.f32 %v4969, %v4972
        %vm4974 = vweird.f32 %v4491
        %vm4975 = vweird.f32 %v4969
        %vm4976 = vmor %vm4974, %vm4975
        %v4977 = vsel %vm4976, %v4969, %v4973
        %v4978 = vand.u32 2147483647, %v4491
        %vm4979 = vcmp.eq.f32.partialorder %v4978, 8.507059e+37
        %v4980 = vand.u32 %v4491, 2147483648
        %v4981 = vor.u32 1.1754944e-38, %v4980
        %v4982 = vsel %vm4979, %v4981, %v4977
        %v4983 = vrcp.pop %v4492
        %v4984 = vmul.f32 %v4492, %v4983
        %v4985 = vsub.f32 1.0, %v4984
        %v4986 = vmul.f32 %v4983, %v4985
        %v4987 = vadd.f32 %v4983, %v4986
        %vm4988 = vweird.f32 %v4492
        %vm4989 = vweird.f32 %v4983
        %vm4990 = vmor %vm4988, %vm4989
        %v4991 = vsel %vm4990, %v4983, %v4987
        %v4992 = vand.u32 2147483647, %v4492
        %vm4993 = vcmp.eq.f32.partialorder %v4992, 8.507059e+37
        %v4994 = vand.u32 %v4492, 2147483648
        %v4995 = vor.u32 1.1754944e-38, %v4994
        %v4996 = vsel %vm4993, %v4995, %v4991
        %v4997 = vld [vmem:[%s205] sm:$0xff]
        %v4998 = vld [vmem:[%s205 + $0x8] sm:$0xff]
        %v4999 = vld [vmem:[%s205 + $0x10] sm:$0xff]
        %v5000 = vld [vmem:[%s205 + $0x18] sm:$0xff]
        %v5001 = vld [vmem:[%s205 + $0x20] sm:$0xff]
        %v5002 = vld [vmem:[%s205 + $0x28] sm:$0xff]
        %v5003 = vld [vmem:[%s205 + $0x30] sm:$0xff]
        %v5004 = vld [vmem:[%s205 + $0x38] sm:$0xff]
        %v5005 = vld [vmem:[%s205 + $0x40] sm:$0xff]
        %v5006 = vld [vmem:[%s205 + $0x48] sm:$0xff]
        %v5007 = vld [vmem:[%s205 + $0x50] sm:$0xff]
        %v5008 = vld [vmem:[%s205 + $0x58] sm:$0xff]
        %v5009 = vld [vmem:[%s205 + $0x60] sm:$0xff]
        %v5010 = vld [vmem:[%s205 + $0x68] sm:$0xff]
        %v5011 = vld [vmem:[%s205 + $0x70] sm:$0xff]
        %v5012 = vld [vmem:[%s205 + $0x78] sm:$0xff]
        %v5013 = vld [vmem:[%s205 + $0x80] sm:$0xff]
        %v5014 = vld [vmem:[%s205 + $0x88] sm:$0xff]
        %v5015 = vld [vmem:[%s205 + $0x90] sm:$0xff]
        %v5016 = vld [vmem:[%s205 + $0x98] sm:$0xff]
        %v5017 = vld [vmem:[%s205 + $0xa0] sm:$0xff]
        %v5018 = vld [vmem:[%s205 + $0xa8] sm:$0xff]
        %v5019 = vld [vmem:[%s205 + $0xb0] sm:$0xff]
        %v5020 = vld [vmem:[%s205 + $0xb8] sm:$0xff]
        %v5021 = vld [vmem:[%s205 + $0xc0] sm:$0xff]
        %v5022 = vld [vmem:[%s205 + $0xc8] sm:$0xff]
        %v5023 = vld [vmem:[%s205 + $0xd0] sm:$0xff]
        %v5024 = vld [vmem:[%s205 + $0xd8] sm:$0xff]
        %v5025 = vld [vmem:[%s205 + $0xe0] sm:$0xff]
        %v5026 = vld [vmem:[%s205 + $0xe8] sm:$0xff]
        %v5027 = vld [vmem:[%s205 + $0xf0] sm:$0xff]
        %v5028 = vld [vmem:[%s205 + $0xf8] sm:$0xff]
        %v5029 = vld [vmem:[%s205 + $0x100] sm:$0xff]
        %v5030 = vld [vmem:[%s205 + $0x108] sm:$0xff]
        %v5031 = vld [vmem:[%s205 + $0x110] sm:$0xff]
        %v5032 = vld [vmem:[%s205 + $0x118] sm:$0xff]
        %5034 = vset.pattern.permute.xlu0 0
        %5035 = vperm.xlu0 %5034, %v4506
        %v5036 = vpop.permute.xlu0 %5035
        %5039 = vset.pattern.permute.xlu0 0
        %5040 = vperm.xlu0 %5039, %v4520
        %v5041 = vpop.permute.xlu0 %5040
        %5044 = vset.pattern.permute.xlu0 0
        %5045 = vperm.xlu0 %5044, %v4534
        %v5046 = vpop.permute.xlu0 %5045
        %5049 = vset.pattern.permute.xlu0 0
        %5050 = vperm.xlu0 %5049, %v4548
        %v5051 = vpop.permute.xlu0 %5050
        %5054 = vset.pattern.permute.xlu0 0
        %5055 = vperm.xlu0 %5054, %v4562
        %v5056 = vpop.permute.xlu0 %5055
        %5059 = vset.pattern.permute.xlu0 0
        %5060 = vperm.xlu0 %5059, %v4576
        %v5061 = vpop.permute.xlu0 %5060
        %5064 = vset.pattern.permute.xlu0 0
        %5065 = vperm.xlu0 %5064, %v4590
        %v5066 = vpop.permute.xlu0 %5065
        %5069 = vset.pattern.permute.xlu0 0
        %5070 = vperm.xlu0 %5069, %v4604
        %v5071 = vpop.permute.xlu0 %5070
        %5074 = vset.pattern.permute.xlu0 0
        %5075 = vperm.xlu0 %5074, %v4618
        %v5076 = vpop.permute.xlu0 %5075
        %5079 = vset.pattern.permute.xlu0 0
        %5080 = vperm.xlu0 %5079, %v4632
        %v5081 = vpop.permute.xlu0 %5080
        %5084 = vset.pattern.permute.xlu0 0
        %5085 = vperm.xlu0 %5084, %v4646
        %v5086 = vpop.permute.xlu0 %5085
        %5089 = vset.pattern.permute.xlu0 0
        %5090 = vperm.xlu0 %5089, %v4660
        %v5091 = vpop.permute.xlu0 %5090
        %5094 = vset.pattern.permute.xlu0 0
        %5095 = vperm.xlu0 %5094, %v4674
        %v5096 = vpop.permute.xlu0 %5095
        %5099 = vset.pattern.permute.xlu0 0
        %5100 = vperm.xlu0 %5099, %v4688
        %v5101 = vpop.permute.xlu0 %5100
        %5104 = vset.pattern.permute.xlu0 0
        %5105 = vperm.xlu0 %5104, %v4702
        %v5106 = vpop.permute.xlu0 %5105
        %5109 = vset.pattern.permute.xlu0 0
        %5110 = vperm.xlu0 %5109, %v4716
        %v5111 = vpop.permute.xlu0 %5110
        %5114 = vset.pattern.permute.xlu0 0
        %5115 = vperm.xlu0 %5114, %v4730
        %v5116 = vpop.permute.xlu0 %5115
        %5119 = vset.pattern.permute.xlu0 0
        %5120 = vperm.xlu0 %5119, %v4744
        %v5121 = vpop.permute.xlu0 %5120
        %5124 = vset.pattern.permute.xlu0 0
        %5125 = vperm.xlu0 %5124, %v4758
        %v5126 = vpop.permute.xlu0 %5125
        %5129 = vset.pattern.permute.xlu0 0
        %5130 = vperm.xlu0 %5129, %v4772
        %v5131 = vpop.permute.xlu0 %5130
        %5134 = vset.pattern.permute.xlu0 0
        %5135 = vperm.xlu0 %5134, %v4786
        %v5136 = vpop.permute.xlu0 %5135
        %5139 = vset.pattern.permute.xlu0 0
        %5140 = vperm.xlu0 %5139, %v4800
        %v5141 = vpop.permute.xlu0 %5140
        %5144 = vset.pattern.permute.xlu0 0
        %5145 = vperm.xlu0 %5144, %v4814
        %v5146 = vpop.permute.xlu0 %5145
        %5149 = vset.pattern.permute.xlu0 0
        %5150 = vperm.xlu0 %5149, %v4828
        %v5151 = vpop.permute.xlu0 %5150
        %5154 = vset.pattern.permute.xlu0 0
        %5155 = vperm.xlu0 %5154, %v4842
        %v5156 = vpop.permute.xlu0 %5155
        %5159 = vset.pattern.permute.xlu0 0
        %5160 = vperm.xlu0 %5159, %v4856
        %v5161 = vpop.permute.xlu0 %5160
        %5164 = vset.pattern.permute.xlu0 0
        %5165 = vperm.xlu0 %5164, %v4870
        %v5166 = vpop.permute.xlu0 %5165
        %5169 = vset.pattern.permute.xlu0 0
        %5170 = vperm.xlu0 %5169, %v4884
        %v5171 = vpop.permute.xlu0 %5170
        %5174 = vset.pattern.permute.xlu0 0
        %5175 = vperm.xlu0 %5174, %v4898
        %v5176 = vpop.permute.xlu0 %5175
        %5179 = vset.pattern.permute.xlu0 0
        %5180 = vperm.xlu0 %5179, %v4912
        %v5181 = vpop.permute.xlu0 %5180
        %5184 = vset.pattern.permute.xlu0 0
        %5185 = vperm.xlu0 %5184, %v4926
        %v5186 = vpop.permute.xlu0 %5185
        %5189 = vset.pattern.permute.xlu0 0
        %5190 = vperm.xlu0 %5189, %v4940
        %v5191 = vpop.permute.xlu0 %5190
        %5194 = vset.pattern.permute.xlu0 0
        %5195 = vperm.xlu0 %5194, %v4954
        %v5196 = vpop.permute.xlu0 %5195
        %5199 = vset.pattern.permute.xlu0 0
        %5200 = vperm.xlu0 %5199, %v4968
        %v5201 = vpop.permute.xlu0 %5200
        %5204 = vset.pattern.permute.xlu0 0
        %5205 = vperm.xlu0 %5204, %v4982
        %v5206 = vpop.permute.xlu0 %5205
        %5209 = vset.pattern.permute.xlu0 0
        %5210 = vperm.xlu0 %5209, %v4996
        %v5211 = vpop.permute.xlu0 %5210
        %v5213 = vmul.f32 %v4997, %v5036
        %v5214 = vmul.f32 %v4998, %v5041
        %v5215 = vmul.f32 %v4999, %v5046
        %v5216 = vmul.f32 %v5000, %v5051
        %v5217 = vmul.f32 %v5001, %v5056
        %v5218 = vmul.f32 %v5002, %v5061
        %v5219 = vmul.f32 %v5003, %v5066
        %v5220 = vmul.f32 %v5004, %v5071
        %v5221 = vmul.f32 %v5005, %v5076
        %v5222 = vmul.f32 %v5006, %v5081
        %v5223 = vmul.f32 %v5007, %v5086
        %v5224 = vmul.f32 %v5008, %v5091
        %v5225 = vmul.f32 %v5009, %v5096
        %v5226 = vmul.f32 %v5010, %v5101
        %v5227 = vmul.f32 %v5011, %v5106
        %v5228 = vmul.f32 %v5012, %v5111
        %v5229 = vmul.f32 %v5013, %v5116
        %v5230 = vmul.f32 %v5014, %v5121
        %v5231 = vmul.f32 %v5015, %v5126
        %v5232 = vmul.f32 %v5016, %v5131
        %v5233 = vmul.f32 %v5017, %v5136
        %v5234 = vmul.f32 %v5018, %v5141
        %v5235 = vmul.f32 %v5019, %v5146
        %v5236 = vmul.f32 %v5020, %v5151
        %v5237 = vmul.f32 %v5021, %v5156
        %v5238 = vmul.f32 %v5022, %v5161
        %v5239 = vmul.f32 %v5023, %v5166
        %v5240 = vmul.f32 %v5024, %v5171
        %v5241 = vmul.f32 %v5025, %v5176
        %v5242 = vmul.f32 %v5026, %v5181
        %v5243 = vmul.f32 %v5027, %v5186
        %v5244 = vmul.f32 %v5028, %v5191
        %v5245 = vmul.f32 %v5029, %v5196
        %v5246 = vmul.f32 %v5030, %v5201
        %v5247 = vmul.f32 %v5031, %v5206
        %v5248 = vmul.f32 %v5032, %v5211
        %v5249 = vld [vmem:[%s3] sm:$0x1]
        %v5251 = vperm.slane %v5249, 0
        %v5253 = vadd.f32 %v5213, %v5251
        %v5254 = vadd.f32 %v5214, %v5251
        %v5255 = vadd.f32 %v5215, %v5251
        %v5256 = vadd.f32 %v5216, %v5251
        %v5257 = vadd.f32 %v5217, %v5251
        %v5258 = vadd.f32 %v5218, %v5251
        %v5259 = vadd.f32 %v5219, %v5251
        %v5260 = vadd.f32 %v5220, %v5251
        %v5261 = vadd.f32 %v5221, %v5251
        %v5262 = vadd.f32 %v5222, %v5251
        %v5263 = vadd.f32 %v5223, %v5251
        %v5264 = vadd.f32 %v5224, %v5251
        %v5265 = vadd.f32 %v5225, %v5251
        %v5266 = vadd.f32 %v5226, %v5251
        %v5267 = vadd.f32 %v5227, %v5251
        %v5268 = vadd.f32 %v5228, %v5251
        %v5269 = vadd.f32 %v5229, %v5251
        %v5270 = vadd.f32 %v5230, %v5251
        %v5271 = vadd.f32 %v5231, %v5251
        %v5272 = vadd.f32 %v5232, %v5251
        %v5273 = vadd.f32 %v5233, %v5251
        %v5274 = vadd.f32 %v5234, %v5251
        %v5275 = vadd.f32 %v5235, %v5251
        %v5276 = vadd.f32 %v5236, %v5251
        %v5277 = vadd.f32 %v5237, %v5251
        %v5278 = vadd.f32 %v5238, %v5251
        %v5279 = vadd.f32 %v5239, %v5251
        %v5280 = vadd.f32 %v5240, %v5251
        %v5281 = vadd.f32 %v5241, %v5251
        %v5282 = vadd.f32 %v5242, %v5251
        %v5283 = vadd.f32 %v5243, %v5251
        %v5284 = vadd.f32 %v5244, %v5251
        %v5285 = vadd.f32 %v5245, %v5251
        %v5286 = vadd.f32 %v5246, %v5251
        %v5287 = vadd.f32 %v5247, %v5251
        %v5288 = vadd.f32 %v5248, %v5251
        %v5289 = vsel %vm4421, 1, 0
        %v5290 = vsel %vm4422, 1, 0
        %v5291 = vsel %vm4423, 1, 0
        %v5292 = vsel %vm4424, 1, 0
        %v5293 = vsel %vm4425, 1, 0
        %v5294 = vsel %vm4426, 1, 0
        %v5295 = vsel %vm4427, 1, 0
        %v5296 = vsel %vm4428, 1, 0
        %v5297 = vsel %vm4429, 1, 0
        %v5298 = vsel %vm4430, 1, 0
        %v5299 = vsel %vm4431, 1, 0
        %v5300 = vsel %vm4432, 1, 0
        %v5301 = vsel %vm4433, 1, 0
        %v5302 = vsel %vm4434, 1, 0
        %v5303 = vsel %vm4435, 1, 0
        %v5304 = vsel %vm4436, 1, 0
        %v5305 = vsel %vm4437, 1, 0
        %v5306 = vsel %vm4438, 1, 0
        %v5307 = vsel %vm4439, 1, 0
        %v5308 = vsel %vm4440, 1, 0
        %v5309 = vsel %vm4441, 1, 0
        %v5310 = vsel %vm4442, 1, 0
        %v5311 = vsel %vm4443, 1, 0
        %v5312 = vsel %vm4444, 1, 0
        %v5313 = vsel %vm4445, 1, 0
        %v5314 = vsel %vm4446, 1, 0
        %v5315 = vsel %vm4447, 1, 0
        %v5316 = vsel %vm4448, 1, 0
        %v5317 = vsel %vm4449, 1, 0
        %v5318 = vsel %vm4450, 1, 0
        %v5319 = vsel %vm4451, 1, 0
        %v5320 = vsel %vm4452, 1, 0
        %v5321 = vsel %vm4453, 1, 0
        %v5322 = vsel %vm4454, 1, 0
        %v5323 = vsel %vm4455, 1, 0
        %v5324 = vsel %vm4456, 1, 0
        %5325 = vset.pattern.permute.xlu0 0
        %5326 = vperm.xlu0 %5325, %v5289
        %v5327 = vpop.permute.xlu0 %5326
        %5328 = vset.pattern.permute.xlu0 0
        %5329 = vperm.xlu0 %5328, %v5290
        %v5330 = vpop.permute.xlu0 %5329
        %5331 = vset.pattern.permute.xlu0 0
        %5332 = vperm.xlu0 %5331, %v5291
        %v5333 = vpop.permute.xlu0 %5332
        %5334 = vset.pattern.permute.xlu0 0
        %5335 = vperm.xlu0 %5334, %v5292
        %v5336 = vpop.permute.xlu0 %5335
        %5337 = vset.pattern.permute.xlu0 0
        %5338 = vperm.xlu0 %5337, %v5293
        %v5339 = vpop.permute.xlu0 %5338
        %5340 = vset.pattern.permute.xlu0 0
        %5341 = vperm.xlu0 %5340, %v5294
        %v5342 = vpop.permute.xlu0 %5341
        %5343 = vset.pattern.permute.xlu0 0
        %5344 = vperm.xlu0 %5343, %v5295
        %v5345 = vpop.permute.xlu0 %5344
        %5346 = vset.pattern.permute.xlu0 0
        %5347 = vperm.xlu0 %5346, %v5296
        %v5348 = vpop.permute.xlu0 %5347
        %5349 = vset.pattern.permute.xlu0 0
        %5350 = vperm.xlu0 %5349, %v5297
        %v5351 = vpop.permute.xlu0 %5350
        %5352 = vset.pattern.permute.xlu0 0
        %5353 = vperm.xlu0 %5352, %v5298
        %v5354 = vpop.permute.xlu0 %5353
        %5355 = vset.pattern.permute.xlu0 0
        %5356 = vperm.xlu0 %5355, %v5299
        %v5357 = vpop.permute.xlu0 %5356
        %5358 = vset.pattern.permute.xlu0 0
        %5359 = vperm.xlu0 %5358, %v5300
        %v5360 = vpop.permute.xlu0 %5359
        %5361 = vset.pattern.permute.xlu0 0
        %5362 = vperm.xlu0 %5361, %v5301
        %v5363 = vpop.permute.xlu0 %5362
        %5364 = vset.pattern.permute.xlu0 0
        %5365 = vperm.xlu0 %5364, %v5302
        %v5366 = vpop.permute.xlu0 %5365
        %5367 = vset.pattern.permute.xlu0 0
        %5368 = vperm.xlu0 %5367, %v5303
        %v5369 = vpop.permute.xlu0 %5368
        %5370 = vset.pattern.permute.xlu0 0
        %5371 = vperm.xlu0 %5370, %v5304
        %v5372 = vpop.permute.xlu0 %5371
        %5373 = vset.pattern.permute.xlu0 0
        %5374 = vperm.xlu0 %5373, %v5305
        %v5375 = vpop.permute.xlu0 %5374
        %5376 = vset.pattern.permute.xlu0 0
        %5377 = vperm.xlu0 %5376, %v5306
        %v5378 = vpop.permute.xlu0 %5377
        %5379 = vset.pattern.permute.xlu0 0
        %5380 = vperm.xlu0 %5379, %v5307
        %v5381 = vpop.permute.xlu0 %5380
        %5382 = vset.pattern.permute.xlu0 0
        %5383 = vperm.xlu0 %5382, %v5308
        %v5384 = vpop.permute.xlu0 %5383
        %5385 = vset.pattern.permute.xlu0 0
        %5386 = vperm.xlu0 %5385, %v5309
        %v5387 = vpop.permute.xlu0 %5386
        %5388 = vset.pattern.permute.xlu0 0
        %5389 = vperm.xlu0 %5388, %v5310
        %v5390 = vpop.permute.xlu0 %5389
        %5391 = vset.pattern.permute.xlu0 0
        %5392 = vperm.xlu0 %5391, %v5311
        %v5393 = vpop.permute.xlu0 %5392
        %5394 = vset.pattern.permute.xlu0 0
        %5395 = vperm.xlu0 %5394, %v5312
        %v5396 = vpop.permute.xlu0 %5395
        %5397 = vset.pattern.permute.xlu0 0
        %5398 = vperm.xlu0 %5397, %v5313
        %v5399 = vpop.permute.xlu0 %5398
        %5400 = vset.pattern.permute.xlu0 0
        %5401 = vperm.xlu0 %5400, %v5314
        %v5402 = vpop.permute.xlu0 %5401
        %5403 = vset.pattern.permute.xlu0 0
        %5404 = vperm.xlu0 %5403, %v5315
        %v5405 = vpop.permute.xlu0 %5404
        %5406 = vset.pattern.permute.xlu0 0
        %5407 = vperm.xlu0 %5406, %v5316
        %v5408 = vpop.permute.xlu0 %5407
        %5409 = vset.pattern.permute.xlu0 0
        %5410 = vperm.xlu0 %5409, %v5317
        %v5411 = vpop.permute.xlu0 %5410
        %5412 = vset.pattern.permute.xlu0 0
        %5413 = vperm.xlu0 %5412, %v5318
        %v5414 = vpop.permute.xlu0 %5413
        %5415 = vset.pattern.permute.xlu0 0
        %5416 = vperm.xlu0 %5415, %v5319
        %v5417 = vpop.permute.xlu0 %5416
        %5418 = vset.pattern.permute.xlu0 0
        %5419 = vperm.xlu0 %5418, %v5320
        %v5420 = vpop.permute.xlu0 %5419
        %5421 = vset.pattern.permute.xlu0 0
        %5422 = vperm.xlu0 %5421, %v5321
        %v5423 = vpop.permute.xlu0 %5422
        %5424 = vset.pattern.permute.xlu0 0
        %5425 = vperm.xlu0 %5424, %v5322
        %v5426 = vpop.permute.xlu0 %5425
        %5427 = vset.pattern.permute.xlu0 0
        %5428 = vperm.xlu0 %5427, %v5323
        %v5429 = vpop.permute.xlu0 %5428
        %5430 = vset.pattern.permute.xlu0 0
        %5431 = vperm.xlu0 %5430, %v5324
        %v5432 = vpop.permute.xlu0 %5431
        %vm5433 = vcmp.eq.s32.totalorder %v5327, 1
        %vm5434 = vcmp.eq.s32.totalorder %v5330, 1
        %vm5435 = vcmp.eq.s32.totalorder %v5333, 1
        %vm5436 = vcmp.eq.s32.totalorder %v5336, 1
        %vm5437 = vcmp.eq.s32.totalorder %v5339, 1
        %vm5438 = vcmp.eq.s32.totalorder %v5342, 1
        %vm5439 = vcmp.eq.s32.totalorder %v5345, 1
        %vm5440 = vcmp.eq.s32.totalorder %v5348, 1
        %vm5441 = vcmp.eq.s32.totalorder %v5351, 1
        %vm5442 = vcmp.eq.s32.totalorder %v5354, 1
        %vm5443 = vcmp.eq.s32.totalorder %v5357, 1
        %vm5444 = vcmp.eq.s32.totalorder %v5360, 1
        %vm5445 = vcmp.eq.s32.totalorder %v5363, 1
        %vm5446 = vcmp.eq.s32.totalorder %v5366, 1
        %vm5447 = vcmp.eq.s32.totalorder %v5369, 1
        %vm5448 = vcmp.eq.s32.totalorder %v5372, 1
        %vm5449 = vcmp.eq.s32.totalorder %v5375, 1
        %vm5450 = vcmp.eq.s32.totalorder %v5378, 1
        %vm5451 = vcmp.eq.s32.totalorder %v5381, 1
        %vm5452 = vcmp.eq.s32.totalorder %v5384, 1
        %vm5453 = vcmp.eq.s32.totalorder %v5387, 1
        %vm5454 = vcmp.eq.s32.totalorder %v5390, 1
        %vm5455 = vcmp.eq.s32.totalorder %v5393, 1
        %vm5456 = vcmp.eq.s32.totalorder %v5396, 1
        %vm5457 = vcmp.eq.s32.totalorder %v5399, 1
        %vm5458 = vcmp.eq.s32.totalorder %v5402, 1
        %vm5459 = vcmp.eq.s32.totalorder %v5405, 1
        %vm5460 = vcmp.eq.s32.totalorder %v5408, 1
        %vm5461 = vcmp.eq.s32.totalorder %v5411, 1
        %vm5462 = vcmp.eq.s32.totalorder %v5414, 1
        %vm5463 = vcmp.eq.s32.totalorder %v5417, 1
        %vm5464 = vcmp.eq.s32.totalorder %v5420, 1
        %vm5465 = vcmp.eq.s32.totalorder %v5423, 1
        %vm5466 = vcmp.eq.s32.totalorder %v5426, 1
        %vm5467 = vcmp.eq.s32.totalorder %v5429, 1
        %vm5468 = vcmp.eq.s32.totalorder %v5432, 1
        %v5469 = vsel %vm5433, 0.0, %v5253
        %v5470 = vsel %vm5434, 0.0, %v5254
        %v5471 = vsel %vm5435, 0.0, %v5255
        %v5472 = vsel %vm5436, 0.0, %v5256
        %v5473 = vsel %vm5437, 0.0, %v5257
        %v5474 = vsel %vm5438, 0.0, %v5258
        %v5475 = vsel %vm5439, 0.0, %v5259
        %v5476 = vsel %vm5440, 0.0, %v5260
        %v5477 = vsel %vm5441, 0.0, %v5261
        %v5478 = vsel %vm5442, 0.0, %v5262
        %v5479 = vsel %vm5443, 0.0, %v5263
        %v5480 = vsel %vm5444, 0.0, %v5264
        %v5481 = vsel %vm5445, 0.0, %v5265
        %v5482 = vsel %vm5446, 0.0, %v5266
        %v5483 = vsel %vm5447, 0.0, %v5267
        %v5484 = vsel %vm5448, 0.0, %v5268
        %v5485 = vsel %vm5449, 0.0, %v5269
        %v5486 = vsel %vm5450, 0.0, %v5270
        %v5487 = vsel %vm5451, 0.0, %v5271
        %v5488 = vsel %vm5452, 0.0, %v5272
        %v5489 = vsel %vm5453, 0.0, %v5273
        %v5490 = vsel %vm5454, 0.0, %v5274
        %v5491 = vsel %vm5455, 0.0, %v5275
        %v5492 = vsel %vm5456, 0.0, %v5276
        %v5493 = vsel %vm5457, 0.0, %v5277
        %v5494 = vsel %vm5458, 0.0, %v5278
        %v5495 = vsel %vm5459, 0.0, %v5279
        %v5496 = vsel %vm5460, 0.0, %v5280
        %v5497 = vsel %vm5461, 0.0, %v5281
        %v5498 = vsel %vm5462, 0.0, %v5282
        %v5499 = vsel %vm5463, 0.0, %v5283
        %v5500 = vsel %vm5464, 0.0, %v5284
        %v5501 = vsel %vm5465, 0.0, %v5285
        %v5502 = vsel %vm5466, 0.0, %v5286
        %v5503 = vsel %vm5467, 0.0, %v5287
        %v5504 = vsel %vm5468, 0.0, %v5288
        %5505 = vst [vmem:[%s205] sm:$0xff] %v5469
        %5506 = vst [vmem:[%s205 + $0x8] sm:$0xff] %v5470
        %5507 = vst [vmem:[%s205 + $0x10] sm:$0xff] %v5471
        %5508 = vst [vmem:[%s205 + $0x18] sm:$0xff] %v5472
        %5509 = vst [vmem:[%s205 + $0x20] sm:$0xff] %v5473
        %5510 = vst [vmem:[%s205 + $0x28] sm:$0xff] %v5474
        %5511 = vst [vmem:[%s205 + $0x30] sm:$0xff] %v5475
        %5512 = vst [vmem:[%s205 + $0x38] sm:$0xff] %v5476
        %5513 = vst [vmem:[%s205 + $0x40] sm:$0xff] %v5477
        %5514 = vst [vmem:[%s205 + $0x48] sm:$0xff] %v5478
        %5515 = vst [vmem:[%s205 + $0x50] sm:$0xff] %v5479
        %5516 = vst [vmem:[%s205 + $0x58] sm:$0xff] %v5480
        %5517 = vst [vmem:[%s205 + $0x60] sm:$0xff] %v5481
        %5518 = vst [vmem:[%s205 + $0x68] sm:$0xff] %v5482
        %5519 = vst [vmem:[%s205 + $0x70] sm:$0xff] %v5483
        %5520 = vst [vmem:[%s205 + $0x78] sm:$0xff] %v5484
        %5521 = vst [vmem:[%s205 + $0x80] sm:$0xff] %v5485
        %5522 = vst [vmem:[%s205 + $0x88] sm:$0xff] %v5486
        %5523 = vst [vmem:[%s205 + $0x90] sm:$0xff] %v5487
        %5524 = vst [vmem:[%s205 + $0x98] sm:$0xff] %v5488
        %5525 = vst [vmem:[%s205 + $0xa0] sm:$0xff] %v5489
        %5526 = vst [vmem:[%s205 + $0xa8] sm:$0xff] %v5490
        %5527 = vst [vmem:[%s205 + $0xb0] sm:$0xff] %v5491
        %5528 = vst [vmem:[%s205 + $0xb8] sm:$0xff] %v5492
        %5529 = vst [vmem:[%s205 + $0xc0] sm:$0xff] %v5493
        %5530 = vst [vmem:[%s205 + $0xc8] sm:$0xff] %v5494
        %5531 = vst [vmem:[%s205 + $0xd0] sm:$0xff] %v5495
        %5532 = vst [vmem:[%s205 + $0xd8] sm:$0xff] %v5496
        %5533 = vst [vmem:[%s205 + $0xe0] sm:$0xff] %v5497
        %5534 = vst [vmem:[%s205 + $0xe8] sm:$0xff] %v5498
        %5535 = vst [vmem:[%s205 + $0xf0] sm:$0xff] %v5499
        %5536 = vst [vmem:[%s205 + $0xf8] sm:$0xff] %v5500
        %5537 = vst [vmem:[%s205 + $0x100] sm:$0xff] %v5501
        %5538 = vst [vmem:[%s205 + $0x108] sm:$0xff] %v5502
        %5539 = vst [vmem:[%s205 + $0x110] sm:$0xff] %v5503
        %5540 = vst [vmem:[%s205 + $0x118] sm:$0xff] %v5504
        %s5541 = sand.u32 %s120, 1
        %s5542 = scalar_lea.sflag [#allocation3], %s5541
        %s5543 = sand.u32 %s120, 1
        %s5544 = smul.addr %s5543, 288
        %s5545 = scalar_lea.vmem [#allocation2], %s5544
        // Predicated region
        $region37: #{tpu_custom_call.1} parent=35 // pred_check
          %p5546 = pneg %p130
        $region38: #{tpu_custom_call.1} parent=35 // pred_check_branch
          %5548 = sbr.rel (%p5546) target = $region40
        $region39: #{tpu_custom_call.1} parent=35 // pred_region
          %5550 = vsyncadd %s5542, 0
          %s5551 = smul.addr %s18, 36
          %s5552 = smul.addr %s5551, 8
          %s5553 = scalar_lea.hbm %s4, %s5552
          %s5554 = sshll.u32 %s5545, 4
          %s5555 = int_to_ptr.vmem [resolvable:$true] %s5554
          %s5556 = sshll.u32 %s5553, 4
          %s5557 = int_to_ptr.hbm [resolvable:$true] %s5556
          %5562 = dma.vmem_to_hbm [thread:$0]  %s5555, 4608, %s5557, %s5542, 128, 128, 8
        $region40: #{tpu_custom_call.1} parent=35 // pred_fallthru
          _
      $region36: #{tpu_custom_call.1} parent=5 // pred_fallthru
        _
      %p5563 = scmp.le.s32.totalorder 2, %s13
      // Predicated region
      $region41: #{tpu_custom_call.1} parent=5 // pred_check
        %p5564 = pneg %p5563
      $region42: #{tpu_custom_call.1} parent=5 // pred_check_branch
        %5566 = sbr.rel (%p5564) target = $region44
      $region43: #{tpu_custom_call.1} parent=5 // pred_region
        %s5567 = ssub.s32 %s13, 2
        // Predicated region
        $region45: #{tpu_custom_call.1} parent=43 // pred_check
          %p5568 = pneg %p136
        $region46: #{tpu_custom_call.1} parent=43 // pred_check_branch
          %5570 = sbr.rel (%p5568) target = $region48
        $region47: #{tpu_custom_call.1} parent=43 // pred_region
          %s5571 = sand.u32 %s121, 1
          %s5572 = scalar_lea.sflag [#allocation3], %s5571
          %s5573 = sand.u32 %s121, 1
          %s5574 = smul.addr %s5573, 288
          %s5575 = scalar_lea.vmem [#allocation2], %s5574
          %5577 = dma.done %s5572, 4608
        $region48: #{tpu_custom_call.1} parent=43 // pred_fallthru
          _
      $region44: #{tpu_custom_call.1} parent=5 // pred_fallthru
        _
    $region6: #{tpu_custom_call.1} parent=1 // loop_footer
      %s17 = sadd.s32 1, %s13
    $region7: #{tpu_custom_call.1} parent=1 // loop_footer_branch
      %12 = sbr.rel target = $region3
    $region8: #{tpu_custom_call.1} parent=1 // loop_exit
      _
    %5578 = vsyncpa [#allocation3], 1
    %s5579 = scalar_lea.sflag [#allocation3], 1
    %5580 = vsyncpa %s5579, 1

</llo_original>
